<compile_context>
chip_gen: v5e
topology: v5e:2x2
jax: 0.10.0
libtpu: 0.0.40
codegen_flags: <defaults>
</compile_context>

<pallas_src>
from functools import partial

import numpy as np
import jax
import jax.numpy as jnp
from jax.experimental import pallas as pl
from jax.experimental.pallas import tpu as pltpu

LANE = 128
SUBLANE = 8


def _round_up(x, m):
    return (x + m - 1) // m * m


def _cdiv(a, b):
    return (a + b - 1) // b


# ----------------------------------------------------------------------------
# Generation-aware VMEM budgeting / block sizing
# ----------------------------------------------------------------------------
def _vmem_config():
    """Returns (usable budget for block sizing, vmem_limit_bytes for Mosaic)."""
    try:
        kind = jax.devices()[0].device_kind.lower()
    except Exception:
        kind = ""
    if "v6" in kind or "v5e" in kind or "v5 lite" in kind:
        return 80 * 2**20, 100 * 2**20        # 128 MiB physical VMEM
    # v7x (64 MiB physical) and unknown chips: stay conservative.
    return 36 * 2**20, 48 * 2**20


def _pick_hblock(H, Wpe, Cp, Cop, Crp, ks, dilation, out_itemsize, budget):
    """Largest H row-block whose per-step VMEM residency fits `budget`.

    Counts: ks double-buffered bf16 input row-blocks, double-buffered output,
    the f32 accumulator plus one matmul-result temp, the resident weights
    (counted twice to be safe) and the optional residual operand.
    """
    p = dilation * (ks // 2)
    w_bytes = 2 * ks**3 * Cp * Cop * 2 + 2 * Cop * 4
    if Crp:
        w_bytes += 2 * Crp * Cop * 2

    def usage(hb):
        rows_in = _round_up((hb + 2 * p) * Wpe + (ks - 1) * dilation, SUBLANE)
        rows_out = hb * Wpe
        b = ks * 2 * rows_in * Cp * 2            # input blocks (bf16, 2 bufs each)
        b += 2 * rows_out * Cop * out_itemsize   # output blocks (2 bufs)
        b += 2 * rows_out * Cop * 4              # f32 accumulator + matmul temp
        if Crp:
            b += 2 * rows_out * Crp * 2          # residual blocks (bf16, 2 bufs)
        return b + w_bytes

    hb = H
    while hb > 1 and usage(hb) > budget:
        hb -= 1
    nh = _cdiv(H, hb)
    return _cdiv(H, nh)                          # rebalance into even blocks


# ----------------------------------------------------------------------------
# Pallas kernel: one output row-block, full ks^3 reduction in a single step
# ----------------------------------------------------------------------------
def _conv3d_block_kernel(*refs, ks, dilation, Wpe, nrows_out, relu, res_mode):
    """Grid = (B, D, NH); one step produces a full (Hb*Wpe, Cop) output block.

    refs (in order):
      x_refs[kd] : ks x (rows_in, Cp) bf16  the ks depth-tap input row-blocks
                   (same HBM array; the depth shift lives in the index_map)
      w_ref      : (ks^3, Cp, Cop)    bf16  BN-scale-folded weights, tap-major
      b_ref      : (1, Cop)           f32   folded bias (+ downsample-BN bias)
      [r_ref     : (rows_out, Crp)    bf16  residual rows (row layout)]
      [wd_ref    : (Crp, Cop)         bf16  1x1x1 downsample weight]
      o_ref      : (rows_out, Cop)
    """
    x_refs = refs[:ks]
    i = ks
    w_ref = refs[i]; i += 1
    b_ref = refs[i]; i += 1
    r_ref = wd_ref = None
    if res_mode == "conv":
        r_ref = refs[i]; i += 1
        wd_ref = refs[i]; i += 1
    elif res_mode == "identity":
        r_ref = refs[i]; i += 1
    o_ref = refs[i]

    # Residual branch seeds the accumulator (fused 1x1x1 downsample conv), so
    # the shortcut never round-trips through HBM as its own output tensor.
    if res_mode == "conv":
        acc = jnp.dot(r_ref[...], wd_ref[...], preferred_element_type=jnp.float32)
    elif res_mode == "identity":
        acc = r_ref[...].astype(jnp.float32)
    else:
        acc = None

    # All ks^3 taps are reduced here: each tap is a *static* row window of a
    # flattened (rows, Cp) block -> one MXU matmul, accumulated into a single
    # f32 running sum (no VMEM scratch, no separate psum flush; on v7x the MRB
    # can absorb the accumulation).  Wpe % 8 == 0 keeps kh offsets aligned.
    for kd in range(ks):
        x_ref = x_refs[kd]
        for kh in range(ks):
            for kw in range(ks):
                start = dilation * (kh * Wpe + kw)            # static offset
                xt = x_ref[start:start + nrows_out, :]
                w_tap = w_ref[kd * ks * ks + kh * ks + kw]
                c = jnp.dot(xt, w_tap, preferred_element_type=jnp.float32)
                acc = c if acc is None else acc + c

    y = acc + b_ref[...]
    if relu:
        y = jnp.maximum(y, 0.0)
    o_ref[...] = y.astype(o_ref.dtype)


# ----------------------------------------------------------------------------
# pallas_call wrapper for one fused conv layer
# ----------------------------------------------------------------------------
def conv3d_bn_act(xb, w27, bias, *, Hb, Wpe, ks, dilation, relu,
                  residual=None, wd=None, out_dtype=jnp.float32,
                  vmem_limit_bytes=None):
    """Fused ks^3 'same' conv + folded BN (+ residual / 1x1 downsample) + ReLU.

    xb       : (B, Dp, NH, rows_in, Cp)  bf16  padded, H-blocked (halo'd) input
    w27      : (ks^3, Cp, Cop)           bf16  scale-folded weights
    bias     : (1, Cop)                  f32
    residual : (B, D, NH, rows_out, Crp) bf16 or None
    wd       : (Crp, Cop)                bf16 or None
    returns  : (B, D, NH, rows_out, Cop) out_dtype (row layout; wrapper strips
               the W/H/channel padding)
    """
    B, Dp, NH, rows_in, Cp = xb.shape
    p = dilation * (ks // 2)
    D = Dp - 2 * p
    Cop = w27.shape[-1]
    rows_out = Hb * Wpe

    res_mode = "none"
    if residual is not None:
        res_mode = "conv" if wd is not None else "identity"

    # ks views of the same input array, one per depth tap: the depth shift is
    # expressed purely in the index_map (block size 1 along the padded depth
    # axis), so no im2col / expanded tensor ever hits HBM.
    def x_index(kd):
        off = kd * dilation
        return lambda b, z, h: (b, z + off, h, 0, 0)

    in_specs = [pl.BlockSpec((None, None, None, rows_in, Cp), x_index(kd))
                for kd in range(ks)]
    in_specs += [
        # Constant block index -> weights/bias stay resident (single DMA).
        pl.BlockSpec((ks ** 3, Cp, Cop), lambda b, z, h: (0, 0, 0)),
        pl.BlockSpec((1, Cop), lambda b, z, h: (0, 0)),
    ]
    args = [xb] * ks + [w27, bias]
    if residual is not None:
        Crp = residual.shape[-1]
        in_specs.append(pl.BlockSpec((None, None, None, rows_out, Crp),
                                     lambda b, z, h: (b, z, h, 0, 0)))
        args.append(residual)
        if wd is not None:
            in_specs.append(pl.BlockSpec((Crp, Cop), lambda b, z, h: (0, 0)))
            args.append(wd)

    if vmem_limit_bytes is None:
        vmem_limit_bytes = _vmem_config()[1]

    kernel = partial(_conv3d_block_kernel, ks=ks, dilation=dilation, Wpe=Wpe,
                     nrows_out=rows_out, relu=relu, res_mode=res_mode)

    out_isz = jnp.dtype(out_dtype).itemsize
    flops = 2 * B * D * NH * rows_out * Cp * Cop * ks ** 3
    bytes_accessed = (B * D * NH * (ks * rows_in * Cp * 2
                                    + rows_out * Cop * out_isz)
                      + w27.size * 2 + bias.size * 4)
    if residual is not None:
        bytes_accessed += residual.size * 2
        if wd is not None:
            flops += 2 * B * D * NH * rows_out * residual.shape[-1] * Cop
            bytes_accessed += wd.size * 2

    return pl.pallas_call(
        kernel,
        out_shape=jax.ShapeDtypeStruct((B, D, NH, rows_out, Cop), out_dtype),
        grid=(B, D, NH),
        in_specs=in_specs,
        out_specs=pl.BlockSpec((None, None, None, rows_out, Cop),
                               lambda b, z, h: (b, z, h, 0, 0)),
        compiler_params=pltpu.CompilerParams(
            # No reduction axis anymore: every axis is independent.
            dimension_semantics=("parallel", "parallel", "parallel"),
            vmem_limit_bytes=vmem_limit_bytes,
        ),
        cost_estimate=pl.CostEstimate(flops=flops, transcendentals=0,
                                      bytes_accessed=bytes_accessed),
    )(*args)


# ----------------------------------------------------------------------------
# Wrapper glue: padding / layout / BN folding (pure XLA, cheap)
# ----------------------------------------------------------------------------
def fold_bn(gamma, beta, mean, var, eps=1e-5):
    scale = gamma / jnp.sqrt(var + eps)
    bias = beta - mean * scale
    return scale, bias


def _pad_channels(x, target):
    c = x.shape[-1]
    if c == target:
        return x
    widths = [(0, 0)] * (x.ndim - 1) + [(0, target - c)]
    return jnp.pad(x, widths)


def _prep_conv_input_blocked(x, ks, dilation, Cp, Hb, Wpe):
    """(B,D,H,W,C) -> (B, Dp, NH, rows_in, Cp) bf16.

    Spatially padded, H split into NH blocks of Hb rows, each carrying a halo
    of p rows on both sides (duplication ~2p/Hb), rows flattened with stride
    Wpe (multiple of 8 so the kh tap offsets stay sublane-aligned).
    """
    B, D, H, W, C = x.shape
    p = dilation * (ks // 2)
    NH = _cdiv(H, Hb)
    Hpad = NH * Hb
    xp = jnp.pad(x, ((0, 0), (p, p), (p, Hpad - H + p), (p, Wpe - W - p),
                     (0, Cp - C)))
    blocks = [xp[:, :, i * Hb: i * Hb + Hb + 2 * p] for i in range(NH)]
    xb = jnp.stack(blocks, axis=2)                   # (B,Dp,NH,Hb+2p,Wpe,Cp)
    xb = xb.reshape(B, D + 2 * p, NH, (Hb + 2 * p) * Wpe, Cp)
    rows_in = _round_up((Hb + 2 * p) * Wpe + (ks - 1) * dilation, SUBLANE)
    extra = rows_in - (Hb + 2 * p) * Wpe
    if extra:
        xb = jnp.pad(xb, ((0, 0), (0, 0), (0, 0), (0, extra), (0, 0)))
    return xb.astype(jnp.bfloat16)


def _to_row_layout_blocked(x, Cp, Hb, Wpe):
    """(B,D,H,W,C) -> (B, D, NH, Hb*Wpe, Cp) bf16 residual rows (no halo)."""
    B, D, H, W, C = x.shape
    NH = _cdiv(H, Hb)
    xr = jnp.pad(x, ((0, 0), (0, 0), (0, NH * Hb - H), (0, Wpe - W),
                     (0, Cp - C)))
    return xr.reshape(B, D, NH, Hb * Wpe, Cp).astype(jnp.bfloat16)


def _from_row_layout_blocked(y, H, W, C, Wpe):
    """(B, D, NH, Hb*Wpe, Cop) -> (B, D, H, W, C): strip row/col/channel pad."""
    B, D, NH, rows, Cop = y.shape
    Hb = rows // Wpe
    y = y.reshape(B, D, NH * Hb, Wpe, Cop)
    return y[:, :, :H, :W, :C]


def _prep_weight(w, scale, Cp, Cop):
    """(ks,ks,ks,Ci,Co) -> (ks^3, Cp, Cop) bf16 with the BN scale folded in."""
    ks, _, _, ci, co = w.shape
    wf = w * scale.reshape(1, 1, 1, 1, co)
    wf = jnp.pad(wf, ((0, 0), (0, 0), (0, 0), (0, Cp - ci), (0, Cop - co)))
    return wf.reshape(ks ** 3, Cp, Cop).astype(jnp.bfloat16)


# ----------------------------------------------------------------------------
# Module forwards
# ----------------------------------------------------------------------------
def residual_block_forward(x, params, ks=3, dilation=1, out_dtype=jnp.float32):
    """x: (B, D, H, W, inc) dense voxel features -> (B, D, H, W, outc).

    Pass out_dtype=jnp.bfloat16 when the consumer is the next (bf16-consuming)
    block to halve the output HBM write.
    """
    B, D, H, W, inc = x.shape
    outc = params["w1"].shape[-1]
    Cin_p, Cout_p = _round_up(inc, LANE), _round_up(outc, LANE)
    p = dilation * (ks // 2)
    Wpe = _round_up(W + 2 * p, SUBLANE)

    budget, vlimit = _vmem_config()
    Crp = Cin_p if params.get("wd") is not None else Cout_p
    Hb = _pick_hblock(H, Wpe, max(Cin_p, Cout_p), Cout_p, Crp, ks, dilation,
                      jnp.dtype(out_dtype).itemsize, budget)

    s1, b1 = fold_bn(*params["bn1"])
    s2, b2 = fold_bn(*params["bn2"])

    # conv1 (ks^3) + BN1 + ReLU -> bf16, channel-padded, H-blocked row layout.
    x_in = _prep_conv_input_blocked(x, ks, dilation, Cin_p, Hb, Wpe)
    w1 = _prep_weight(params["w1"], s1, Cin_p, Cout_p)
    b1p = _pad_channels(b1.reshape(1, outc), Cout_p).astype(jnp.float32)
    h1 = conv3d_bn_act(x_in, w1, b1p, Hb=Hb, Wpe=Wpe, ks=ks, dilation=dilation,
                       relu=True, out_dtype=jnp.bfloat16,
                       vmem_limit_bytes=vlimit)

    # One XLA relayout pass between the two pallas_calls (see header TODO).
    h1_grid = _from_row_layout_blocked(h1, H, W, Cout_p, Wpe)   # keep channel pad
    h1_in = _prep_conv_input_blocked(h1_grid, ks, dilation, Cout_p, Hb, Wpe)

    # Residual branch (shortcut input is x, NOT h1 -> separate fused operand).
    if params.get("wd") is not None:
        sd, bd = fold_bn(*params["bnd"])
        wd = params["wd"] * sd.reshape(1, outc)
        wd = jnp.pad(wd, ((0, Cin_p - inc), (0, Cout_p - outc))).astype(jnp.bfloat16)
        res = _to_row_layout_blocked(x, Cin_p, Hb, Wpe)
        bias2 = _pad_channels((b2 + bd).reshape(1, outc), Cout_p).astype(jnp.float32)
    else:
        wd = None                                   # identity shortcut
        res = _to_row_layout_blocked(x, Cout_p, Hb, Wpe)
        bias2 = _pad_channels(b2.reshape(1, outc), Cout_p).astype(jnp.float32)

    # conv2 (ks^3) + BN2 + residual + ReLU — one pallas_call.
    w2 = _prep_weight(params["w2"], s2, Cout_p, Cout_p)
    out = conv3d_bn_act(h1_in, w2, bias2, Hb=Hb, Wpe=Wpe, ks=ks,
                        dilation=dilation, relu=True, residual=res, wd=wd,
                        out_dtype=out_dtype, vmem_limit_bytes=vlimit)
    return _from_row_layout_blocked(out, H, W, outc, Wpe)


def basic_convolution_block_forward(x, params, ks=3, dilation=1,
                                    out_dtype=jnp.float32):
    """spnn.Conv3d(ks, stride=1) + BatchNorm + ReLU on a dense voxel grid."""
    # TODO(synk): MinkResNet's blocks_ds path (ks=2, stride=2) is not covered.
    B, D, H, W, inc = x.shape
    outc = params["w"].shape[-1]
    Cin_p, Cout_p = _round_up(inc, LANE), _round_up(outc, LANE)
    p = dilation * (ks // 2)
    Wpe = _round_up(W + 2 * p, SUBLANE)
    budget, vlimit = _vmem_config()
    Hb = _pick_hblock(H, Wpe, Cin_p, Cout_p, 0, ks, dilation,
                      jnp.dtype(out_dtype).itemsize, budget)
    s, b = fold_bn(*params["bn"])
    x_in = _prep_conv_input_blocked(x, ks, dilation, Cin_p, Hb, Wpe)
    w = _prep_weight(params["w"], s, Cin_p, Cout_p)
    bp = _pad_channels(b.reshape(1, outc), Cout_p).astype(jnp.float32)
    y = conv3d_bn_act(x_in, w, bp, Hb=Hb, Wpe=Wpe, ks=ks, dilation=dilation,
                      relu=True, out_dtype=out_dtype, vmem_limit_bytes=vlimit)
    return _from_row_layout_blocked(y, H, W, outc, Wpe)


# ----------------------------------------------------------------------------
# Pure-JAX references (same bf16 quantization points) for verification
# ----------------------------------------------------------------------------
def _ref_conv(v, w, dilation):
    return jax.lax.conv_general_dilated(
        v.astype(jnp.float32), w.astype(jnp.float32),
        window_strides=(1, 1, 1), padding="SAME",
        rhs_dilation=(dilation,) * 3,
        dimension_numbers=("NDHWC", "DHWIO", "NDHWC"))


def reference_residual_block(x, params, ks=3, dilation=1):
    s1, b1 = fold_bn(*params["bn1"])
    s2, b2 = fold_bn(*params["bn2"])
    xq = x.astype(jnp.bfloat16)
    w1q = (params["w1"] * s1).astype(jnp.bfloat16)
    w2q = (params["w2"] * s2).astype(jnp.bfloat16)
    h1 = jnp.maximum(_ref_conv(xq, w1q, dilation) + b1, 0.0).astype(jnp.bfloat16)
    h2 = _ref_conv(h1, w2q, dilation) + b2
    if params.get("wd") is not None:
        sd, bd = fold_bn(*params["bnd"])
        wdq = (params["wd"] * sd).astype(jnp.bfloat16)
        ds = jnp.einsum("bdhwc,co->bdhwo",
                        xq.astype(jnp.float32), wdq.astype(jnp.float32)) + bd
    else:
        ds = xq.astype(jnp.float32)
    return jnp.maximum(h2 + ds, 0.0)


def reference_basic_block(x, params, ks=3, dilation=1):
    s, b = fold_bn(*params["bn"])
    xq = x.astype(jnp.bfloat16)
    wq = (params["w"] * s).astype(jnp.bfloat16)
    return jnp.maximum(_ref_conv(xq, wq, dilation) + b, 0.0)


# ----------------------------------------------------------------------------
# Deterministic parameter init + driver
# ----------------------------------------------------------------------------
def _bn_params(k, outc):
    k1, k2, k3, k4 = jax.random.split(k, 4)
    gamma = jax.random.uniform(k1, (outc,), jnp.float32, 0.5, 1.5)
    beta = 0.1 * jax.random.normal(k2, (outc,), jnp.float32)
    mean = 0.1 * jax.random.normal(k3, (outc,), jnp.float32)
    var = jax.random.uniform(k4, (outc,), jnp.float32, 0.5, 1.5)
    return (gamma, beta, mean, var)


def make_params(key, inc, outc, ks=3):
    ks3 = ks * ks * ks
    keys = jax.random.split(key, 6)
    params = {
        "w1": jax.random.normal(keys[0], (ks, ks, ks, inc, outc), jnp.float32)
              / np.sqrt(ks3 * inc),
        "bn1": _bn_params(keys[1], outc),
        "w2": jax.random.normal(keys[2], (ks, ks, ks, outc, outc), jnp.float32)
              / np.sqrt(ks3 * outc),
        "bn2": _bn_params(keys[3], outc),
    }
    if inc != outc:
        params["wd"] = (jax.random.normal(keys[4], (inc, outc), jnp.float32)
                        / np.sqrt(inc))
        params["bnd"] = _bn_params(keys[5], outc)
    else:
        params["wd"] = None
    return params


def make_basic_params(key, inc, outc, ks=3):
    k1, k2 = jax.random.split(key, 2)
    return {
        "w": jax.random.normal(k1, (ks, ks, ks, inc, outc), jnp.float32)
             / np.sqrt(ks ** 3 * inc),
        "bn": _bn_params(k2, outc),
    }


if __name__ == "__main__":
    key = jax.random.PRNGKey(0)
    kx, kp1, kp2, kp3 = jax.random.split(key, 4)

    B, D, H, W = 2, 8, 8, 8
    ks, dilation = 3, 1

    # Block 1: inc != outc -> exercises the fused 1x1x1 downsample branch.
    inc, outc = 4, 8
    x = jax.random.normal(kx, (B, D, H, W, inc), jnp.float32)
    params = make_params(kp1, inc, outc, ks)
    out = jax.block_until_ready(residual_block_forward(x, params, ks, dilation))
    ref = jax.block_until_ready(reference_residual_block(x, params, ks, dilation))
    assert out.shape == (B, D, H, W, outc)
    np.testing.assert_allclose(np.asarray(out), np.asarray(ref),
                               rtol=1e-2, atol=1e-2)

    # Block 2: inc == outc -> identity shortcut.
    params2 = make_params(kp2, outc, outc, ks)
    x2 = jax.random.normal(kp2, (B, D, H, W, outc), jnp.float32)
    out2 = jax.block_until_ready(residual_block_forward(x2, params2, ks, dilation))
    ref2 = jax.block_until_ready(reference_residual_block(x2, params2, ks, dilation))
    np.testing.assert_allclose(np.asarray(out2), np.asarray(ref2),
                               rtol=1e-2, atol=1e-2)

    # BasicConvolutionBlock (stride=1 path).
    params3 = make_basic_params(kp3, inc, outc, ks)
    out3 = jax.block_until_ready(
        basic_convolution_block_forward(x, params3, ks, dilation))
    ref3 = jax.block_until_ready(reference_basic_block(x, params3, ks, dilation))
    np.testing.assert_allclose(np.asarray(out3), np.asarray(ref3),
                               rtol=1e-2, atol=1e-2)

    print("KERNEL_OK")
</pallas_src>

<mosaic_0001>
module attributes {stable_mosaic.version = 11 : i64} {
  func.func @_conv3d_block_kernel(%arg0: i32, %arg1: i32, %arg2: i32, %arg3: memref<1x1x1x168x128xbf16, #tpu.memory_space<vmem>>, %arg4: memref<1x1x1x168x128xbf16, #tpu.memory_space<vmem>>, %arg5: memref<1x1x1x168x128xbf16, #tpu.memory_space<vmem>>, %arg6: memref<27x128x128xbf16, #tpu.memory_space<vmem>>, %arg7: memref<1x128xf32, #tpu.memory_space<vmem>>, %arg8: memref<1x1x1x128x128xbf16, #tpu.memory_space<vmem>>) attributes {dimension_semantics = [#tpu.dimension_semantics<parallel>, #tpu.dimension_semantics<parallel>, #tpu.dimension_semantics<parallel>], iteration_bounds = array<i64: 2, 8, 1>, scalar_prefetch = 0 : i64, scratch_operands = 0 : i64, tpu.core_type = #tpu.core_type<tc>, window_params = [{transform_indices = @transform_0, window_bounds = array<i64: 1, 1, 1, 168, 128>}, {transform_indices = @transform_1, window_bounds = array<i64: 1, 1, 1, 168, 128>}, {transform_indices = @transform_2, window_bounds = array<i64: 1, 1, 1, 168, 128>}, {pipeline_mode = #tpu.pipeline_mode<synchronous>, transform_indices = @transform_3, window_bounds = array<i64: 27, 128, 128>}, {pipeline_mode = #tpu.pipeline_mode<synchronous>, transform_indices = @transform_4, window_bounds = array<i64: 1, 128>}, {transform_indices = @transform_5, window_bounds = array<i64: 1, 1, 1, 128, 128>}]} {
    %c0 = arith.constant 0 : index
    %c0_0 = arith.constant 0 : index
    %c0_1 = arith.constant 0 : index
    %c0_2 = arith.constant 0 : index
    %c0_3 = arith.constant 0 : index
    %0 = vector.load %arg3[%c0, %c0_0, %c0_1, %c0_2, %c0_3] : memref<1x1x1x168x128xbf16, #tpu.memory_space<vmem>>, vector<1x1x1x128x128xbf16>
    %1 = vector.shape_cast %0 : vector<1x1x1x128x128xbf16> to vector<128x128xbf16>
    %c0_4 = arith.constant 0 : index
    %c0_5 = arith.constant 0 : index
    %c0_6 = arith.constant 0 : index
    %2 = vector.load %arg6[%c0_4, %c0_5, %c0_6] : memref<27x128x128xbf16, #tpu.memory_space<vmem>>, vector<1x128x128xbf16>
    %3 = vector.shape_cast %2 : vector<1x128x128xbf16> to vector<128x128xbf16>
    %cst = arith.constant dense<0.000000e+00> : vector<128x128xf32>
    %4 = tpu.matmul %1, %3, %cst {dimension_numbers = #tpu.dot_dimension_numbers<[1], [0], [0], [1], [0, 0, 1, 1], [], []>} : vector<128x128xbf16>, vector<128x128xbf16>, vector<128x128xf32> -> vector<128x128xf32>
    %c0_7 = arith.constant 0 : index
    %c0_8 = arith.constant 0 : index
    %c0_9 = arith.constant 0 : index
    %c1 = arith.constant 1 : index
    %c0_10 = arith.constant 0 : index
    %5 = vector.load %arg3[%c0_7, %c0_8, %c0_9, %c1, %c0_10] : memref<1x1x1x168x128xbf16, #tpu.memory_space<vmem>>, vector<1x1x1x128x128xbf16>
    %6 = vector.shape_cast %5 : vector<1x1x1x128x128xbf16> to vector<128x128xbf16>
    %c1_11 = arith.constant 1 : index
    %c0_12 = arith.constant 0 : index
    %c0_13 = arith.constant 0 : index
    %7 = vector.load %arg6[%c1_11, %c0_12, %c0_13] : memref<27x128x128xbf16, #tpu.memory_space<vmem>>, vector<1x128x128xbf16>
    %8 = vector.shape_cast %7 : vector<1x128x128xbf16> to vector<128x128xbf16>
    %cst_14 = arith.constant dense<0.000000e+00> : vector<128x128xf32>
    %9 = tpu.matmul %6, %8, %cst_14 {dimension_numbers = #tpu.dot_dimension_numbers<[1], [0], [0], [1], [0, 0, 1, 1], [], []>} : vector<128x128xbf16>, vector<128x128xbf16>, vector<128x128xf32> -> vector<128x128xf32>
    %10 = arith.addf %4, %9 : vector<128x128xf32>
    %c0_15 = arith.constant 0 : index
    %c0_16 = arith.constant 0 : index
    %c0_17 = arith.constant 0 : index
    %c2 = arith.constant 2 : index
    %c0_18 = arith.constant 0 : index
    %11 = vector.load %arg3[%c0_15, %c0_16, %c0_17, %c2, %c0_18] : memref<1x1x1x168x128xbf16, #tpu.memory_space<vmem>>, vector<1x1x1x128x128xbf16>
    %12 = vector.shape_cast %11 : vector<1x1x1x128x128xbf16> to vector<128x128xbf16>
    %c2_19 = arith.constant 2 : index
    %c0_20 = arith.constant 0 : index
    %c0_21 = arith.constant 0 : index
    %13 = vector.load %arg6[%c2_19, %c0_20, %c0_21] : memref<27x128x128xbf16, #tpu.memory_space<vmem>>, vector<1x128x128xbf16>
    %14 = vector.shape_cast %13 : vector<1x128x128xbf16> to vector<128x128xbf16>
    %cst_22 = arith.constant dense<0.000000e+00> : vector<128x128xf32>
    %15 = tpu.matmul %12, %14, %cst_22 {dimension_numbers = #tpu.dot_dimension_numbers<[1], [0], [0], [1], [0, 0, 1, 1], [], []>} : vector<128x128xbf16>, vector<128x128xbf16>, vector<128x128xf32> -> vector<128x128xf32>
    %16 = arith.addf %10, %15 : vector<128x128xf32>
    %c0_23 = arith.constant 0 : index
    %c0_24 = arith.constant 0 : index
    %c0_25 = arith.constant 0 : index
    %c16 = arith.constant 16 : index
    %c0_26 = arith.constant 0 : index
    %17 = vector.load %arg3[%c0_23, %c0_24, %c0_25, %c16, %c0_26] : memref<1x1x1x168x128xbf16, #tpu.memory_space<vmem>>, vector<1x1x1x128x128xbf16>
    %18 = vector.shape_cast %17 : vector<1x1x1x128x128xbf16> to vector<128x128xbf16>
    %c3 = arith.constant 3 : index
    %c0_27 = arith.constant 0 : index
    %c0_28 = arith.constant 0 : index
    %19 = vector.load %arg6[%c3, %c0_27, %c0_28] : memref<27x128x128xbf16, #tpu.memory_space<vmem>>, vector<1x128x128xbf16>
    %20 = vector.shape_cast %19 : vector<1x128x128xbf16> to vector<128x128xbf16>
    %cst_29 = arith.constant dense<0.000000e+00> : vector<128x128xf32>
    %21 = tpu.matmul %18, %20, %cst_29 {dimension_numbers = #tpu.dot_dimension_numbers<[1], [0], [0], [1], [0, 0, 1, 1], [], []>} : vector<128x128xbf16>, vector<128x128xbf16>, vector<128x128xf32> -> vector<128x128xf32>
    %22 = arith.addf %16, %21 : vector<128x128xf32>
    %c0_30 = arith.constant 0 : index
    %c0_31 = arith.constant 0 : index
    %c0_32 = arith.constant 0 : index
    %c17 = arith.constant 17 : index
    %c0_33 = arith.constant 0 : index
    %23 = vector.load %arg3[%c0_30, %c0_31, %c0_32, %c17, %c0_33] : memref<1x1x1x168x128xbf16, #tpu.memory_space<vmem>>, vector<1x1x1x128x128xbf16>
    %24 = vector.shape_cast %23 : vector<1x1x1x128x128xbf16> to vector<128x128xbf16>
    %c4 = arith.constant 4 : index
    %c0_34 = arith.constant 0 : index
    %c0_35 = arith.constant 0 : index
    %25 = vector.load %arg6[%c4, %c0_34, %c0_35] : memref<27x128x128xbf16, #tpu.memory_space<vmem>>, vector<1x128x128xbf16>
    %26 = vector.shape_cast %25 : vector<1x128x128xbf16> to vector<128x128xbf16>
    %cst_36 = arith.constant dense<0.000000e+00> : vector<128x128xf32>
    %27 = tpu.matmul %24, %26, %cst_36 {dimension_numbers = #tpu.dot_dimension_numbers<[1], [0], [0], [1], [0, 0, 1, 1], [], []>} : vector<128x128xbf16>, vector<128x128xbf16>, vector<128x128xf32> -> vector<128x128xf32>
    %28 = arith.addf %22, %27 : vector<128x128xf32>
    %c0_37 = arith.constant 0 : index
    %c0_38 = arith.constant 0 : index
    %c0_39 = arith.constant 0 : index
    %c18 = arith.constant 18 : index
    %c0_40 = arith.constant 0 : index
    %29 = vector.load %arg3[%c0_37, %c0_38, %c0_39, %c18, %c0_40] : memref<1x1x1x168x128xbf16, #tpu.memory_space<vmem>>, vector<1x1x1x128x128xbf16>
    %30 = vector.shape_cast %29 : vector<1x1x1x128x128xbf16> to vector<128x128xbf16>
    %c5 = arith.constant 5 : index
    %c0_41 = arith.constant 0 : index
    %c0_42 = arith.constant 0 : index
    %31 = vector.load %arg6[%c5, %c0_41, %c0_42] : memref<27x128x128xbf16, #tpu.memory_space<vmem>>, vector<1x128x128xbf16>
    %32 = vector.shape_cast %31 : vector<1x128x128xbf16> to vector<128x128xbf16>
    %cst_43 = arith.constant dense<0.000000e+00> : vector<128x128xf32>
    %33 = tpu.matmul %30, %32, %cst_43 {dimension_numbers = #tpu.dot_dimension_numbers<[1], [0], [0], [1], [0, 0, 1, 1], [], []>} : vector<128x128xbf16>, vector<128x128xbf16>, vector<128x128xf32> -> vector<128x128xf32>
    %34 = arith.addf %28, %33 : vector<128x128xf32>
    %c0_44 = arith.constant 0 : index
    %c0_45 = arith.constant 0 : index
    %c0_46 = arith.constant 0 : index
    %c32 = arith.constant 32 : index
    %c0_47 = arith.constant 0 : index
    %35 = vector.load %arg3[%c0_44, %c0_45, %c0_46, %c32, %c0_47] : memref<1x1x1x168x128xbf16, #tpu.memory_space<vmem>>, vector<1x1x1x128x128xbf16>
    %36 = vector.shape_cast %35 : vector<1x1x1x128x128xbf16> to vector<128x128xbf16>
    %c6 = arith.constant 6 : index
    %c0_48 = arith.constant 0 : index
    %c0_49 = arith.constant 0 : index
    %37 = vector.load %arg6[%c6, %c0_48, %c0_49] : memref<27x128x128xbf16, #tpu.memory_space<vmem>>, vector<1x128x128xbf16>
    %38 = vector.shape_cast %37 : vector<1x128x128xbf16> to vector<128x128xbf16>
    %cst_50 = arith.constant dense<0.000000e+00> : vector<128x128xf32>
    %39 = tpu.matmul %36, %38, %cst_50 {dimension_numbers = #tpu.dot_dimension_numbers<[1], [0], [0], [1], [0, 0, 1, 1], [], []>} : vector<128x128xbf16>, vector<128x128xbf16>, vector<128x128xf32> -> vector<128x128xf32>
    %40 = arith.addf %34, %39 : vector<128x128xf32>
    %c0_51 = arith.constant 0 : index
    %c0_52 = arith.constant 0 : index
    %c0_53 = arith.constant 0 : index
    %c33 = arith.constant 33 : index
    %c0_54 = arith.constant 0 : index
    %41 = vector.load %arg3[%c0_51, %c0_52, %c0_53, %c33, %c0_54] : memref<1x1x1x168x128xbf16, #tpu.memory_space<vmem>>, vector<1x1x1x128x128xbf16>
    %42 = vector.shape_cast %41 : vector<1x1x1x128x128xbf16> to vector<128x128xbf16>
    %c7 = arith.constant 7 : index
    %c0_55 = arith.constant 0 : index
    %c0_56 = arith.constant 0 : index
    %43 = vector.load %arg6[%c7, %c0_55, %c0_56] : memref<27x128x128xbf16, #tpu.memory_space<vmem>>, vector<1x128x128xbf16>
    %44 = vector.shape_cast %43 : vector<1x128x128xbf16> to vector<128x128xbf16>
    %cst_57 = arith.constant dense<0.000000e+00> : vector<128x128xf32>
    %45 = tpu.matmul %42, %44, %cst_57 {dimension_numbers = #tpu.dot_dimension_numbers<[1], [0], [0], [1], [0, 0, 1, 1], [], []>} : vector<128x128xbf16>, vector<128x128xbf16>, vector<128x128xf32> -> vector<128x128xf32>
    %46 = arith.addf %40, %45 : vector<128x128xf32>
    %c0_58 = arith.constant 0 : index
    %c0_59 = arith.constant 0 : index
    %c0_60 = arith.constant 0 : index
    %c34 = arith.constant 34 : index
    %c0_61 = arith.constant 0 : index
    %47 = vector.load %arg3[%c0_58, %c0_59, %c0_60, %c34, %c0_61] : memref<1x1x1x168x128xbf16, #tpu.memory_space<vmem>>, vector<1x1x1x128x128xbf16>
    %48 = vector.shape_cast %47 : vector<1x1x1x128x128xbf16> to vector<128x128xbf16>
    %c8 = arith.constant 8 : index
    %c0_62 = arith.constant 0 : index
    %c0_63 = arith.constant 0 : index
    %49 = vector.load %arg6[%c8, %c0_62, %c0_63] : memref<27x128x128xbf16, #tpu.memory_space<vmem>>, vector<1x128x128xbf16>
    %50 = vector.shape_cast %49 : vector<1x128x128xbf16> to vector<128x128xbf16>
    %cst_64 = arith.constant dense<0.000000e+00> : vector<128x128xf32>
    %51 = tpu.matmul %48, %50, %cst_64 {dimension_numbers = #tpu.dot_dimension_numbers<[1], [0], [0], [1], [0, 0, 1, 1], [], []>} : vector<128x128xbf16>, vector<128x128xbf16>, vector<128x128xf32> -> vector<128x128xf32>
    %52 = arith.addf %46, %51 : vector<128x128xf32>
    %c0_65 = arith.constant 0 : index
    %c0_66 = arith.constant 0 : index
    %c0_67 = arith.constant 0 : index
    %c0_68 = arith.constant 0 : index
    %c0_69 = arith.constant 0 : index
    %53 = vector.load %arg4[%c0_65, %c0_66, %c0_67, %c0_68, %c0_69] : memref<1x1x1x168x128xbf16, #tpu.memory_space<vmem>>, vector<1x1x1x128x128xbf16>
    %54 = vector.shape_cast %53 : vector<1x1x1x128x128xbf16> to vector<128x128xbf16>
    %c9 = arith.constant 9 : index
    %c0_70 = arith.constant 0 : index
    %c0_71 = arith.constant 0 : index
    %55 = vector.load %arg6[%c9, %c0_70, %c0_71] : memref<27x128x128xbf16, #tpu.memory_space<vmem>>, vector<1x128x128xbf16>
    %56 = vector.shape_cast %55 : vector<1x128x128xbf16> to vector<128x128xbf16>
    %cst_72 = arith.constant dense<0.000000e+00> : vector<128x128xf32>
    %57 = tpu.matmul %54, %56, %cst_72 {dimension_numbers = #tpu.dot_dimension_numbers<[1], [0], [0], [1], [0, 0, 1, 1], [], []>} : vector<128x128xbf16>, vector<128x128xbf16>, vector<128x128xf32> -> vector<128x128xf32>
    %58 = arith.addf %52, %57 : vector<128x128xf32>
    %c0_73 = arith.constant 0 : index
    %c0_74 = arith.constant 0 : index
    %c0_75 = arith.constant 0 : index
    %c1_76 = arith.constant 1 : index
    %c0_77 = arith.constant 0 : index
    %59 = vector.load %arg4[%c0_73, %c0_74, %c0_75, %c1_76, %c0_77] : memref<1x1x1x168x128xbf16, #tpu.memory_space<vmem>>, vector<1x1x1x128x128xbf16>
    %60 = vector.shape_cast %59 : vector<1x1x1x128x128xbf16> to vector<128x128xbf16>
    %c10 = arith.constant 10 : index
    %c0_78 = arith.constant 0 : index
    %c0_79 = arith.constant 0 : index
    %61 = vector.load %arg6[%c10, %c0_78, %c0_79] : memref<27x128x128xbf16, #tpu.memory_space<vmem>>, vector<1x128x128xbf16>
    %62 = vector.shape_cast %61 : vector<1x128x128xbf16> to vector<128x128xbf16>
    %cst_80 = arith.constant dense<0.000000e+00> : vector<128x128xf32>
    %63 = tpu.matmul %60, %62, %cst_80 {dimension_numbers = #tpu.dot_dimension_numbers<[1], [0], [0], [1], [0, 0, 1, 1], [], []>} : vector<128x128xbf16>, vector<128x128xbf16>, vector<128x128xf32> -> vector<128x128xf32>
    %64 = arith.addf %58, %63 : vector<128x128xf32>
    %c0_81 = arith.constant 0 : index
    %c0_82 = arith.constant 0 : index
    %c0_83 = arith.constant 0 : index
    %c2_84 = arith.constant 2 : index
    %c0_85 = arith.constant 0 : index
    %65 = vector.load %arg4[%c0_81, %c0_82, %c0_83, %c2_84, %c0_85] : memref<1x1x1x168x128xbf16, #tpu.memory_space<vmem>>, vector<1x1x1x128x128xbf16>
    %66 = vector.shape_cast %65 : vector<1x1x1x128x128xbf16> to vector<128x128xbf16>
    %c11 = arith.constant 11 : index
    %c0_86 = arith.constant 0 : index
    %c0_87 = arith.constant 0 : index
    %67 = vector.load %arg6[%c11, %c0_86, %c0_87] : memref<27x128x128xbf16, #tpu.memory_space<vmem>>, vector<1x128x128xbf16>
    %68 = vector.shape_cast %67 : vector<1x128x128xbf16> to vector<128x128xbf16>
    %cst_88 = arith.constant dense<0.000000e+00> : vector<128x128xf32>
    %69 = tpu.matmul %66, %68, %cst_88 {dimension_numbers = #tpu.dot_dimension_numbers<[1], [0], [0], [1], [0, 0, 1, 1], [], []>} : vector<128x128xbf16>, vector<128x128xbf16>, vector<128x128xf32> -> vector<128x128xf32>
    %70 = arith.addf %64, %69 : vector<128x128xf32>
    %c0_89 = arith.constant 0 : index
    %c0_90 = arith.constant 0 : index
    %c0_91 = arith.constant 0 : index
    %c16_92 = arith.constant 16 : index
    %c0_93 = arith.constant 0 : index
    %71 = vector.load %arg4[%c0_89, %c0_90, %c0_91, %c16_92, %c0_93] : memref<1x1x1x168x128xbf16, #tpu.memory_space<vmem>>, vector<1x1x1x128x128xbf16>
    %72 = vector.shape_cast %71 : vector<1x1x1x128x128xbf16> to vector<128x128xbf16>
    %c12 = arith.constant 12 : index
    %c0_94 = arith.constant 0 : index
    %c0_95 = arith.constant 0 : index
    %73 = vector.load %arg6[%c12, %c0_94, %c0_95] : memref<27x128x128xbf16, #tpu.memory_space<vmem>>, vector<1x128x128xbf16>
    %74 = vector.shape_cast %73 : vector<1x128x128xbf16> to vector<128x128xbf16>
    %cst_96 = arith.constant dense<0.000000e+00> : vector<128x128xf32>
    %75 = tpu.matmul %72, %74, %cst_96 {dimension_numbers = #tpu.dot_dimension_numbers<[1], [0], [0], [1], [0, 0, 1, 1], [], []>} : vector<128x128xbf16>, vector<128x128xbf16>, vector<128x128xf32> -> vector<128x128xf32>
    %76 = arith.addf %70, %75 : vector<128x128xf32>
    %c0_97 = arith.constant 0 : index
    %c0_98 = arith.constant 0 : index
    %c0_99 = arith.constant 0 : index
    %c17_100 = arith.constant 17 : index
    %c0_101 = arith.constant 0 : index
    %77 = vector.load %arg4[%c0_97, %c0_98, %c0_99, %c17_100, %c0_101] : memref<1x1x1x168x128xbf16, #tpu.memory_space<vmem>>, vector<1x1x1x128x128xbf16>
    %78 = vector.shape_cast %77 : vector<1x1x1x128x128xbf16> to vector<128x128xbf16>
    %c13 = arith.constant 13 : index
    %c0_102 = arith.constant 0 : index
    %c0_103 = arith.constant 0 : index
    %79 = vector.load %arg6[%c13, %c0_102, %c0_103] : memref<27x128x128xbf16, #tpu.memory_space<vmem>>, vector<1x128x128xbf16>
    %80 = vector.shape_cast %79 : vector<1x128x128xbf16> to vector<128x128xbf16>
    %cst_104 = arith.constant dense<0.000000e+00> : vector<128x128xf32>
    %81 = tpu.matmul %78, %80, %cst_104 {dimension_numbers = #tpu.dot_dimension_numbers<[1], [0], [0], [1], [0, 0, 1, 1], [], []>} : vector<128x128xbf16>, vector<128x128xbf16>, vector<128x128xf32> -> vector<128x128xf32>
    %82 = arith.addf %76, %81 : vector<128x128xf32>
    %c0_105 = arith.constant 0 : index
    %c0_106 = arith.constant 0 : index
    %c0_107 = arith.constant 0 : index
    %c18_108 = arith.constant 18 : index
    %c0_109 = arith.constant 0 : index
    %83 = vector.load %arg4[%c0_105, %c0_106, %c0_107, %c18_108, %c0_109] : memref<1x1x1x168x128xbf16, #tpu.memory_space<vmem>>, vector<1x1x1x128x128xbf16>
    %84 = vector.shape_cast %83 : vector<1x1x1x128x128xbf16> to vector<128x128xbf16>
    %c14 = arith.constant 14 : index
    %c0_110 = arith.constant 0 : index
    %c0_111 = arith.constant 0 : index
    %85 = vector.load %arg6[%c14, %c0_110, %c0_111] : memref<27x128x128xbf16, #tpu.memory_space<vmem>>, vector<1x128x128xbf16>
    %86 = vector.shape_cast %85 : vector<1x128x128xbf16> to vector<128x128xbf16>
    %cst_112 = arith.constant dense<0.000000e+00> : vector<128x128xf32>
    %87 = tpu.matmul %84, %86, %cst_112 {dimension_numbers = #tpu.dot_dimension_numbers<[1], [0], [0], [1], [0, 0, 1, 1], [], []>} : vector<128x128xbf16>, vector<128x128xbf16>, vector<128x128xf32> -> vector<128x128xf32>
    %88 = arith.addf %82, %87 : vector<128x128xf32>
    %c0_113 = arith.constant 0 : index
    %c0_114 = arith.constant 0 : index
    %c0_115 = arith.constant 0 : index
    %c32_116 = arith.constant 32 : index
    %c0_117 = arith.constant 0 : index
    %89 = vector.load %arg4[%c0_113, %c0_114, %c0_115, %c32_116, %c0_117] : memref<1x1x1x168x128xbf16, #tpu.memory_space<vmem>>, vector<1x1x1x128x128xbf16>
    %90 = vector.shape_cast %89 : vector<1x1x1x128x128xbf16> to vector<128x128xbf16>
    %c15 = arith.constant 15 : index
    %c0_118 = arith.constant 0 : index
    %c0_119 = arith.constant 0 : index
    %91 = vector.load %arg6[%c15, %c0_118, %c0_119] : memref<27x128x128xbf16, #tpu.memory_space<vmem>>, vector<1x128x128xbf16>
    %92 = vector.shape_cast %91 : vector<1x128x128xbf16> to vector<128x128xbf16>
    %cst_120 = arith.constant dense<0.000000e+00> : vector<128x128xf32>
    %93 = tpu.matmul %90, %92, %cst_120 {dimension_numbers = #tpu.dot_dimension_numbers<[1], [0], [0], [1], [0, 0, 1, 1], [], []>} : vector<128x128xbf16>, vector<128x128xbf16>, vector<128x128xf32> -> vector<128x128xf32>
    %94 = arith.addf %88, %93 : vector<128x128xf32>
    %c0_121 = arith.constant 0 : index
    %c0_122 = arith.constant 0 : index
    %c0_123 = arith.constant 0 : index
    %c33_124 = arith.constant 33 : index
    %c0_125 = arith.constant 0 : index
    %95 = vector.load %arg4[%c0_121, %c0_122, %c0_123, %c33_124, %c0_125] : memref<1x1x1x168x128xbf16, #tpu.memory_space<vmem>>, vector<1x1x1x128x128xbf16>
    %96 = vector.shape_cast %95 : vector<1x1x1x128x128xbf16> to vector<128x128xbf16>
    %c16_126 = arith.constant 16 : index
    %c0_127 = arith.constant 0 : index
    %c0_128 = arith.constant 0 : index
    %97 = vector.load %arg6[%c16_126, %c0_127, %c0_128] : memref<27x128x128xbf16, #tpu.memory_space<vmem>>, vector<1x128x128xbf16>
    %98 = vector.shape_cast %97 : vector<1x128x128xbf16> to vector<128x128xbf16>
    %cst_129 = arith.constant dense<0.000000e+00> : vector<128x128xf32>
    %99 = tpu.matmul %96, %98, %cst_129 {dimension_numbers = #tpu.dot_dimension_numbers<[1], [0], [0], [1], [0, 0, 1, 1], [], []>} : vector<128x128xbf16>, vector<128x128xbf16>, vector<128x128xf32> -> vector<128x128xf32>
    %100 = arith.addf %94, %99 : vector<128x128xf32>
    %c0_130 = arith.constant 0 : index
    %c0_131 = arith.constant 0 : index
    %c0_132 = arith.constant 0 : index
    %c34_133 = arith.constant 34 : index
    %c0_134 = arith.constant 0 : index
    %101 = vector.load %arg4[%c0_130, %c0_131, %c0_132, %c34_133, %c0_134] : memref<1x1x1x168x128xbf16, #tpu.memory_space<vmem>>, vector<1x1x1x128x128xbf16>
    %102 = vector.shape_cast %101 : vector<1x1x1x128x128xbf16> to vector<128x128xbf16>
    %c17_135 = arith.constant 17 : index
    %c0_136 = arith.constant 0 : index
    %c0_137 = arith.constant 0 : index
    %103 = vector.load %arg6[%c17_135, %c0_136, %c0_137] : memref<27x128x128xbf16, #tpu.memory_space<vmem>>, vector<1x128x128xbf16>
    %104 = vector.shape_cast %103 : vector<1x128x128xbf16> to vector<128x128xbf16>
    %cst_138 = arith.constant dense<0.000000e+00> : vector<128x128xf32>
    %105 = tpu.matmul %102, %104, %cst_138 {dimension_numbers = #tpu.dot_dimension_numbers<[1], [0], [0], [1], [0, 0, 1, 1], [], []>} : vector<128x128xbf16>, vector<128x128xbf16>, vector<128x128xf32> -> vector<128x128xf32>
    %106 = arith.addf %100, %105 : vector<128x128xf32>
    %c0_139 = arith.constant 0 : index
    %c0_140 = arith.constant 0 : index
    %c0_141 = arith.constant 0 : index
    %c0_142 = arith.constant 0 : index
    %c0_143 = arith.constant 0 : index
    %107 = vector.load %arg5[%c0_139, %c0_140, %c0_141, %c0_142, %c0_143] : memref<1x1x1x168x128xbf16, #tpu.memory_space<vmem>>, vector<1x1x1x128x128xbf16>
    %108 = vector.shape_cast %107 : vector<1x1x1x128x128xbf16> to vector<128x128xbf16>
    %c18_144 = arith.constant 18 : index
    %c0_145 = arith.constant 0 : index
    %c0_146 = arith.constant 0 : index
    %109 = vector.load %arg6[%c18_144, %c0_145, %c0_146] : memref<27x128x128xbf16, #tpu.memory_space<vmem>>, vector<1x128x128xbf16>
    %110 = vector.shape_cast %109 : vector<1x128x128xbf16> to vector<128x128xbf16>
    %cst_147 = arith.constant dense<0.000000e+00> : vector<128x128xf32>
    %111 = tpu.matmul %108, %110, %cst_147 {dimension_numbers = #tpu.dot_dimension_numbers<[1], [0], [0], [1], [0, 0, 1, 1], [], []>} : vector<128x128xbf16>, vector<128x128xbf16>, vector<128x128xf32> -> vector<128x128xf32>
    %112 = arith.addf %106, %111 : vector<128x128xf32>
    %c0_148 = arith.constant 0 : index
    %c0_149 = arith.constant 0 : index
    %c0_150 = arith.constant 0 : index
    %c1_151 = arith.constant 1 : index
    %c0_152 = arith.constant 0 : index
    %113 = vector.load %arg5[%c0_148, %c0_149, %c0_150, %c1_151, %c0_152] : memref<1x1x1x168x128xbf16, #tpu.memory_space<vmem>>, vector<1x1x1x128x128xbf16>
    %114 = vector.shape_cast %113 : vector<1x1x1x128x128xbf16> to vector<128x128xbf16>
    %c19 = arith.constant 19 : index
    %c0_153 = arith.constant 0 : index
    %c0_154 = arith.constant 0 : index
    %115 = vector.load %arg6[%c19, %c0_153, %c0_154] : memref<27x128x128xbf16, #tpu.memory_space<vmem>>, vector<1x128x128xbf16>
    %116 = vector.shape_cast %115 : vector<1x128x128xbf16> to vector<128x128xbf16>
    %cst_155 = arith.constant dense<0.000000e+00> : vector<128x128xf32>
    %117 = tpu.matmul %114, %116, %cst_155 {dimension_numbers = #tpu.dot_dimension_numbers<[1], [0], [0], [1], [0, 0, 1, 1], [], []>} : vector<128x128xbf16>, vector<128x128xbf16>, vector<128x128xf32> -> vector<128x128xf32>
    %118 = arith.addf %112, %117 : vector<128x128xf32>
    %c0_156 = arith.constant 0 : index
    %c0_157 = arith.constant 0 : index
    %c0_158 = arith.constant 0 : index
    %c2_159 = arith.constant 2 : index
    %c0_160 = arith.constant 0 : index
    %119 = vector.load %arg5[%c0_156, %c0_157, %c0_158, %c2_159, %c0_160] : memref<1x1x1x168x128xbf16, #tpu.memory_space<vmem>>, vector<1x1x1x128x128xbf16>
    %120 = vector.shape_cast %119 : vector<1x1x1x128x128xbf16> to vector<128x128xbf16>
    %c20 = arith.constant 20 : index
    %c0_161 = arith.constant 0 : index
    %c0_162 = arith.constant 0 : index
    %121 = vector.load %arg6[%c20, %c0_161, %c0_162] : memref<27x128x128xbf16, #tpu.memory_space<vmem>>, vector<1x128x128xbf16>
    %122 = vector.shape_cast %121 : vector<1x128x128xbf16> to vector<128x128xbf16>
    %cst_163 = arith.constant dense<0.000000e+00> : vector<128x128xf32>
    %123 = tpu.matmul %120, %122, %cst_163 {dimension_numbers = #tpu.dot_dimension_numbers<[1], [0], [0], [1], [0, 0, 1, 1], [], []>} : vector<128x128xbf16>, vector<128x128xbf16>, vector<128x128xf32> -> vector<128x128xf32>
    %124 = arith.addf %118, %123 : vector<128x128xf32>
    %c0_164 = arith.constant 0 : index
    %c0_165 = arith.constant 0 : index
    %c0_166 = arith.constant 0 : index
    %c16_167 = arith.constant 16 : index
    %c0_168 = arith.constant 0 : index
    %125 = vector.load %arg5[%c0_164, %c0_165, %c0_166, %c16_167, %c0_168] : memref<1x1x1x168x128xbf16, #tpu.memory_space<vmem>>, vector<1x1x1x128x128xbf16>
    %126 = vector.shape_cast %125 : vector<1x1x1x128x128xbf16> to vector<128x128xbf16>
    %c21 = arith.constant 21 : index
    %c0_169 = arith.constant 0 : index
    %c0_170 = arith.constant 0 : index
    %127 = vector.load %arg6[%c21, %c0_169, %c0_170] : memref<27x128x128xbf16, #tpu.memory_space<vmem>>, vector<1x128x128xbf16>
    %128 = vector.shape_cast %127 : vector<1x128x128xbf16> to vector<128x128xbf16>
    %cst_171 = arith.constant dense<0.000000e+00> : vector<128x128xf32>
    %129 = tpu.matmul %126, %128, %cst_171 {dimension_numbers = #tpu.dot_dimension_numbers<[1], [0], [0], [1], [0, 0, 1, 1], [], []>} : vector<128x128xbf16>, vector<128x128xbf16>, vector<128x128xf32> -> vector<128x128xf32>
    %130 = arith.addf %124, %129 : vector<128x128xf32>
    %c0_172 = arith.constant 0 : index
    %c0_173 = arith.constant 0 : index
    %c0_174 = arith.constant 0 : index
    %c17_175 = arith.constant 17 : index
    %c0_176 = arith.constant 0 : index
    %131 = vector.load %arg5[%c0_172, %c0_173, %c0_174, %c17_175, %c0_176] : memref<1x1x1x168x128xbf16, #tpu.memory_space<vmem>>, vector<1x1x1x128x128xbf16>
    %132 = vector.shape_cast %131 : vector<1x1x1x128x128xbf16> to vector<128x128xbf16>
    %c22 = arith.constant 22 : index
    %c0_177 = arith.constant 0 : index
    %c0_178 = arith.constant 0 : index
    %133 = vector.load %arg6[%c22, %c0_177, %c0_178] : memref<27x128x128xbf16, #tpu.memory_space<vmem>>, vector<1x128x128xbf16>
    %134 = vector.shape_cast %133 : vector<1x128x128xbf16> to vector<128x128xbf16>
    %cst_179 = arith.constant dense<0.000000e+00> : vector<128x128xf32>
    %135 = tpu.matmul %132, %134, %cst_179 {dimension_numbers = #tpu.dot_dimension_numbers<[1], [0], [0], [1], [0, 0, 1, 1], [], []>} : vector<128x128xbf16>, vector<128x128xbf16>, vector<128x128xf32> -> vector<128x128xf32>
    %136 = arith.addf %130, %135 : vector<128x128xf32>
    %c0_180 = arith.constant 0 : index
    %c0_181 = arith.constant 0 : index
    %c0_182 = arith.constant 0 : index
    %c18_183 = arith.constant 18 : index
    %c0_184 = arith.constant 0 : index
    %137 = vector.load %arg5[%c0_180, %c0_181, %c0_182, %c18_183, %c0_184] : memref<1x1x1x168x128xbf16, #tpu.memory_space<vmem>>, vector<1x1x1x128x128xbf16>
    %138 = vector.shape_cast %137 : vector<1x1x1x128x128xbf16> to vector<128x128xbf16>
    %c23 = arith.constant 23 : index
    %c0_185 = arith.constant 0 : index
    %c0_186 = arith.constant 0 : index
    %139 = vector.load %arg6[%c23, %c0_185, %c0_186] : memref<27x128x128xbf16, #tpu.memory_space<vmem>>, vector<1x128x128xbf16>
    %140 = vector.shape_cast %139 : vector<1x128x128xbf16> to vector<128x128xbf16>
    %cst_187 = arith.constant dense<0.000000e+00> : vector<128x128xf32>
    %141 = tpu.matmul %138, %140, %cst_187 {dimension_numbers = #tpu.dot_dimension_numbers<[1], [0], [0], [1], [0, 0, 1, 1], [], []>} : vector<128x128xbf16>, vector<128x128xbf16>, vector<128x128xf32> -> vector<128x128xf32>
    %142 = arith.addf %136, %141 : vector<128x128xf32>
    %c0_188 = arith.constant 0 : index
    %c0_189 = arith.constant 0 : index
    %c0_190 = arith.constant 0 : index
    %c32_191 = arith.constant 32 : index
    %c0_192 = arith.constant 0 : index
    %143 = vector.load %arg5[%c0_188, %c0_189, %c0_190, %c32_191, %c0_192] : memref<1x1x1x168x128xbf16, #tpu.memory_space<vmem>>, vector<1x1x1x128x128xbf16>
    %144 = vector.shape_cast %143 : vector<1x1x1x128x128xbf16> to vector<128x128xbf16>
    %c24 = arith.constant 24 : index
    %c0_193 = arith.constant 0 : index
    %c0_194 = arith.constant 0 : index
    %145 = vector.load %arg6[%c24, %c0_193, %c0_194] : memref<27x128x128xbf16, #tpu.memory_space<vmem>>, vector<1x128x128xbf16>
    %146 = vector.shape_cast %145 : vector<1x128x128xbf16> to vector<128x128xbf16>
    %cst_195 = arith.constant dense<0.000000e+00> : vector<128x128xf32>
    %147 = tpu.matmul %144, %146, %cst_195 {dimension_numbers = #tpu.dot_dimension_numbers<[1], [0], [0], [1], [0, 0, 1, 1], [], []>} : vector<128x128xbf16>, vector<128x128xbf16>, vector<128x128xf32> -> vector<128x128xf32>
    %148 = arith.addf %142, %147 : vector<128x128xf32>
    %c0_196 = arith.constant 0 : index
    %c0_197 = arith.constant 0 : index
    %c0_198 = arith.constant 0 : index
    %c33_199 = arith.constant 33 : index
    %c0_200 = arith.constant 0 : index
    %149 = vector.load %arg5[%c0_196, %c0_197, %c0_198, %c33_199, %c0_200] : memref<1x1x1x168x128xbf16, #tpu.memory_space<vmem>>, vector<1x1x1x128x128xbf16>
    %150 = vector.shape_cast %149 : vector<1x1x1x128x128xbf16> to vector<128x128xbf16>
    %c25 = arith.constant 25 : index
    %c0_201 = arith.constant 0 : index
    %c0_202 = arith.constant 0 : index
    %151 = vector.load %arg6[%c25, %c0_201, %c0_202] : memref<27x128x128xbf16, #tpu.memory_space<vmem>>, vector<1x128x128xbf16>
    %152 = vector.shape_cast %151 : vector<1x128x128xbf16> to vector<128x128xbf16>
    %cst_203 = arith.constant dense<0.000000e+00> : vector<128x128xf32>
    %153 = tpu.matmul %150, %152, %cst_203 {dimension_numbers = #tpu.dot_dimension_numbers<[1], [0], [0], [1], [0, 0, 1, 1], [], []>} : vector<128x128xbf16>, vector<128x128xbf16>, vector<128x128xf32> -> vector<128x128xf32>
    %154 = arith.addf %148, %153 : vector<128x128xf32>
    %c0_204 = arith.constant 0 : index
    %c0_205 = arith.constant 0 : index
    %c0_206 = arith.constant 0 : index
    %c34_207 = arith.constant 34 : index
    %c0_208 = arith.constant 0 : index
    %155 = vector.load %arg5[%c0_204, %c0_205, %c0_206, %c34_207, %c0_208] : memref<1x1x1x168x128xbf16, #tpu.memory_space<vmem>>, vector<1x1x1x128x128xbf16>
    %156 = vector.shape_cast %155 : vector<1x1x1x128x128xbf16> to vector<128x128xbf16>
    %c26 = arith.constant 26 : index
    %c0_209 = arith.constant 0 : index
    %c0_210 = arith.constant 0 : index
    %157 = vector.load %arg6[%c26, %c0_209, %c0_210] : memref<27x128x128xbf16, #tpu.memory_space<vmem>>, vector<1x128x128xbf16>
    %158 = vector.shape_cast %157 : vector<1x128x128xbf16> to vector<128x128xbf16>
    %cst_211 = arith.constant dense<0.000000e+00> : vector<128x128xf32>
    %159 = tpu.matmul %156, %158, %cst_211 {dimension_numbers = #tpu.dot_dimension_numbers<[1], [0], [0], [1], [0, 0, 1, 1], [], []>} : vector<128x128xbf16>, vector<128x128xbf16>, vector<128x128xf32> -> vector<128x128xf32>
    %160 = arith.addf %154, %159 : vector<128x128xf32>
    %c0_212 = arith.constant 0 : index
    %c0_213 = arith.constant 0 : index
    %161 = vector.load %arg7[%c0_212, %c0_213] : memref<1x128xf32, #tpu.memory_space<vmem>>, vector<1x128xf32>
    %162 = vector.broadcast %161 : vector<1x128xf32> to vector<128x128xf32>
    %163 = arith.addf %160, %162 : vector<128x128xf32>
    %cst_214 = arith.constant 0.000000e+00 : f32
    %164 = vector.broadcast %cst_214 : f32 to vector<128x128xf32>
    %165 = arith.maximumf %163, %164 : vector<128x128xf32>
    %166 = arith.truncf %165 : vector<128x128xf32> to vector<128x128xbf16>
    %c0_215 = arith.constant 0 : index
    %c0_216 = arith.constant 0 : index
    %c0_217 = arith.constant 0 : index
    %c0_218 = arith.constant 0 : index
    %c0_219 = arith.constant 0 : index
    %167 = vector.load %arg8[%c0_215, %c0_216, %c0_217, %c0_218, %c0_219] : memref<1x1x1x128x128xbf16, #tpu.memory_space<vmem>>, vector<1x1x1x128x128xbf16>
    %168 = vector.shape_cast %167 : vector<1x1x1x128x128xbf16> to vector<128x128xbf16>
    %169 = vector.shape_cast %166 : vector<128x128xbf16> to vector<1x1x1x128x128xbf16>
    tpu.vector_store %arg8[%c0_215, %c0_216, %c0_217, %c0_218, %c0_219], %169 {strides = array<i32>} : memref<1x1x1x128x128xbf16, #tpu.memory_space<vmem>>, vector<1x1x1x128x128xbf16>,
    return
  }
  func.func @transform_0(%arg0: i32, %arg1: i32, %arg2: i32) -> (i32, i32, i32, i32, i32) {
    %c0_i32 = arith.constant 0 : i32
    %0 = arith.addi %arg1, %c0_i32 : i32
    %c0_i32_0 = arith.constant 0 : i32
    %c0_i32_1 = arith.constant 0 : i32
    %c0_i32_2 = arith.constant 0 : i32
    return %arg0, %0, %arg2, %c0_i32_0, %c0_i32_1 : i32, i32, i32, i32, i32
  }
  func.func @transform_1(%arg0: i32, %arg1: i32, %arg2: i32) -> (i32, i32, i32, i32, i32) {
    %c1_i32 = arith.constant 1 : i32
    %0 = arith.addi %arg1, %c1_i32 : i32
    %c0_i32 = arith.constant 0 : i32
    %c0_i32_0 = arith.constant 0 : i32
    %c0_i32_1 = arith.constant 0 : i32
    return %arg0, %0, %arg2, %c0_i32, %c0_i32_0 : i32, i32, i32, i32, i32
  }
  func.func @transform_2(%arg0: i32, %arg1: i32, %arg2: i32) -> (i32, i32, i32, i32, i32) {
    %c2_i32 = arith.constant 2 : i32
    %0 = arith.addi %arg1, %c2_i32 : i32
    %c0_i32 = arith.constant 0 : i32
    %c0_i32_0 = arith.constant 0 : i32
    %c0_i32_1 = arith.constant 0 : i32
    return %arg0, %0, %arg2, %c0_i32, %c0_i32_0 : i32, i32, i32, i32, i32
  }
  func.func @transform_3(%arg0: i32, %arg1: i32, %arg2: i32) -> (i32, i32, i32) {
    %c0_i32 = arith.constant 0 : i32
    %c0_i32_0 = arith.constant 0 : i32
    %c0_i32_1 = arith.constant 0 : i32
    %c0_i32_2 = arith.constant 0 : i32
    return %c0_i32, %c0_i32_0, %c0_i32_1 : i32, i32, i32
  }
  func.func @transform_4(%arg0: i32, %arg1: i32, %arg2: i32) -> (i32, i32) {
    %c0_i32 = arith.constant 0 : i32
    %c0_i32_0 = arith.constant 0 : i32
    %c0_i32_1 = arith.constant 0 : i32
    return %c0_i32, %c0_i32_0 : i32, i32
  }
  func.func @transform_5(%arg0: i32, %arg1: i32, %arg2: i32) -> (i32, i32, i32, i32, i32) {
    %c0_i32 = arith.constant 0 : i32
    %c0_i32_0 = arith.constant 0 : i32
    %c0_i32_1 = arith.constant 0 : i32
    return %arg0, %arg1, %arg2, %c0_i32, %c0_i32_0 : i32, i32, i32, i32, i32
  }
}

</mosaic_0001>

<llo_original>
// kernel: tpu_custom_call.1
$region0: #{tpu_custom_call.1}
  #allocation0 [shape = 'u32[]', space=smem, size = 0x4, offset = 0x4, fixed_abs, tag = 'smem constant byte address 0x4 - core index']
  #allocation1 [shape = 'u32[72,128]{1,0:T(1,128)}', space=vmem, size = 0x9000, scoped, tag = 'internal scratch']
  %s0 = inlined_call_operand.hbm [shape: bf16[2,10,1,168,128], index: 0, kind: input, shape index: {}]
  %s1 = inlined_call_operand.hbm [shape: bf16[2,10,1,168,128], index: 1, kind: input, shape index: {}]
  %s2 = inlined_call_operand.hbm [shape: bf16[2,10,1,168,128], index: 2, kind: input, shape index: {}]
  %s3 = inlined_call_operand.hbm [shape: bf16[27,128,128], index: 3, kind: input, shape index: {}]
  %s4 = inlined_call_operand.vmem [shape: f32[1,128], index: 4, kind: input, shape index: {}]
  %s5 = inlined_call_operand.hbm [shape: bf16[2,8,1,128,128], index: 5, kind: output, shape index: {}]
  %s6 = sld [smem:[#allocation0]]
  $region69: #{tpu_custom_call.1} parent=0
    _
  %s8 = ssub.s32 1, %s6
  %s9 = scalar_select 0, %s8, %s6
  $region1: #{tpu_custom_call.1} parent=0
    #allocation2 [shape = 'u8[86016]{0}', space=vmem, size = 0x15000, scoped, tag = 'input window, operand 0']
    #allocation3 [shape = 's32[2]{0}', space=sflag, size = 0x8, scoped, tag = 'scoped memory for tpu_custom_call.1']
    #allocation4 [shape = 's32[2]{0}', space=sflag, size = 0x8, scoped, tag = 'scoped memory for tpu_custom_call.1']
    #allocation5 [shape = 'u8[86016]{0}', space=vmem, size = 0x15000, scoped, tag = 'input window, operand 1']
    #allocation6 [shape = 's32[2]{0}', space=sflag, size = 0x8, scoped, tag = 'scoped memory for tpu_custom_call.1']
    #allocation7 [shape = 'u8[86016]{0}', space=vmem, size = 0x15000, scoped, tag = 'input window, operand 2']
    #allocation8 [shape = 'u8[884736]{0}', space=vmem, size = 0xd8000, scoped, tag = 'input window, operand 3, single buffered']
    #allocation9 [shape = 's32[1]{0}', space=sflag, size = 0x4, scoped, tag = 'scoped memory for tpu_custom_call.1']
    #allocation10 [shape = 'u8[65536]{0}', space=vmem, size = 0x10000, scoped, tag = 'output window, operand 0']
    %10 = vsyncpa [#allocation3], 0
    %s11 = scalar_lea.sflag [#allocation3], 1
    %12 = vsyncpa %s11, 0
    %13 = vsyncpa [#allocation6], 0
    %s14 = scalar_lea.sflag [#allocation6], 1
    %15 = vsyncpa %s14, 0
    %16 = vsyncpa [#allocation9], 0
    %17 = vsyncpa [#allocation4], 0
    %s18 = scalar_lea.sflag [#allocation4], 1
    %19 = vsyncpa %s18, 0
    loop: start=0, step=1, limit=18
    $region2: #{tpu_custom_call.1} parent=1 // loop_pre_header
      _
    $region3: #{tpu_custom_call.1} parent=1 // loop_header
      %s21 = sphi 0, %s25
      %p22 = scmp.ge.s32.totalorder %s21, 18
      %s28 = sphi 0, %s47
      %s29 = sphi 0, %s43
      %s30 = sphi 0, %s39
      %s31 = sphi 0, %s28
      %s32 = sphi 0, %s29
      %s33 = sphi 0, %s30
      %s34 = sphi 0, %s31
      %s35 = sphi 0, %s32
      %s36 = sphi 0, %s33
      %s54 = sphi 0, %s56
      %s57 = sphi 0, %s54
      %s58 = sphi 0, %s57
      %s74 = sphi 0, %s58
      %s86 = sphi 0, %s88
      %s89 = sphi 0, %s86
      %s90 = sphi 0, %s89
      %s106 = sphi 0, %s90
      %s118 = sphi 0, %s120
      %s121 = sphi 0, %s118
      %s122 = sphi 0, %s121
      %s138 = sphi 0, %s122
      %s142 = sphi 0, %s142
      %s144 = sphi 0, %s142
      %s145 = sphi 0, %s144
      %s159 = sphi 0, %s145
      %s163 = sphi 0, %s163
      %s165 = sphi 0, %s163
      %s166 = sphi 0, %s165
      %s180 = sphi 0, %s166
      %s190 = sphi 0, %s192
      %s193 = sphi 0, %s190
      %s194 = sphi 0, %s193
      %s210 = sphi 0, %s194
    $region4: #{tpu_custom_call.1} parent=1 // loop_header_branch
      %24 = sbr.rel (%p22) target = $region8
    $region5: #{tpu_custom_call.1} parent=1 // loop_body
      %s26 = ssub.s32 %s21, 1
      %s27 = ssub.s32 %s21, 2
      %s37 = sadd.s32 1, %s30
      %p38 = scmp.ge.s32.totalorder %s37, 1
      %s39 = scalar_select %p38, 0, %s37
      %s40 = sadd.s32 1, %s29
      %s41 = scalar_select %p38, %s40, %s29
      %p42 = scmp.ge.s32.totalorder %s41, 8
      %s43 = scalar_select %p42, 0, %s41
      %s44 = sadd.s32 1, %s28
      %s45 = scalar_select %p42, %s44, %s28
      %p46 = scmp.ge.s32.totalorder %s45, 2
      %s47 = scalar_select %p46, 0, %s45
      %s48 = ssub.s32 %s28, %s47
      %s49 = ssub.s32 %s29, %s43
      %s50 = sor.u32 %s48, %s49
      %s51 = ssub.s32 %s30, %s39
      %s52 = sor.u32 %s50, %s51
      %p53 = scmp.eq.s32.totalorder %s52, 0
      %s55 = sadd.s32 %s54, 1
      %s56 = scalar_select %p53, %s54, %s55
      %p59 = pneg %p53
      %p60 = scmp.eq.s32.totalorder %s21, 15
      %p61 = por %p59, %p60
      %p62 = scmp.ne.s32.totalorder %s54, %s57
      %p63 = scmp.eq.s32.totalorder %s21, 0
      %p64 = por %p62, %p63
      %p65 = scmp.ne.s32.totalorder %s54, %s57
      %p66 = scmp.eq.s32.totalorder %s26, 15
      %p67 = por %p65, %p66
      %p68 = scmp.ne.s32.totalorder %s57, %s58
      %p69 = scmp.eq.s32.totalorder %s26, 0
      %p70 = por %p68, %p69
      %p71 = scmp.ne.s32.totalorder %s57, %s58
      %p72 = scmp.eq.s32.totalorder %s27, 15
      %p73 = por %p71, %p72
      %p75 = scmp.ne.s32.totalorder %s58, %s74
      %p76 = scmp.eq.s32.totalorder %s27, 0
      %p77 = por %p75, %p76
      %s78 = sadd.s32 %s29, 1
      %s79 = sadd.s32 %s43, 1
      %s80 = ssub.s32 %s28, %s47
      %s81 = ssub.s32 %s78, %s79
      %s82 = sor.u32 %s80, %s81
      %s83 = ssub.s32 %s30, %s39
      %s84 = sor.u32 %s82, %s83
      %p85 = scmp.eq.s32.totalorder %s84, 0
      %s87 = sadd.s32 %s86, 1
      %s88 = scalar_select %p85, %s86, %s87
      %p91 = pneg %p85
      %p92 = scmp.eq.s32.totalorder %s21, 15
      %p93 = por %p91, %p92
      %p94 = scmp.ne.s32.totalorder %s86, %s89
      %p95 = scmp.eq.s32.totalorder %s21, 0
      %p96 = por %p94, %p95
      %p97 = scmp.ne.s32.totalorder %s86, %s89
      %p98 = scmp.eq.s32.totalorder %s26, 15
      %p99 = por %p97, %p98
      %p100 = scmp.ne.s32.totalorder %s89, %s90
      %p101 = scmp.eq.s32.totalorder %s26, 0
      %p102 = por %p100, %p101
      %p103 = scmp.ne.s32.totalorder %s89, %s90
      %p104 = scmp.eq.s32.totalorder %s27, 15
      %p105 = por %p103, %p104
      %p107 = scmp.ne.s32.totalorder %s90, %s106
      %p108 = scmp.eq.s32.totalorder %s27, 0
      %p109 = por %p107, %p108
      %s110 = sadd.s32 %s29, 2
      %s111 = sadd.s32 %s43, 2
      %s112 = ssub.s32 %s28, %s47
      %s113 = ssub.s32 %s110, %s111
      %s114 = sor.u32 %s112, %s113
      %s115 = ssub.s32 %s30, %s39
      %s116 = sor.u32 %s114, %s115
      %p117 = scmp.eq.s32.totalorder %s116, 0
      %s119 = sadd.s32 %s118, 1
      %s120 = scalar_select %p117, %s118, %s119
      %p123 = pneg %p117
      %p124 = scmp.eq.s32.totalorder %s21, 15
      %p125 = por %p123, %p124
      %p126 = scmp.ne.s32.totalorder %s118, %s121
      %p127 = scmp.eq.s32.totalorder %s21, 0
      %p128 = por %p126, %p127
      %p129 = scmp.ne.s32.totalorder %s118, %s121
      %p130 = scmp.eq.s32.totalorder %s26, 15
      %p131 = por %p129, %p130
      %p132 = scmp.ne.s32.totalorder %s121, %s122
      %p133 = scmp.eq.s32.totalorder %s26, 0
      %p134 = por %p132, %p133
      %p135 = scmp.ne.s32.totalorder %s121, %s122
      %p136 = scmp.eq.s32.totalorder %s27, 15
      %p137 = por %p135, %p136
      %p139 = scmp.ne.s32.totalorder %s122, %s138
      %p140 = scmp.eq.s32.totalorder %s27, 0
      %p141 = por %p139, %p140
      %s143 = sadd.s32 %s142, 1
      %p146 = scmp.eq.s32.totalorder %s21, 15
      %p147 = scmp.ne.s32.totalorder %s142, %s144
      %p148 = scmp.eq.s32.totalorder %s21, 0
      %p149 = por %p147, %p148
      %p150 = scmp.ne.s32.totalorder %s142, %s144
      %p151 = scmp.eq.s32.totalorder %s26, 15
      %p152 = por %p150, %p151
      %p153 = scmp.ne.s32.totalorder %s144, %s145
      %p154 = scmp.eq.s32.totalorder %s26, 0
      %p155 = por %p153, %p154
      %p156 = scmp.ne.s32.totalorder %s144, %s145
      %p157 = scmp.eq.s32.totalorder %s27, 15
      %p158 = por %p156, %p157
      %p160 = scmp.ne.s32.totalorder %s145, %s159
      %p161 = scmp.eq.s32.totalorder %s27, 0
      %p162 = por %p160, %p161
      %s164 = sadd.s32 %s163, 1
      %p167 = scmp.eq.s32.totalorder %s21, 15
      %p168 = scmp.ne.s32.totalorder %s163, %s165
      %p169 = scmp.eq.s32.totalorder %s21, 0
      %p170 = por %p168, %p169
      %p171 = scmp.ne.s32.totalorder %s163, %s165
      %p172 = scmp.eq.s32.totalorder %s26, 15
      %p173 = por %p171, %p172
      %p174 = scmp.ne.s32.totalorder %s165, %s166
      %p175 = scmp.eq.s32.totalorder %s26, 0
      %p176 = por %p174, %p175
      %p177 = scmp.ne.s32.totalorder %s165, %s166
      %p178 = scmp.eq.s32.totalorder %s27, 15
      %p179 = por %p177, %p178
      %p181 = scmp.ne.s32.totalorder %s166, %s180
      %p182 = scmp.eq.s32.totalorder %s27, 0
      %p183 = por %p181, %p182
      %s184 = ssub.s32 %s28, %s47
      %s185 = ssub.s32 %s29, %s43
      %s186 = sor.u32 %s184, %s185
      %s187 = ssub.s32 %s30, %s39
      %s188 = sor.u32 %s186, %s187
      %p189 = scmp.eq.s32.totalorder %s188, 0
      %s191 = sadd.s32 %s190, 1
      %s192 = scalar_select %p189, %s190, %s191
      %p195 = pneg %p189
      %p196 = scmp.eq.s32.totalorder %s21, 15
      %p197 = por %p195, %p196
      %p198 = scmp.ne.s32.totalorder %s190, %s193
      %p199 = scmp.eq.s32.totalorder %s21, 0
      %p200 = por %p198, %p199
      %p201 = scmp.ne.s32.totalorder %s190, %s193
      %p202 = scmp.eq.s32.totalorder %s26, 15
      %p203 = por %p201, %p202
      %p204 = scmp.ne.s32.totalorder %s193, %s194
      %p205 = scmp.eq.s32.totalorder %s26, 0
      %p206 = por %p204, %p205
      %p207 = scmp.ne.s32.totalorder %s193, %s194
      %p208 = scmp.eq.s32.totalorder %s27, 15
      %p209 = por %p207, %p208
      %p211 = scmp.ne.s32.totalorder %s194, %s210
      %p212 = scmp.eq.s32.totalorder %s27, 0
      %p213 = por %p211, %p212
      %p214 = scmp.le.s32.totalorder 1, %s21
      %p215 = scmp.lt.s32.totalorder %s21, 17
      %p216 = pnand %p214, %p215
      %p217 = pneg %p216
      // Predicated region
      $region9: #{tpu_custom_call.1} parent=5 // pred_check
        _
      $region10: #{tpu_custom_call.1} parent=5 // pred_check_branch
        %219 = sbr.rel (%p216) target = $region12
      $region11: #{tpu_custom_call.1} parent=5 // pred_region
        %s220 = ssub.s32 %s21, 1
        // Predicated region
        $region13: #{tpu_custom_call.1} parent=11 // pred_check
          %p221 = pneg %p155
        $region14: #{tpu_custom_call.1} parent=11 // pred_check_branch
          %223 = sbr.rel (%p221) target = $region16
        $region15: #{tpu_custom_call.1} parent=11 // pred_region
          %225 = vsyncadd [#allocation9], 0
          %s226 = sshll.u32 %s3, 4
          %s227 = int_to_ptr.hbm [resolvable:$true] %s226
          %s228 = sshll.u32 [#allocation8], 4
          %s229 = int_to_ptr.vmem [resolvable:$true] %s228
          %234 = dma.hbm_to_vmem [thread:$0]  %s227, 27648, %s229, [#allocation9], 64, 64, 4
        $region16: #{tpu_custom_call.1} parent=11 // pred_fallthru
          _
        // Predicated region
        $region17: #{tpu_custom_call.1} parent=11 // pred_check
          %p235 = pneg %p176
        $region18: #{tpu_custom_call.1} parent=11 // pred_check_branch
          %237 = sbr.rel (%p235) target = $region20
        $region19: #{tpu_custom_call.1} parent=11 // pred_region
          _
        $region20: #{tpu_custom_call.1} parent=11 // pred_fallthru
          _
      $region12: #{tpu_custom_call.1} parent=5 // pred_fallthru
        _
      %p238 = scmp.lt.s32.totalorder %s21, 16
      // Predicated region
      $region21: #{tpu_custom_call.1} parent=5 // pred_check
        %p239 = pneg %p238
      $region22: #{tpu_custom_call.1} parent=5 // pred_check_branch
        %241 = sbr.rel (%p239) target = $region24
      $region23: #{tpu_custom_call.1} parent=5 // pred_region
        // Predicated region
        $region25: #{tpu_custom_call.1} parent=23 // pred_check
          %p242 = pneg %p64
        $region26: #{tpu_custom_call.1} parent=23 // pred_check_branch
          %244 = sbr.rel (%p242) target = $region28
        $region27: #{tpu_custom_call.1} parent=23 // pred_region
          %s245 = sand.u32 %s54, 1
          %s246 = scalar_lea.sflag [#allocation3], %s245
          %s247 = sand.u32 %s54, 1
          %s248 = smul.addr %s247, 84
          %s249 = scalar_lea.vmem [#allocation2], %s248
          %251 = vsyncadd %s246, 0
          %s252 = smul.addr %s30, 21
          %s253 = smul.addr %s29, 21
          %s254 = sadd.s32 %s252, %s253
          %s255 = smul.addr %s28, 210
          %s256 = sadd.s32 %s254, %s255
          %s257 = smul.addr %s256, 4
          %s258 = scalar_lea.hbm %s0, %s257
          %s259 = sshll.u32 %s258, 4
          %s260 = int_to_ptr.hbm [resolvable:$true] %s259
          %s261 = sshll.u32 %s249, 4
          %s262 = int_to_ptr.vmem [resolvable:$true] %s261
          %267 = dma.hbm_to_vmem [thread:$0]  %s260, 1344, %s262, %s246, 64, 64, 4
        $region28: #{tpu_custom_call.1} parent=23 // pred_fallthru
          _
        // Predicated region
        $region29: #{tpu_custom_call.1} parent=23 // pred_check
          %p268 = pneg %p96
        $region30: #{tpu_custom_call.1} parent=23 // pred_check_branch
          %270 = sbr.rel (%p268) target = $region32
        $region31: #{tpu_custom_call.1} parent=23 // pred_region
          %s271 = sand.u32 %s21, 1
          %s272 = scalar_lea.sflag [#allocation6], %s271
          %s273 = sand.u32 %s86, 1
          %s274 = smul.addr %s273, 84
          %s275 = scalar_lea.vmem [#allocation5], %s274
          %s276 = sadd.s32 %s29, 1
          %278 = vsyncadd %s272, 0
          %s279 = smul.addr %s30, 21
          %s280 = smul.addr %s276, 21
          %s281 = sadd.s32 %s279, %s280
          %s282 = smul.addr %s28, 210
          %s283 = sadd.s32 %s281, %s282
          %s284 = smul.addr %s283, 4
          %s285 = scalar_lea.hbm %s1, %s284
          %s286 = sshll.u32 %s285, 4
          %s287 = int_to_ptr.hbm [resolvable:$true] %s286
          %s288 = sshll.u32 %s275, 4
          %s289 = int_to_ptr.vmem [resolvable:$true] %s288
          %294 = dma.hbm_to_vmem [thread:$0]  %s287, 1344, %s289, %s272, 64, 64, 4
        $region32: #{tpu_custom_call.1} parent=23 // pred_fallthru
          _
        // Predicated region
        $region33: #{tpu_custom_call.1} parent=23 // pred_check
          %p295 = pneg %p128
        $region34: #{tpu_custom_call.1} parent=23 // pred_check_branch
          %297 = sbr.rel (%p295) target = $region36
        $region35: #{tpu_custom_call.1} parent=23 // pred_region
          %s298 = sand.u32 %s21, 1
          %s299 = scalar_lea.sflag [#allocation6], %s298
          %s300 = sand.u32 %s118, 1
          %s301 = smul.addr %s300, 84
          %s302 = scalar_lea.vmem [#allocation7], %s301
          %s303 = sadd.s32 %s29, 2
          %305 = vsyncadd %s299, 0
          %s306 = smul.addr %s30, 21
          %s307 = smul.addr %s303, 21
          %s308 = sadd.s32 %s306, %s307
          %s309 = smul.addr %s28, 210
          %s310 = sadd.s32 %s308, %s309
          %s311 = smul.addr %s310, 4
          %s312 = scalar_lea.hbm %s2, %s311
          %s313 = sshll.u32 %s312, 4
          %s314 = int_to_ptr.hbm [resolvable:$true] %s313
          %s315 = sshll.u32 %s302, 4
          %s316 = int_to_ptr.vmem [resolvable:$true] %s315
          %321 = dma.hbm_to_vmem [thread:$0]  %s314, 1344, %s316, %s299, 64, 64, 4
        $region36: #{tpu_custom_call.1} parent=23 // pred_fallthru
          _
      $region24: #{tpu_custom_call.1} parent=5 // pred_fallthru
        _
      %p322 = scmp.le.s32.totalorder 1, %s21
      %p323 = scmp.lt.s32.totalorder %s21, 17
      %p324 = pnand %p322, %p323
      %p325 = pneg %p324
      // Predicated region
      $region37: #{tpu_custom_call.1} parent=5 // pred_check
        _
      $region38: #{tpu_custom_call.1} parent=5 // pred_check_branch
        %327 = sbr.rel (%p324) target = $region40
      $region39: #{tpu_custom_call.1} parent=5 // pred_region
        %s328 = ssub.s32 %s21, 1
        %s329 = sand.u32 %s57, 1
        %s330 = scalar_lea.sflag [#allocation3], %s329
        %s331 = sand.u32 %s57, 1
        %s332 = smul.addr %s331, 84
        %s333 = scalar_lea.vmem [#allocation2], %s332
        // Predicated region
        $region41: #{tpu_custom_call.1} parent=39 // pred_check
          %p334 = pneg %p70
        $region42: #{tpu_custom_call.1} parent=39 // pred_check_branch
          %336 = sbr.rel (%p334) target = $region44
        $region43: #{tpu_custom_call.1} parent=39 // pred_region
          %338 = dma.done %s330, 1344
        $region44: #{tpu_custom_call.1} parent=39 // pred_fallthru
          _
        %s339 = sand.u32 %s26, 1
        %s340 = scalar_lea.sflag [#allocation6], %s339
        %s341 = sand.u32 %s89, 1
        %s342 = smul.addr %s341, 84
        %s343 = scalar_lea.vmem [#allocation5], %s342
        // Predicated region
        $region45: #{tpu_custom_call.1} parent=39 // pred_check
          %p344 = pneg %p102
        $region46: #{tpu_custom_call.1} parent=39 // pred_check_branch
          %346 = sbr.rel (%p344) target = $region48
        $region47: #{tpu_custom_call.1} parent=39 // pred_region
          %348 = dma.done %s340, 1344
        $region48: #{tpu_custom_call.1} parent=39 // pred_fallthru
          _
        %s349 = sand.u32 %s26, 1
        %s350 = scalar_lea.sflag [#allocation6], %s349
        %s351 = sand.u32 %s121, 1
        %s352 = smul.addr %s351, 84
        %s353 = scalar_lea.vmem [#allocation7], %s352
        // Predicated region
        $region49: #{tpu_custom_call.1} parent=39 // pred_check
          %p354 = pneg %p134
        $region50: #{tpu_custom_call.1} parent=39 // pred_check_branch
          %356 = sbr.rel (%p354) target = $region52
        $region51: #{tpu_custom_call.1} parent=39 // pred_region
          %358 = dma.done %s350, 1344
        $region52: #{tpu_custom_call.1} parent=39 // pred_fallthru
          _
        // Predicated region
        $region53: #{tpu_custom_call.1} parent=39 // pred_check
          %p359 = pneg %p155
        $region54: #{tpu_custom_call.1} parent=39 // pred_check_branch
          %361 = sbr.rel (%p359) target = $region56
        $region55: #{tpu_custom_call.1} parent=39 // pred_region
          %363 = dma.done [#allocation9], 27648
        $region56: #{tpu_custom_call.1} parent=39 // pred_fallthru
          _
        %s364 = sand.u32 %s57, 1
        %s365 = scalar_lea.sflag [#allocation3], %s364
        %s366 = sand.u32 %s57, 1
        %s367 = smul.addr %s366, 84
        %s368 = scalar_lea.vmem [#allocation2], %s367
        %p369 = pneg %p70
        %p370 = pneg %p67
        %s371 = sand.u32 %s26, 1
        %s372 = scalar_lea.sflag [#allocation6], %s371
        %s373 = sand.u32 %s89, 1
        %s374 = smul.addr %s373, 84
        %s375 = scalar_lea.vmem [#allocation5], %s374
        %p376 = pneg %p102
        %p377 = pneg %p99
        %s378 = sand.u32 %s26, 1
        %s379 = scalar_lea.sflag [#allocation6], %s378
        %s380 = sand.u32 %s121, 1
        %s381 = smul.addr %s380, 84
        %s382 = scalar_lea.vmem [#allocation7], %s381
        %p383 = pneg %p134
        %p384 = pneg %p131
        %p385 = pneg %p155
        %p386 = pneg %p152
        %p387 = pneg %p176
        %p388 = pneg %p173
        %p389 = pneg %p206
        %p390 = pneg %p203
        %s391 = sand.u32 %s193, 1
        %s392 = scalar_lea.sflag [#allocation4], %s391
        %s393 = sand.u32 %s193, 1
        %s394 = smul.addr %s393, 64
        %s395 = scalar_lea.vmem [#allocation10], %s394
        %s396 = sadd.s32 %s32, 1
        %s397 = sadd.s32 %s32, 2
        %v398 = vld [vmem:[%s333] sm:$0xf]
        %v399 = vld [vmem:[%s333 + $0x4] sm:$0xf]
        %v400 = vld [vmem:[%s333 + $0x8] sm:$0xf]
        %v401 = vld [vmem:[%s333 + $0xc] sm:$0xf]
        %v402 = vld [vmem:[%s333 + $0x10] sm:$0xf]
        %v403 = vld [vmem:[%s333 + $0x14] sm:$0xf]
        %v404 = vld [vmem:[%s333 + $0x18] sm:$0xf]
        %v405 = vld [vmem:[%s333 + $0x1c] sm:$0xf]
        %v406 = vld [vmem:[%s333 + $0x20] sm:$0xf]
        %v407 = vld [vmem:[%s333 + $0x24] sm:$0xf]
        %v408 = vld [vmem:[%s333 + $0x28] sm:$0xf]
        %v409 = vld [vmem:[%s333 + $0x2c] sm:$0xf]
        %v410 = vld [vmem:[%s333 + $0x30] sm:$0xf]
        %v411 = vld [vmem:[%s333 + $0x34] sm:$0xf]
        %v412 = vld [vmem:[%s333 + $0x38] sm:$0xf]
        %v413 = vld [vmem:[%s333 + $0x3c] sm:$0xf]
        %v414 = vld [vmem:[#allocation8] sm:$0xf]
        %v415 = vld [vmem:[#allocation8 + $0x4] sm:$0xf]
        %v416 = vld [vmem:[#allocation8 + $0x8] sm:$0xf]
        %v417 = vld [vmem:[#allocation8 + $0xc] sm:$0xf]
        %v418 = vld [vmem:[#allocation8 + $0x10] sm:$0xf]
        %v419 = vld [vmem:[#allocation8 + $0x14] sm:$0xf]
        %v420 = vld [vmem:[#allocation8 + $0x18] sm:$0xf]
        %v421 = vld [vmem:[#allocation8 + $0x1c] sm:$0xf]
        %v422 = vld [vmem:[#allocation8 + $0x20] sm:$0xf]
        %v423 = vld [vmem:[#allocation8 + $0x24] sm:$0xf]
        %v424 = vld [vmem:[#allocation8 + $0x28] sm:$0xf]
        %v425 = vld [vmem:[#allocation8 + $0x2c] sm:$0xf]
        %v426 = vld [vmem:[#allocation8 + $0x30] sm:$0xf]
        %v427 = vld [vmem:[#allocation8 + $0x34] sm:$0xf]
        %v428 = vld [vmem:[#allocation8 + $0x38] sm:$0xf]
        %v429 = vld [vmem:[#allocation8 + $0x3c] sm:$0xf]
        %v430 = vld [vmem:[%s333 + $0x40] sm:$0x1]
        %s431 = scalar_lea.vmem [#allocation8], 64
        %v432 = vld [vmem:[%s431] sm:$0xf]
        %v433 = vld [vmem:[%s431 + $0x4] sm:$0xf]
        %v434 = vld [vmem:[%s431 + $0x8] sm:$0xf]
        %v435 = vld [vmem:[%s431 + $0xc] sm:$0xf]
        %v436 = vld [vmem:[%s431 + $0x10] sm:$0xf]
        %v437 = vld [vmem:[%s431 + $0x14] sm:$0xf]
        %v438 = vld [vmem:[%s431 + $0x18] sm:$0xf]
        %v439 = vld [vmem:[%s431 + $0x1c] sm:$0xf]
        %v440 = vld [vmem:[%s431 + $0x20] sm:$0xf]
        %v441 = vld [vmem:[%s431 + $0x24] sm:$0xf]
        %v442 = vld [vmem:[%s431 + $0x28] sm:$0xf]
        %v443 = vld [vmem:[%s431 + $0x2c] sm:$0xf]
        %v444 = vld [vmem:[%s431 + $0x30] sm:$0xf]
        %v445 = vld [vmem:[%s431 + $0x34] sm:$0xf]
        %v446 = vld [vmem:[%s431 + $0x38] sm:$0xf]
        %v447 = vld [vmem:[%s431 + $0x3c] sm:$0xf]
        %v465 = vunpack.c.l.b16 %v398
        %v466 = vunpack.c.l.b16 %v399
        %v467 = vunpack.c.l.b16 %v400
        %v468 = vunpack.c.l.b16 %v401
        %v469 = vunpack.c.l.b16 %v402
        %v470 = vunpack.c.l.b16 %v403
        %v471 = vunpack.c.l.b16 %v404
        %v472 = vunpack.c.l.b16 %v405
        %v473 = vunpack.c.l.b16 %v406
        %v474 = vunpack.c.l.b16 %v407
        %v475 = vunpack.c.l.b16 %v408
        %v476 = vunpack.c.l.b16 %v409
        %v477 = vunpack.c.l.b16 %v410
        %v478 = vunpack.c.l.b16 %v411
        %v479 = vunpack.c.l.b16 %v412
        %v480 = vunpack.c.l.b16 %v413
        %v481 = vunpack.c.l.b16 %v430
        %v482 = vpack.c.b16 %v466, %v465
        %v483 = vpack.c.b16 %v468, %v467
        %v484 = vpack.c.b16 %v470, %v469
        %v485 = vpack.c.b16 %v472, %v471
        %v486 = vpack.c.b16 %v474, %v473
        %v487 = vpack.c.b16 %v476, %v475
        %v488 = vpack.c.b16 %v478, %v477
        %v489 = vpack.c.b16 %v480, %v479
        %v490 = vpack.c.b16 %v481, %v481
        %vm491 = vsmask.f32 7424
        %v493 = vshrl.u32 %v482, 16
        %v495 = vshll.u32 %v482, 16
        %v497 = vrot.slane %v495, 1
        %v498 = vor.u32 %v493, %v497
        %v500 = vshll.u32 %v483, 16
        %v502 = vrot.slane %v500, 1
        %v503 = vsel %vm491, %v498, %v502
        %v504 = vshrl.u32 %v483, 16
        %v506 = vor.u32 %v504, %v502
        %v508 = vshll.u32 %v484, 16
        %v510 = vrot.slane %v508, 1
        %v511 = vsel %vm491, %v506, %v510
        %v512 = vshrl.u32 %v484, 16
        %v514 = vor.u32 %v512, %v510
        %v516 = vshll.u32 %v485, 16
        %v518 = vrot.slane %v516, 1
        %v519 = vsel %vm491, %v514, %v518
        %v520 = vshrl.u32 %v485, 16
        %v522 = vor.u32 %v520, %v518
        %v524 = vshll.u32 %v486, 16
        %v526 = vrot.slane %v524, 1
        %v527 = vsel %vm491, %v522, %v526
        %v528 = vshrl.u32 %v486, 16
        %v530 = vor.u32 %v528, %v526
        %v532 = vshll.u32 %v487, 16
        %v534 = vrot.slane %v532, 1
        %v535 = vsel %vm491, %v530, %v534
        %v536 = vshrl.u32 %v487, 16
        %v538 = vor.u32 %v536, %v534
        %v540 = vshll.u32 %v488, 16
        %v542 = vrot.slane %v540, 1
        %v543 = vsel %vm491, %v538, %v542
        %v544 = vshrl.u32 %v488, 16
        %v546 = vor.u32 %v544, %v542
        %v548 = vshll.u32 %v489, 16
        %v550 = vrot.slane %v548, 1
        %v551 = vsel %vm491, %v546, %v550
        %v552 = vshrl.u32 %v489, 16
        %v554 = vor.u32 %v552, %v550
        %v556 = vshll.u32 %v490, 16
        %v558 = vrot.slane %v556, 1
        %v559 = vsel %vm491, %v554, %v558
        %v584 = vunpack.c.l.b16 %v432
        %v585 = vunpack.c.l.b16 %v433
        %v586 = vunpack.c.l.b16 %v434
        %v587 = vunpack.c.l.b16 %v435
        %v588 = vunpack.c.l.b16 %v436
        %v589 = vunpack.c.l.b16 %v437
        %v590 = vunpack.c.l.b16 %v438
        %v591 = vunpack.c.l.b16 %v439
        %v592 = vunpack.c.l.b16 %v440
        %v593 = vunpack.c.l.b16 %v441
        %v594 = vunpack.c.l.b16 %v442
        %v595 = vunpack.c.l.b16 %v443
        %v596 = vunpack.c.l.b16 %v444
        %v597 = vunpack.c.l.b16 %v445
        %v598 = vunpack.c.l.b16 %v446
        %v599 = vunpack.c.l.b16 %v447
        %v600 = vpack.c.b16 %v585, %v584
        %v601 = vpack.c.b16 %v587, %v586
        %v602 = vpack.c.b16 %v589, %v588
        %v603 = vpack.c.b16 %v591, %v590
        %v604 = vpack.c.b16 %v593, %v592
        %v605 = vpack.c.b16 %v595, %v594
        %v606 = vpack.c.b16 %v597, %v596
        %v607 = vpack.c.b16 %v599, %v598
        %616 = vmatpush.bf16.msra.mxu0 %v607
        %617 = vmatpush.bf16.msra.mxu0 %v606
        %618 = vmatpush.bf16.msra.mxu0 %v605
        %619 = vmatpush.bf16.msra.mxu0 %v604
        %620 = vmatpush.bf16.msra.mxu0 %v603
        %621 = vmatpush.bf16.msra.mxu0 %v602
        %622 = vmatpush.bf16.msra.mxu0 %v601
        %623 = vmatpush.bf16.msra.mxu0 %v600
        %624 = vmatmul.bf16.gmra.mxu0 %v503
        %v625 = vpop.f32.mrf.mxu0
        %v626 = vadd.f32 0.0, %v625
        %v627 = vpop.f32.mrf.mxu0
        %v628 = vadd.f32 0.0, %v627
        %629 = vmatmul.bf16.gmra.mxu0 %v511
        %v630 = vpop.f32.mrf.mxu0
        %v631 = vadd.f32 0.0, %v630
        %v632 = vpop.f32.mrf.mxu0
        %v633 = vadd.f32 0.0, %v632
        %634 = vmatmul.bf16.gmra.mxu0 %v519
        %v635 = vpop.f32.mrf.mxu0
        %v636 = vadd.f32 0.0, %v635
        %v637 = vpop.f32.mrf.mxu0
        %v638 = vadd.f32 0.0, %v637
        %639 = vmatmul.bf16.gmra.mxu0 %v527
        %v640 = vpop.f32.mrf.mxu0
        %v641 = vadd.f32 0.0, %v640
        %v642 = vpop.f32.mrf.mxu0
        %v643 = vadd.f32 0.0, %v642
        %644 = vmatmul.bf16.gmra.mxu0 %v535
        %v645 = vpop.f32.mrf.mxu0
        %v646 = vadd.f32 0.0, %v645
        %v647 = vpop.f32.mrf.mxu0
        %v648 = vadd.f32 0.0, %v647
        %649 = vmatmul.bf16.gmra.mxu0 %v543
        %v650 = vpop.f32.mrf.mxu0
        %v651 = vadd.f32 0.0, %v650
        %v652 = vpop.f32.mrf.mxu0
        %v653 = vadd.f32 0.0, %v652
        %654 = vmatmul.bf16.gmra.mxu0 %v551
        %v655 = vpop.f32.mrf.mxu0
        %v656 = vadd.f32 0.0, %v655
        %v657 = vpop.f32.mrf.mxu0
        %v658 = vadd.f32 0.0, %v657
        %659 = vmatmul.bf16.gmra.mxu0 %v559
        %v660 = vpop.f32.mrf.mxu0
        %v661 = vadd.f32 0.0, %v660
        %v662 = vpop.f32.mrf.mxu0
        %v663 = vadd.f32 0.0, %v662
        %664 = vdwg.mxu0
        %v689 = vunpack.c.l.b16 %v414
        %v690 = vunpack.c.l.b16 %v415
        %v691 = vunpack.c.l.b16 %v416
        %v692 = vunpack.c.l.b16 %v417
        %v693 = vunpack.c.l.b16 %v418
        %v694 = vunpack.c.l.b16 %v419
        %v695 = vunpack.c.l.b16 %v420
        %v696 = vunpack.c.l.b16 %v421
        %v697 = vunpack.c.l.b16 %v422
        %v698 = vunpack.c.l.b16 %v423
        %v699 = vunpack.c.l.b16 %v424
        %v700 = vunpack.c.l.b16 %v425
        %v701 = vunpack.c.l.b16 %v426
        %v702 = vunpack.c.l.b16 %v427
        %v703 = vunpack.c.l.b16 %v428
        %v704 = vunpack.c.l.b16 %v429
        %v705 = vpack.c.b16 %v690, %v689
        %v706 = vpack.c.b16 %v692, %v691
        %v707 = vpack.c.b16 %v694, %v693
        %v708 = vpack.c.b16 %v696, %v695
        %v709 = vpack.c.b16 %v698, %v697
        %v710 = vpack.c.b16 %v700, %v699
        %v711 = vpack.c.b16 %v702, %v701
        %v712 = vpack.c.b16 %v704, %v703
        %721 = vmatpush.bf16.msra.mxu0 %v712
        %722 = vmatpush.bf16.msra.mxu0 %v711
        %723 = vmatpush.bf16.msra.mxu0 %v710
        %724 = vmatpush.bf16.msra.mxu0 %v709
        %725 = vmatpush.bf16.msra.mxu0 %v708
        %726 = vmatpush.bf16.msra.mxu0 %v707
        %727 = vmatpush.bf16.msra.mxu0 %v706
        %728 = vmatpush.bf16.msra.mxu0 %v705
        %729 = vmatmul.bf16.gmra.mxu0 %v482
        %v730 = vpop.f32.mrf.mxu0
        %v731 = vadd.f32 %v626, %v730
        %v732 = vpop.f32.mrf.mxu0
        %v733 = vadd.f32 %v628, %v732
        %734 = vmatmul.bf16.gmra.mxu0 %v483
        %v735 = vpop.f32.mrf.mxu0
        %v736 = vadd.f32 %v631, %v735
        %v737 = vpop.f32.mrf.mxu0
        %v738 = vadd.f32 %v633, %v737
        %739 = vmatmul.bf16.gmra.mxu0 %v484
        %v740 = vpop.f32.mrf.mxu0
        %v741 = vadd.f32 %v636, %v740
        %v742 = vpop.f32.mrf.mxu0
        %v743 = vadd.f32 %v638, %v742
        %744 = vmatmul.bf16.gmra.mxu0 %v485
        %v745 = vpop.f32.mrf.mxu0
        %v746 = vadd.f32 %v641, %v745
        %v747 = vpop.f32.mrf.mxu0
        %v748 = vadd.f32 %v643, %v747
        %749 = vmatmul.bf16.gmra.mxu0 %v486
        %v750 = vpop.f32.mrf.mxu0
        %v751 = vadd.f32 %v646, %v750
        %v752 = vpop.f32.mrf.mxu0
        %v753 = vadd.f32 %v648, %v752
        %754 = vmatmul.bf16.gmra.mxu0 %v487
        %v755 = vpop.f32.mrf.mxu0
        %v756 = vadd.f32 %v651, %v755
        %v757 = vpop.f32.mrf.mxu0
        %v758 = vadd.f32 %v653, %v757
        %759 = vmatmul.bf16.gmra.mxu0 %v488
        %v760 = vpop.f32.mrf.mxu0
        %v761 = vadd.f32 %v656, %v760
        %v762 = vpop.f32.mrf.mxu0
        %v763 = vadd.f32 %v658, %v762
        %764 = vmatmul.bf16.gmra.mxu0 %v489
        %v765 = vpop.f32.mrf.mxu0
        %v766 = vadd.f32 %v661, %v765
        %v767 = vpop.f32.mrf.mxu0
        %v768 = vadd.f32 %v663, %v767
        %769 = vdwg.mxu0
        %v770 = vld [vmem:[%s333] sm:$0xe]
        %s771 = scalar_lea.vmem [#allocation8], 128
        %v772 = vld [vmem:[%s771] sm:$0xf]
        %v773 = vld [vmem:[%s771 + $0x4] sm:$0xf]
        %v774 = vld [vmem:[%s771 + $0x8] sm:$0xf]
        %v775 = vld [vmem:[%s771 + $0xc] sm:$0xf]
        %v776 = vld [vmem:[%s771 + $0x10] sm:$0xf]
        %v777 = vld [vmem:[%s771 + $0x14] sm:$0xf]
        %v778 = vld [vmem:[%s771 + $0x18] sm:$0xf]
        %v779 = vld [vmem:[%s771 + $0x1c] sm:$0xf]
        %v780 = vld [vmem:[%s771 + $0x20] sm:$0xf]
        %v781 = vld [vmem:[%s771 + $0x24] sm:$0xf]
        %v782 = vld [vmem:[%s771 + $0x28] sm:$0xf]
        %v783 = vld [vmem:[%s771 + $0x2c] sm:$0xf]
        %v784 = vld [vmem:[%s771 + $0x30] sm:$0xf]
        %v785 = vld [vmem:[%s771 + $0x34] sm:$0xf]
        %v786 = vld [vmem:[%s771 + $0x38] sm:$0xf]
        %v787 = vld [vmem:[%s771 + $0x3c] sm:$0xf]
        %v789 = vunpack.c.l.b16 %v770
        %v790 = vpack.c.b16 %v466, %v789
        %vm791 = vcmask 1046528
        %v792 = vrot.slane %v790, 1
        %v793 = vrot.slane %v483, 1
        %v794 = vsel %vm791, %v792, %v793
        %v795 = vrot.slane %v484, 1
        %v796 = vsel %vm791, %v793, %v795
        %v797 = vrot.slane %v485, 1
        %v798 = vsel %vm791, %v795, %v797
        %v799 = vrot.slane %v486, 1
        %v800 = vsel %vm791, %v797, %v799
        %v801 = vrot.slane %v487, 1
        %v802 = vsel %vm791, %v799, %v801
        %v803 = vrot.slane %v488, 1
        %v804 = vsel %vm791, %v801, %v803
        %v805 = vrot.slane %v489, 1
        %v806 = vsel %vm791, %v803, %v805
        %v807 = vrot.slane %v490, 1
        %v808 = vsel %vm791, %v805, %v807
        %v833 = vunpack.c.l.b16 %v772
        %v834 = vunpack.c.l.b16 %v773
        %v835 = vunpack.c.l.b16 %v774
        %v836 = vunpack.c.l.b16 %v775
        %v837 = vunpack.c.l.b16 %v776
        %v838 = vunpack.c.l.b16 %v777
        %v839 = vunpack.c.l.b16 %v778
        %v840 = vunpack.c.l.b16 %v779
        %v841 = vunpack.c.l.b16 %v780
        %v842 = vunpack.c.l.b16 %v781
        %v843 = vunpack.c.l.b16 %v782
        %v844 = vunpack.c.l.b16 %v783
        %v845 = vunpack.c.l.b16 %v784
        %v846 = vunpack.c.l.b16 %v785
        %v847 = vunpack.c.l.b16 %v786
        %v848 = vunpack.c.l.b16 %v787
        %v849 = vpack.c.b16 %v834, %v833
        %v850 = vpack.c.b16 %v836, %v835
        %v851 = vpack.c.b16 %v838, %v837
        %v852 = vpack.c.b16 %v840, %v839
        %v853 = vpack.c.b16 %v842, %v841
        %v854 = vpack.c.b16 %v844, %v843
        %v855 = vpack.c.b16 %v846, %v845
        %v856 = vpack.c.b16 %v848, %v847
        %865 = vmatpush.bf16.msra.mxu0 %v856
        %866 = vmatpush.bf16.msra.mxu0 %v855
        %867 = vmatpush.bf16.msra.mxu0 %v854
        %868 = vmatpush.bf16.msra.mxu0 %v853
        %869 = vmatpush.bf16.msra.mxu0 %v852
        %870 = vmatpush.bf16.msra.mxu0 %v851
        %871 = vmatpush.bf16.msra.mxu0 %v850
        %872 = vmatpush.bf16.msra.mxu0 %v849
        %873 = vmatmul.bf16.gmra.mxu0 %v794
        %v874 = vpop.f32.mrf.mxu0
        %v875 = vadd.f32 0.0, %v874
        %v876 = vpop.f32.mrf.mxu0
        %v877 = vadd.f32 0.0, %v876
        %878 = vmatmul.bf16.gmra.mxu0 %v796
        %v879 = vpop.f32.mrf.mxu0
        %v880 = vadd.f32 0.0, %v879
        %v881 = vpop.f32.mrf.mxu0
        %v882 = vadd.f32 0.0, %v881
        %883 = vmatmul.bf16.gmra.mxu0 %v798
        %v884 = vpop.f32.mrf.mxu0
        %v885 = vadd.f32 0.0, %v884
        %v886 = vpop.f32.mrf.mxu0
        %v887 = vadd.f32 0.0, %v886
        %888 = vmatmul.bf16.gmra.mxu0 %v800
        %v889 = vpop.f32.mrf.mxu0
        %v890 = vadd.f32 0.0, %v889
        %v891 = vpop.f32.mrf.mxu0
        %v892 = vadd.f32 0.0, %v891
        %893 = vmatmul.bf16.gmra.mxu0 %v802
        %v894 = vpop.f32.mrf.mxu0
        %v895 = vadd.f32 0.0, %v894
        %v896 = vpop.f32.mrf.mxu0
        %v897 = vadd.f32 0.0, %v896
        %898 = vmatmul.bf16.gmra.mxu0 %v804
        %v899 = vpop.f32.mrf.mxu0
        %v900 = vadd.f32 0.0, %v899
        %v901 = vpop.f32.mrf.mxu0
        %v902 = vadd.f32 0.0, %v901
        %903 = vmatmul.bf16.gmra.mxu0 %v806
        %v904 = vpop.f32.mrf.mxu0
        %v905 = vadd.f32 0.0, %v904
        %v906 = vpop.f32.mrf.mxu0
        %v907 = vadd.f32 0.0, %v906
        %908 = vmatmul.bf16.gmra.mxu0 %v808
        %v909 = vpop.f32.mrf.mxu0
        %v910 = vadd.f32 0.0, %v909
        %v911 = vpop.f32.mrf.mxu0
        %v912 = vadd.f32 0.0, %v911
        %913 = vdwg.mxu0
        %v914 = vadd.f32 %v731, %v875
        %v915 = vadd.f32 %v733, %v877
        %v916 = vadd.f32 %v736, %v880
        %v917 = vadd.f32 %v738, %v882
        %v918 = vadd.f32 %v741, %v885
        %v919 = vadd.f32 %v743, %v887
        %v920 = vadd.f32 %v746, %v890
        %v921 = vadd.f32 %v748, %v892
        %v922 = vadd.f32 %v751, %v895
        %v923 = vadd.f32 %v753, %v897
        %v924 = vadd.f32 %v756, %v900
        %v925 = vadd.f32 %v758, %v902
        %v926 = vadd.f32 %v761, %v905
        %v927 = vadd.f32 %v763, %v907
        %v928 = vadd.f32 %v766, %v910
        %v929 = vadd.f32 %v768, %v912
        %v930 = vld [vmem:[%s333 + $0x8] sm:$0xf]
        %v931 = vld [vmem:[%s333 + $0xc] sm:$0xf]
        %v932 = vld [vmem:[%s333 + $0x10] sm:$0xf]
        %v933 = vld [vmem:[%s333 + $0x14] sm:$0xf]
        %v934 = vld [vmem:[%s333 + $0x18] sm:$0xf]
        %v935 = vld [vmem:[%s333 + $0x1c] sm:$0xf]
        %v936 = vld [vmem:[%s333 + $0x20] sm:$0xf]
        %v937 = vld [vmem:[%s333 + $0x24] sm:$0xf]
        %v938 = vld [vmem:[%s333 + $0x28] sm:$0xf]
        %v939 = vld [vmem:[%s333 + $0x2c] sm:$0xf]
        %v940 = vld [vmem:[%s333 + $0x30] sm:$0xf]
        %v941 = vld [vmem:[%s333 + $0x34] sm:$0xf]
        %v942 = vld [vmem:[%s333 + $0x38] sm:$0xf]
        %v943 = vld [vmem:[%s333 + $0x3c] sm:$0xf]
        %v944 = vld [vmem:[%s333 + $0x40] sm:$0xf]
        %v945 = vld [vmem:[%s333 + $0x44] sm:$0xf]
        %s946 = scalar_lea.vmem [#allocation8], 192
        %v947 = vld [vmem:[%s946] sm:$0xf]
        %v948 = vld [vmem:[%s946 + $0x4] sm:$0xf]
        %v949 = vld [vmem:[%s946 + $0x8] sm:$0xf]
        %v950 = vld [vmem:[%s946 + $0xc] sm:$0xf]
        %v951 = vld [vmem:[%s946 + $0x10] sm:$0xf]
        %v952 = vld [vmem:[%s946 + $0x14] sm:$0xf]
        %v953 = vld [vmem:[%s946 + $0x18] sm:$0xf]
        %v954 = vld [vmem:[%s946 + $0x1c] sm:$0xf]
        %v955 = vld [vmem:[%s946 + $0x20] sm:$0xf]
        %v956 = vld [vmem:[%s946 + $0x24] sm:$0xf]
        %v957 = vld [vmem:[%s946 + $0x28] sm:$0xf]
        %v958 = vld [vmem:[%s946 + $0x2c] sm:$0xf]
        %v959 = vld [vmem:[%s946 + $0x30] sm:$0xf]
        %v960 = vld [vmem:[%s946 + $0x34] sm:$0xf]
        %v961 = vld [vmem:[%s946 + $0x38] sm:$0xf]
        %v962 = vld [vmem:[%s946 + $0x3c] sm:$0xf]
        %v979 = vunpack.c.l.b16 %v930
        %v980 = vunpack.c.l.b16 %v931
        %v981 = vunpack.c.l.b16 %v932
        %v982 = vunpack.c.l.b16 %v933
        %v983 = vunpack.c.l.b16 %v934
        %v984 = vunpack.c.l.b16 %v935
        %v985 = vunpack.c.l.b16 %v936
        %v986 = vunpack.c.l.b16 %v937
        %v987 = vunpack.c.l.b16 %v938
        %v988 = vunpack.c.l.b16 %v939
        %v989 = vunpack.c.l.b16 %v940
        %v990 = vunpack.c.l.b16 %v941
        %v991 = vunpack.c.l.b16 %v942
        %v992 = vunpack.c.l.b16 %v943
        %v993 = vunpack.c.l.b16 %v944
        %v994 = vunpack.c.l.b16 %v945
        %v995 = vpack.c.b16 %v980, %v979
        %v996 = vpack.c.b16 %v982, %v981
        %v997 = vpack.c.b16 %v984, %v983
        %v998 = vpack.c.b16 %v986, %v985
        %v999 = vpack.c.b16 %v988, %v987
        %v1000 = vpack.c.b16 %v990, %v989
        %v1001 = vpack.c.b16 %v992, %v991
        %v1002 = vpack.c.b16 %v994, %v993
        %v1027 = vunpack.c.l.b16 %v947
        %v1028 = vunpack.c.l.b16 %v948
        %v1029 = vunpack.c.l.b16 %v949
        %v1030 = vunpack.c.l.b16 %v950
        %v1031 = vunpack.c.l.b16 %v951
        %v1032 = vunpack.c.l.b16 %v952
        %v1033 = vunpack.c.l.b16 %v953
        %v1034 = vunpack.c.l.b16 %v954
        %v1035 = vunpack.c.l.b16 %v955
        %v1036 = vunpack.c.l.b16 %v956
        %v1037 = vunpack.c.l.b16 %v957
        %v1038 = vunpack.c.l.b16 %v958
        %v1039 = vunpack.c.l.b16 %v959
        %v1040 = vunpack.c.l.b16 %v960
        %v1041 = vunpack.c.l.b16 %v961
        %v1042 = vunpack.c.l.b16 %v962
        %v1043 = vpack.c.b16 %v1028, %v1027
        %v1044 = vpack.c.b16 %v1030, %v1029
        %v1045 = vpack.c.b16 %v1032, %v1031
        %v1046 = vpack.c.b16 %v1034, %v1033
        %v1047 = vpack.c.b16 %v1036, %v1035
        %v1048 = vpack.c.b16 %v1038, %v1037
        %v1049 = vpack.c.b16 %v1040, %v1039
        %v1050 = vpack.c.b16 %v1042, %v1041
        %1059 = vmatpush.bf16.msra.mxu0 %v1050
        %1060 = vmatpush.bf16.msra.mxu0 %v1049
        %1061 = vmatpush.bf16.msra.mxu0 %v1048
        %1062 = vmatpush.bf16.msra.mxu0 %v1047
        %1063 = vmatpush.bf16.msra.mxu0 %v1046
        %1064 = vmatpush.bf16.msra.mxu0 %v1045
        %1065 = vmatpush.bf16.msra.mxu0 %v1044
        %1066 = vmatpush.bf16.msra.mxu0 %v1043
        %1067 = vmatmul.bf16.gmra.mxu0 %v995
        %v1068 = vpop.f32.mrf.mxu0
        %v1069 = vadd.f32 0.0, %v1068
        %v1070 = vpop.f32.mrf.mxu0
        %v1071 = vadd.f32 0.0, %v1070
        %1072 = vmatmul.bf16.gmra.mxu0 %v996
        %v1073 = vpop.f32.mrf.mxu0
        %v1074 = vadd.f32 0.0, %v1073
        %v1075 = vpop.f32.mrf.mxu0
        %v1076 = vadd.f32 0.0, %v1075
        %1077 = vmatmul.bf16.gmra.mxu0 %v997
        %v1078 = vpop.f32.mrf.mxu0
        %v1079 = vadd.f32 0.0, %v1078
        %v1080 = vpop.f32.mrf.mxu0
        %v1081 = vadd.f32 0.0, %v1080
        %1082 = vmatmul.bf16.gmra.mxu0 %v998
        %v1083 = vpop.f32.mrf.mxu0
        %v1084 = vadd.f32 0.0, %v1083
        %v1085 = vpop.f32.mrf.mxu0
        %v1086 = vadd.f32 0.0, %v1085
        %1087 = vmatmul.bf16.gmra.mxu0 %v999
        %v1088 = vpop.f32.mrf.mxu0
        %v1089 = vadd.f32 0.0, %v1088
        %v1090 = vpop.f32.mrf.mxu0
        %v1091 = vadd.f32 0.0, %v1090
        %1092 = vmatmul.bf16.gmra.mxu0 %v1000
        %v1093 = vpop.f32.mrf.mxu0
        %v1094 = vadd.f32 0.0, %v1093
        %v1095 = vpop.f32.mrf.mxu0
        %v1096 = vadd.f32 0.0, %v1095
        %1097 = vmatmul.bf16.gmra.mxu0 %v1001
        %v1098 = vpop.f32.mrf.mxu0
        %v1099 = vadd.f32 0.0, %v1098
        %v1100 = vpop.f32.mrf.mxu0
        %v1101 = vadd.f32 0.0, %v1100
        %1102 = vmatmul.bf16.gmra.mxu0 %v1002
        %v1103 = vpop.f32.mrf.mxu0
        %v1104 = vadd.f32 0.0, %v1103
        %v1105 = vpop.f32.mrf.mxu0
        %v1106 = vadd.f32 0.0, %v1105
        %1107 = vdwg.mxu0
        %v1108 = vadd.f32 %v914, %v1069
        %v1109 = vadd.f32 %v915, %v1071
        %v1110 = vadd.f32 %v916, %v1074
        %v1111 = vadd.f32 %v917, %v1076
        %v1112 = vadd.f32 %v918, %v1079
        %v1113 = vadd.f32 %v919, %v1081
        %v1114 = vadd.f32 %v920, %v1084
        %v1115 = vadd.f32 %v921, %v1086
        %v1116 = vadd.f32 %v922, %v1089
        %v1117 = vadd.f32 %v923, %v1091
        %v1118 = vadd.f32 %v924, %v1094
        %v1119 = vadd.f32 %v925, %v1096
        %v1120 = vadd.f32 %v926, %v1099
        %v1121 = vadd.f32 %v927, %v1101
        %v1122 = vadd.f32 %v928, %v1104
        %v1123 = vadd.f32 %v929, %v1106
        %v1124 = vld [vmem:[%s333 + $0x8] sm:$0xf]
        %v1125 = vld [vmem:[%s333 + $0xc] sm:$0xf]
        %v1126 = vld [vmem:[%s333 + $0x10] sm:$0xf]
        %v1127 = vld [vmem:[%s333 + $0x14] sm:$0xf]
        %v1128 = vld [vmem:[%s333 + $0x18] sm:$0xf]
        %v1129 = vld [vmem:[%s333 + $0x1c] sm:$0xf]
        %v1130 = vld [vmem:[%s333 + $0x20] sm:$0xf]
        %v1131 = vld [vmem:[%s333 + $0x24] sm:$0xf]
        %v1132 = vld [vmem:[%s333 + $0x28] sm:$0xf]
        %v1133 = vld [vmem:[%s333 + $0x2c] sm:$0xf]
        %v1134 = vld [vmem:[%s333 + $0x30] sm:$0xf]
        %v1135 = vld [vmem:[%s333 + $0x34] sm:$0xf]
        %v1136 = vld [vmem:[%s333 + $0x38] sm:$0xf]
        %v1137 = vld [vmem:[%s333 + $0x3c] sm:$0xf]
        %v1138 = vld [vmem:[%s333 + $0x40] sm:$0xf]
        %v1139 = vld [vmem:[%s333 + $0x44] sm:$0xf]
        %v1140 = vld [vmem:[%s333 + $0x48] sm:$0x1]
        %s1141 = scalar_lea.vmem [#allocation8], 256
        %v1142 = vld [vmem:[%s1141] sm:$0xf]
        %v1143 = vld [vmem:[%s1141 + $0x4] sm:$0xf]
        %v1144 = vld [vmem:[%s1141 + $0x8] sm:$0xf]
        %v1145 = vld [vmem:[%s1141 + $0xc] sm:$0xf]
        %v1146 = vld [vmem:[%s1141 + $0x10] sm:$0xf]
        %v1147 = vld [vmem:[%s1141 + $0x14] sm:$0xf]
        %v1148 = vld [vmem:[%s1141 + $0x18] sm:$0xf]
        %v1149 = vld [vmem:[%s1141 + $0x1c] sm:$0xf]
        %v1150 = vld [vmem:[%s1141 + $0x20] sm:$0xf]
        %v1151 = vld [vmem:[%s1141 + $0x24] sm:$0xf]
        %v1152 = vld [vmem:[%s1141 + $0x28] sm:$0xf]
        %v1153 = vld [vmem:[%s1141 + $0x2c] sm:$0xf]
        %v1154 = vld [vmem:[%s1141 + $0x30] sm:$0xf]
        %v1155 = vld [vmem:[%s1141 + $0x34] sm:$0xf]
        %v1156 = vld [vmem:[%s1141 + $0x38] sm:$0xf]
        %v1157 = vld [vmem:[%s1141 + $0x3c] sm:$0xf]
        %v1175 = vunpack.c.l.b16 %v1124
        %v1176 = vunpack.c.l.b16 %v1125
        %v1177 = vunpack.c.l.b16 %v1126
        %v1178 = vunpack.c.l.b16 %v1127
        %v1179 = vunpack.c.l.b16 %v1128
        %v1180 = vunpack.c.l.b16 %v1129
        %v1181 = vunpack.c.l.b16 %v1130
        %v1182 = vunpack.c.l.b16 %v1131
        %v1183 = vunpack.c.l.b16 %v1132
        %v1184 = vunpack.c.l.b16 %v1133
        %v1185 = vunpack.c.l.b16 %v1134
        %v1186 = vunpack.c.l.b16 %v1135
        %v1187 = vunpack.c.l.b16 %v1136
        %v1188 = vunpack.c.l.b16 %v1137
        %v1189 = vunpack.c.l.b16 %v1138
        %v1190 = vunpack.c.l.b16 %v1139
        %v1191 = vunpack.c.l.b16 %v1140
        %v1192 = vpack.c.b16 %v1176, %v1175
        %v1193 = vpack.c.b16 %v1178, %v1177
        %v1194 = vpack.c.b16 %v1180, %v1179
        %v1195 = vpack.c.b16 %v1182, %v1181
        %v1196 = vpack.c.b16 %v1184, %v1183
        %v1197 = vpack.c.b16 %v1186, %v1185
        %v1198 = vpack.c.b16 %v1188, %v1187
        %v1199 = vpack.c.b16 %v1190, %v1189
        %v1200 = vpack.c.b16 %v1191, %v1191
        %v1202 = vshrl.u32 %v1192, 16
        %v1204 = vshll.u32 %v1192, 16
        %v1206 = vrot.slane %v1204, 1
        %v1207 = vor.u32 %v1202, %v1206
        %v1209 = vshll.u32 %v1193, 16
        %v1211 = vrot.slane %v1209, 1
        %v1212 = vsel %vm491, %v1207, %v1211
        %v1213 = vshrl.u32 %v1193, 16
        %v1215 = vor.u32 %v1213, %v1211
        %v1217 = vshll.u32 %v1194, 16
        %v1219 = vrot.slane %v1217, 1
        %v1220 = vsel %vm491, %v1215, %v1219
        %v1221 = vshrl.u32 %v1194, 16
        %v1223 = vor.u32 %v1221, %v1219
        %v1225 = vshll.u32 %v1195, 16
        %v1227 = vrot.slane %v1225, 1
        %v1228 = vsel %vm491, %v1223, %v1227
        %v1229 = vshrl.u32 %v1195, 16
        %v1231 = vor.u32 %v1229, %v1227
        %v1233 = vshll.u32 %v1196, 16
        %v1235 = vrot.slane %v1233, 1
        %v1236 = vsel %vm491, %v1231, %v1235
        %v1237 = vshrl.u32 %v1196, 16
        %v1239 = vor.u32 %v1237, %v1235
        %v1241 = vshll.u32 %v1197, 16
        %v1243 = vrot.slane %v1241, 1
        %v1244 = vsel %vm491, %v1239, %v1243
        %v1245 = vshrl.u32 %v1197, 16
        %v1247 = vor.u32 %v1245, %v1243
        %v1249 = vshll.u32 %v1198, 16
        %v1251 = vrot.slane %v1249, 1
        %v1252 = vsel %vm491, %v1247, %v1251
        %v1253 = vshrl.u32 %v1198, 16
        %v1255 = vor.u32 %v1253, %v1251
        %v1257 = vshll.u32 %v1199, 16
        %v1259 = vrot.slane %v1257, 1
        %v1260 = vsel %vm491, %v1255, %v1259
        %v1261 = vshrl.u32 %v1199, 16
        %v1263 = vor.u32 %v1261, %v1259
        %v1265 = vshll.u32 %v1200, 16
        %v1267 = vrot.slane %v1265, 1
        %v1268 = vsel %vm491, %v1263, %v1267
        %v1293 = vunpack.c.l.b16 %v1142
        %v1294 = vunpack.c.l.b16 %v1143
        %v1295 = vunpack.c.l.b16 %v1144
        %v1296 = vunpack.c.l.b16 %v1145
        %v1297 = vunpack.c.l.b16 %v1146
        %v1298 = vunpack.c.l.b16 %v1147
        %v1299 = vunpack.c.l.b16 %v1148
        %v1300 = vunpack.c.l.b16 %v1149
        %v1301 = vunpack.c.l.b16 %v1150
        %v1302 = vunpack.c.l.b16 %v1151
        %v1303 = vunpack.c.l.b16 %v1152
        %v1304 = vunpack.c.l.b16 %v1153
        %v1305 = vunpack.c.l.b16 %v1154
        %v1306 = vunpack.c.l.b16 %v1155
        %v1307 = vunpack.c.l.b16 %v1156
        %v1308 = vunpack.c.l.b16 %v1157
        %v1309 = vpack.c.b16 %v1294, %v1293
        %v1310 = vpack.c.b16 %v1296, %v1295
        %v1311 = vpack.c.b16 %v1298, %v1297
        %v1312 = vpack.c.b16 %v1300, %v1299
        %v1313 = vpack.c.b16 %v1302, %v1301
        %v1314 = vpack.c.b16 %v1304, %v1303
        %v1315 = vpack.c.b16 %v1306, %v1305
        %v1316 = vpack.c.b16 %v1308, %v1307
        %1325 = vmatpush.bf16.msra.mxu0 %v1316
        %1326 = vmatpush.bf16.msra.mxu0 %v1315
        %1327 = vmatpush.bf16.msra.mxu0 %v1314
        %1328 = vmatpush.bf16.msra.mxu0 %v1313
        %1329 = vmatpush.bf16.msra.mxu0 %v1312
        %1330 = vmatpush.bf16.msra.mxu0 %v1311
        %1331 = vmatpush.bf16.msra.mxu0 %v1310
        %1332 = vmatpush.bf16.msra.mxu0 %v1309
        %1333 = vmatmul.bf16.gmra.mxu0 %v1212
        %v1334 = vpop.f32.mrf.mxu0
        %v1335 = vadd.f32 0.0, %v1334
        %v1336 = vpop.f32.mrf.mxu0
        %v1337 = vadd.f32 0.0, %v1336
        %1338 = vmatmul.bf16.gmra.mxu0 %v1220
        %v1339 = vpop.f32.mrf.mxu0
        %v1340 = vadd.f32 0.0, %v1339
        %v1341 = vpop.f32.mrf.mxu0
        %v1342 = vadd.f32 0.0, %v1341
        %1343 = vmatmul.bf16.gmra.mxu0 %v1228
        %v1344 = vpop.f32.mrf.mxu0
        %v1345 = vadd.f32 0.0, %v1344
        %v1346 = vpop.f32.mrf.mxu0
        %v1347 = vadd.f32 0.0, %v1346
        %1348 = vmatmul.bf16.gmra.mxu0 %v1236
        %v1349 = vpop.f32.mrf.mxu0
        %v1350 = vadd.f32 0.0, %v1349
        %v1351 = vpop.f32.mrf.mxu0
        %v1352 = vadd.f32 0.0, %v1351
        %1353 = vmatmul.bf16.gmra.mxu0 %v1244
        %v1354 = vpop.f32.mrf.mxu0
        %v1355 = vadd.f32 0.0, %v1354
        %v1356 = vpop.f32.mrf.mxu0
        %v1357 = vadd.f32 0.0, %v1356
        %1358 = vmatmul.bf16.gmra.mxu0 %v1252
        %v1359 = vpop.f32.mrf.mxu0
        %v1360 = vadd.f32 0.0, %v1359
        %v1361 = vpop.f32.mrf.mxu0
        %v1362 = vadd.f32 0.0, %v1361
        %1363 = vmatmul.bf16.gmra.mxu0 %v1260
        %v1364 = vpop.f32.mrf.mxu0
        %v1365 = vadd.f32 0.0, %v1364
        %v1366 = vpop.f32.mrf.mxu0
        %v1367 = vadd.f32 0.0, %v1366
        %1368 = vmatmul.bf16.gmra.mxu0 %v1268
        %v1369 = vpop.f32.mrf.mxu0
        %v1370 = vadd.f32 0.0, %v1369
        %v1371 = vpop.f32.mrf.mxu0
        %v1372 = vadd.f32 0.0, %v1371
        %1373 = vdwg.mxu0
        %v1374 = vadd.f32 %v1108, %v1335
        %v1375 = vadd.f32 %v1109, %v1337
        %v1376 = vadd.f32 %v1110, %v1340
        %v1377 = vadd.f32 %v1111, %v1342
        %v1378 = vadd.f32 %v1112, %v1345
        %v1379 = vadd.f32 %v1113, %v1347
        %v1380 = vadd.f32 %v1114, %v1350
        %v1381 = vadd.f32 %v1115, %v1352
        %v1382 = vadd.f32 %v1116, %v1355
        %v1383 = vadd.f32 %v1117, %v1357
        %v1384 = vadd.f32 %v1118, %v1360
        %v1385 = vadd.f32 %v1119, %v1362
        %v1386 = vadd.f32 %v1120, %v1365
        %v1387 = vadd.f32 %v1121, %v1367
        %v1388 = vadd.f32 %v1122, %v1370
        %v1389 = vadd.f32 %v1123, %v1372
        %v1390 = vld [vmem:[%s333 + $0x8] sm:$0xe]
        %s1391 = scalar_lea.vmem [#allocation8], 320
        %v1392 = vld [vmem:[%s1391] sm:$0xf]
        %v1393 = vld [vmem:[%s1391 + $0x4] sm:$0xf]
        %v1394 = vld [vmem:[%s1391 + $0x8] sm:$0xf]
        %v1395 = vld [vmem:[%s1391 + $0xc] sm:$0xf]
        %v1396 = vld [vmem:[%s1391 + $0x10] sm:$0xf]
        %v1397 = vld [vmem:[%s1391 + $0x14] sm:$0xf]
        %v1398 = vld [vmem:[%s1391 + $0x18] sm:$0xf]
        %v1399 = vld [vmem:[%s1391 + $0x1c] sm:$0xf]
        %v1400 = vld [vmem:[%s1391 + $0x20] sm:$0xf]
        %v1401 = vld [vmem:[%s1391 + $0x24] sm:$0xf]
        %v1402 = vld [vmem:[%s1391 + $0x28] sm:$0xf]
        %v1403 = vld [vmem:[%s1391 + $0x2c] sm:$0xf]
        %v1404 = vld [vmem:[%s1391 + $0x30] sm:$0xf]
        %v1405 = vld [vmem:[%s1391 + $0x34] sm:$0xf]
        %v1406 = vld [vmem:[%s1391 + $0x38] sm:$0xf]
        %v1407 = vld [vmem:[%s1391 + $0x3c] sm:$0xf]
        %v1409 = vunpack.c.l.b16 %v1390
        %v1410 = vpack.c.b16 %v1176, %v1409
        %v1411 = vrot.slane %v1410, 1
        %v1412 = vrot.slane %v1193, 1
        %v1413 = vsel %vm791, %v1411, %v1412
        %v1414 = vrot.slane %v1194, 1
        %v1415 = vsel %vm791, %v1412, %v1414
        %v1416 = vrot.slane %v1195, 1
        %v1417 = vsel %vm791, %v1414, %v1416
        %v1418 = vrot.slane %v1196, 1
        %v1419 = vsel %vm791, %v1416, %v1418
        %v1420 = vrot.slane %v1197, 1
        %v1421 = vsel %vm791, %v1418, %v1420
        %v1422 = vrot.slane %v1198, 1
        %v1423 = vsel %vm791, %v1420, %v1422
        %v1424 = vrot.slane %v1199, 1
        %v1425 = vsel %vm791, %v1422, %v1424
        %v1426 = vrot.slane %v1200, 1
        %v1427 = vsel %vm791, %v1424, %v1426
        %v1452 = vunpack.c.l.b16 %v1392
        %v1453 = vunpack.c.l.b16 %v1393
        %v1454 = vunpack.c.l.b16 %v1394
        %v1455 = vunpack.c.l.b16 %v1395
        %v1456 = vunpack.c.l.b16 %v1396
        %v1457 = vunpack.c.l.b16 %v1397
        %v1458 = vunpack.c.l.b16 %v1398
        %v1459 = vunpack.c.l.b16 %v1399
        %v1460 = vunpack.c.l.b16 %v1400
        %v1461 = vunpack.c.l.b16 %v1401
        %v1462 = vunpack.c.l.b16 %v1402
        %v1463 = vunpack.c.l.b16 %v1403
        %v1464 = vunpack.c.l.b16 %v1404
        %v1465 = vunpack.c.l.b16 %v1405
        %v1466 = vunpack.c.l.b16 %v1406
        %v1467 = vunpack.c.l.b16 %v1407
        %v1468 = vpack.c.b16 %v1453, %v1452
        %v1469 = vpack.c.b16 %v1455, %v1454
        %v1470 = vpack.c.b16 %v1457, %v1456
        %v1471 = vpack.c.b16 %v1459, %v1458
        %v1472 = vpack.c.b16 %v1461, %v1460
        %v1473 = vpack.c.b16 %v1463, %v1462
        %v1474 = vpack.c.b16 %v1465, %v1464
        %v1475 = vpack.c.b16 %v1467, %v1466
        %1484 = vmatpush.bf16.msra.mxu0 %v1475
        %1485 = vmatpush.bf16.msra.mxu0 %v1474
        %1486 = vmatpush.bf16.msra.mxu0 %v1473
        %1487 = vmatpush.bf16.msra.mxu0 %v1472
        %1488 = vmatpush.bf16.msra.mxu0 %v1471
        %1489 = vmatpush.bf16.msra.mxu0 %v1470
        %1490 = vmatpush.bf16.msra.mxu0 %v1469
        %1491 = vmatpush.bf16.msra.mxu0 %v1468
        %1492 = vmatmul.bf16.gmra.mxu0 %v1413
        %v1493 = vpop.f32.mrf.mxu0
        %v1494 = vadd.f32 0.0, %v1493
        %v1495 = vpop.f32.mrf.mxu0
        %v1496 = vadd.f32 0.0, %v1495
        %1497 = vmatmul.bf16.gmra.mxu0 %v1415
        %v1498 = vpop.f32.mrf.mxu0
        %v1499 = vadd.f32 0.0, %v1498
        %v1500 = vpop.f32.mrf.mxu0
        %v1501 = vadd.f32 0.0, %v1500
        %1502 = vmatmul.bf16.gmra.mxu0 %v1417
        %v1503 = vpop.f32.mrf.mxu0
        %v1504 = vadd.f32 0.0, %v1503
        %v1505 = vpop.f32.mrf.mxu0
        %v1506 = vadd.f32 0.0, %v1505
        %1507 = vmatmul.bf16.gmra.mxu0 %v1419
        %v1508 = vpop.f32.mrf.mxu0
        %v1509 = vadd.f32 0.0, %v1508
        %v1510 = vpop.f32.mrf.mxu0
        %v1511 = vadd.f32 0.0, %v1510
        %1512 = vmatmul.bf16.gmra.mxu0 %v1421
        %v1513 = vpop.f32.mrf.mxu0
        %v1514 = vadd.f32 0.0, %v1513
        %v1515 = vpop.f32.mrf.mxu0
        %v1516 = vadd.f32 0.0, %v1515
        %1517 = vmatmul.bf16.gmra.mxu0 %v1423
        %v1518 = vpop.f32.mrf.mxu0
        %v1519 = vadd.f32 0.0, %v1518
        %v1520 = vpop.f32.mrf.mxu0
        %v1521 = vadd.f32 0.0, %v1520
        %1522 = vmatmul.bf16.gmra.mxu0 %v1425
        %v1523 = vpop.f32.mrf.mxu0
        %v1524 = vadd.f32 0.0, %v1523
        %v1525 = vpop.f32.mrf.mxu0
        %v1526 = vadd.f32 0.0, %v1525
        %1527 = vmatmul.bf16.gmra.mxu0 %v1427
        %v1528 = vpop.f32.mrf.mxu0
        %v1529 = vadd.f32 0.0, %v1528
        %v1530 = vpop.f32.mrf.mxu0
        %v1531 = vadd.f32 0.0, %v1530
        %1532 = vdwg.mxu0
        %v1533 = vadd.f32 %v1374, %v1494
        %v1534 = vadd.f32 %v1375, %v1496
        %v1535 = vadd.f32 %v1376, %v1499
        %v1536 = vadd.f32 %v1377, %v1501
        %v1537 = vadd.f32 %v1378, %v1504
        %v1538 = vadd.f32 %v1379, %v1506
        %v1539 = vadd.f32 %v1380, %v1509
        %v1540 = vadd.f32 %v1381, %v1511
        %v1541 = vadd.f32 %v1382, %v1514
        %v1542 = vadd.f32 %v1383, %v1516
        %v1543 = vadd.f32 %v1384, %v1519
        %v1544 = vadd.f32 %v1385, %v1521
        %v1545 = vadd.f32 %v1386, %v1524
        %v1546 = vadd.f32 %v1387, %v1526
        %v1547 = vadd.f32 %v1388, %v1529
        %v1548 = vadd.f32 %v1389, %v1531
        %v1549 = vld [vmem:[%s333 + $0x10] sm:$0xf]
        %v1550 = vld [vmem:[%s333 + $0x14] sm:$0xf]
        %v1551 = vld [vmem:[%s333 + $0x18] sm:$0xf]
        %v1552 = vld [vmem:[%s333 + $0x1c] sm:$0xf]
        %v1553 = vld [vmem:[%s333 + $0x20] sm:$0xf]
        %v1554 = vld [vmem:[%s333 + $0x24] sm:$0xf]
        %v1555 = vld [vmem:[%s333 + $0x28] sm:$0xf]
        %v1556 = vld [vmem:[%s333 + $0x2c] sm:$0xf]
        %v1557 = vld [vmem:[%s333 + $0x30] sm:$0xf]
        %v1558 = vld [vmem:[%s333 + $0x34] sm:$0xf]
        %v1559 = vld [vmem:[%s333 + $0x38] sm:$0xf]
        %v1560 = vld [vmem:[%s333 + $0x3c] sm:$0xf]
        %v1561 = vld [vmem:[%s333 + $0x40] sm:$0xf]
        %v1562 = vld [vmem:[%s333 + $0x44] sm:$0xf]
        %v1563 = vld [vmem:[%s333 + $0x48] sm:$0xf]
        %v1564 = vld [vmem:[%s333 + $0x4c] sm:$0xf]
        %s1565 = scalar_lea.vmem [#allocation8], 384
        %v1566 = vld [vmem:[%s1565] sm:$0xf]
        %v1567 = vld [vmem:[%s1565 + $0x4] sm:$0xf]
        %v1568 = vld [vmem:[%s1565 + $0x8] sm:$0xf]
        %v1569 = vld [vmem:[%s1565 + $0xc] sm:$0xf]
        %v1570 = vld [vmem:[%s1565 + $0x10] sm:$0xf]
        %v1571 = vld [vmem:[%s1565 + $0x14] sm:$0xf]
        %v1572 = vld [vmem:[%s1565 + $0x18] sm:$0xf]
        %v1573 = vld [vmem:[%s1565 + $0x1c] sm:$0xf]
        %v1574 = vld [vmem:[%s1565 + $0x20] sm:$0xf]
        %v1575 = vld [vmem:[%s1565 + $0x24] sm:$0xf]
        %v1576 = vld [vmem:[%s1565 + $0x28] sm:$0xf]
        %v1577 = vld [vmem:[%s1565 + $0x2c] sm:$0xf]
        %v1578 = vld [vmem:[%s1565 + $0x30] sm:$0xf]
        %v1579 = vld [vmem:[%s1565 + $0x34] sm:$0xf]
        %v1580 = vld [vmem:[%s1565 + $0x38] sm:$0xf]
        %v1581 = vld [vmem:[%s1565 + $0x3c] sm:$0xf]
        %v1598 = vunpack.c.l.b16 %v1549
        %v1599 = vunpack.c.l.b16 %v1550
        %v1600 = vunpack.c.l.b16 %v1551
        %v1601 = vunpack.c.l.b16 %v1552
        %v1602 = vunpack.c.l.b16 %v1553
        %v1603 = vunpack.c.l.b16 %v1554
        %v1604 = vunpack.c.l.b16 %v1555
        %v1605 = vunpack.c.l.b16 %v1556
        %v1606 = vunpack.c.l.b16 %v1557
        %v1607 = vunpack.c.l.b16 %v1558
        %v1608 = vunpack.c.l.b16 %v1559
        %v1609 = vunpack.c.l.b16 %v1560
        %v1610 = vunpack.c.l.b16 %v1561
        %v1611 = vunpack.c.l.b16 %v1562
        %v1612 = vunpack.c.l.b16 %v1563
        %v1613 = vunpack.c.l.b16 %v1564
        %v1614 = vpack.c.b16 %v1599, %v1598
        %v1615 = vpack.c.b16 %v1601, %v1600
        %v1616 = vpack.c.b16 %v1603, %v1602
        %v1617 = vpack.c.b16 %v1605, %v1604
        %v1618 = vpack.c.b16 %v1607, %v1606
        %v1619 = vpack.c.b16 %v1609, %v1608
        %v1620 = vpack.c.b16 %v1611, %v1610
        %v1621 = vpack.c.b16 %v1613, %v1612
        %v1646 = vunpack.c.l.b16 %v1566
        %v1647 = vunpack.c.l.b16 %v1567
        %v1648 = vunpack.c.l.b16 %v1568
        %v1649 = vunpack.c.l.b16 %v1569
        %v1650 = vunpack.c.l.b16 %v1570
        %v1651 = vunpack.c.l.b16 %v1571
        %v1652 = vunpack.c.l.b16 %v1572
        %v1653 = vunpack.c.l.b16 %v1573
        %v1654 = vunpack.c.l.b16 %v1574
        %v1655 = vunpack.c.l.b16 %v1575
        %v1656 = vunpack.c.l.b16 %v1576
        %v1657 = vunpack.c.l.b16 %v1577
        %v1658 = vunpack.c.l.b16 %v1578
        %v1659 = vunpack.c.l.b16 %v1579
        %v1660 = vunpack.c.l.b16 %v1580
        %v1661 = vunpack.c.l.b16 %v1581
        %v1662 = vpack.c.b16 %v1647, %v1646
        %v1663 = vpack.c.b16 %v1649, %v1648
        %v1664 = vpack.c.b16 %v1651, %v1650
        %v1665 = vpack.c.b16 %v1653, %v1652
        %v1666 = vpack.c.b16 %v1655, %v1654
        %v1667 = vpack.c.b16 %v1657, %v1656
        %v1668 = vpack.c.b16 %v1659, %v1658
        %v1669 = vpack.c.b16 %v1661, %v1660
        %1678 = vmatpush.bf16.msra.mxu0 %v1669
        %1679 = vmatpush.bf16.msra.mxu0 %v1668
        %1680 = vmatpush.bf16.msra.mxu0 %v1667
        %1681 = vmatpush.bf16.msra.mxu0 %v1666
        %1682 = vmatpush.bf16.msra.mxu0 %v1665
        %1683 = vmatpush.bf16.msra.mxu0 %v1664
        %1684 = vmatpush.bf16.msra.mxu0 %v1663
        %1685 = vmatpush.bf16.msra.mxu0 %v1662
        %1686 = vmatmul.bf16.gmra.mxu0 %v1614
        %v1687 = vpop.f32.mrf.mxu0
        %v1688 = vadd.f32 0.0, %v1687
        %v1689 = vpop.f32.mrf.mxu0
        %v1690 = vadd.f32 0.0, %v1689
        %1691 = vmatmul.bf16.gmra.mxu0 %v1615
        %v1692 = vpop.f32.mrf.mxu0
        %v1693 = vadd.f32 0.0, %v1692
        %v1694 = vpop.f32.mrf.mxu0
        %v1695 = vadd.f32 0.0, %v1694
        %1696 = vmatmul.bf16.gmra.mxu0 %v1616
        %v1697 = vpop.f32.mrf.mxu0
        %v1698 = vadd.f32 0.0, %v1697
        %v1699 = vpop.f32.mrf.mxu0
        %v1700 = vadd.f32 0.0, %v1699
        %1701 = vmatmul.bf16.gmra.mxu0 %v1617
        %v1702 = vpop.f32.mrf.mxu0
        %v1703 = vadd.f32 0.0, %v1702
        %v1704 = vpop.f32.mrf.mxu0
        %v1705 = vadd.f32 0.0, %v1704
        %1706 = vmatmul.bf16.gmra.mxu0 %v1618
        %v1707 = vpop.f32.mrf.mxu0
        %v1708 = vadd.f32 0.0, %v1707
        %v1709 = vpop.f32.mrf.mxu0
        %v1710 = vadd.f32 0.0, %v1709
        %1711 = vmatmul.bf16.gmra.mxu0 %v1619
        %v1712 = vpop.f32.mrf.mxu0
        %v1713 = vadd.f32 0.0, %v1712
        %v1714 = vpop.f32.mrf.mxu0
        %v1715 = vadd.f32 0.0, %v1714
        %1716 = vmatmul.bf16.gmra.mxu0 %v1620
        %v1717 = vpop.f32.mrf.mxu0
        %v1718 = vadd.f32 0.0, %v1717
        %v1719 = vpop.f32.mrf.mxu0
        %v1720 = vadd.f32 0.0, %v1719
        %1721 = vmatmul.bf16.gmra.mxu0 %v1621
        %v1722 = vpop.f32.mrf.mxu0
        %v1723 = vadd.f32 0.0, %v1722
        %v1724 = vpop.f32.mrf.mxu0
        %v1725 = vadd.f32 0.0, %v1724
        %1726 = vdwg.mxu0
        %v1727 = vadd.f32 %v1533, %v1688
        %v1728 = vadd.f32 %v1534, %v1690
        %v1729 = vadd.f32 %v1535, %v1693
        %v1730 = vadd.f32 %v1536, %v1695
        %v1731 = vadd.f32 %v1537, %v1698
        %v1732 = vadd.f32 %v1538, %v1700
        %v1733 = vadd.f32 %v1539, %v1703
        %v1734 = vadd.f32 %v1540, %v1705
        %v1735 = vadd.f32 %v1541, %v1708
        %v1736 = vadd.f32 %v1542, %v1710
        %v1737 = vadd.f32 %v1543, %v1713
        %v1738 = vadd.f32 %v1544, %v1715
        %v1739 = vadd.f32 %v1545, %v1718
        %v1740 = vadd.f32 %v1546, %v1720
        %v1741 = vadd.f32 %v1547, %v1723
        %v1742 = vadd.f32 %v1548, %v1725
        %v1743 = vld [vmem:[%s333 + $0x10] sm:$0xf]
        %v1744 = vld [vmem:[%s333 + $0x14] sm:$0xf]
        %v1745 = vld [vmem:[%s333 + $0x18] sm:$0xf]
        %v1746 = vld [vmem:[%s333 + $0x1c] sm:$0xf]
        %v1747 = vld [vmem:[%s333 + $0x20] sm:$0xf]
        %v1748 = vld [vmem:[%s333 + $0x24] sm:$0xf]
        %v1749 = vld [vmem:[%s333 + $0x28] sm:$0xf]
        %v1750 = vld [vmem:[%s333 + $0x2c] sm:$0xf]
        %v1751 = vld [vmem:[%s333 + $0x30] sm:$0xf]
        %v1752 = vld [vmem:[%s333 + $0x34] sm:$0xf]
        %v1753 = vld [vmem:[%s333 + $0x38] sm:$0xf]
        %v1754 = vld [vmem:[%s333 + $0x3c] sm:$0xf]
        %v1755 = vld [vmem:[%s333 + $0x40] sm:$0xf]
        %v1756 = vld [vmem:[%s333 + $0x44] sm:$0xf]
        %v1757 = vld [vmem:[%s333 + $0x48] sm:$0xf]
        %v1758 = vld [vmem:[%s333 + $0x4c] sm:$0xf]
        %v1759 = vld [vmem:[%s333 + $0x50] sm:$0x1]
        %s1760 = scalar_lea.vmem [#allocation8], 448
        %v1761 = vld [vmem:[%s1760] sm:$0xf]
        %v1762 = vld [vmem:[%s1760 + $0x4] sm:$0xf]
        %v1763 = vld [vmem:[%s1760 + $0x8] sm:$0xf]
        %v1764 = vld [vmem:[%s1760 + $0xc] sm:$0xf]
        %v1765 = vld [vmem:[%s1760 + $0x10] sm:$0xf]
        %v1766 = vld [vmem:[%s1760 + $0x14] sm:$0xf]
        %v1767 = vld [vmem:[%s1760 + $0x18] sm:$0xf]
        %v1768 = vld [vmem:[%s1760 + $0x1c] sm:$0xf]
        %v1769 = vld [vmem:[%s1760 + $0x20] sm:$0xf]
        %v1770 = vld [vmem:[%s1760 + $0x24] sm:$0xf]
        %v1771 = vld [vmem:[%s1760 + $0x28] sm:$0xf]
        %v1772 = vld [vmem:[%s1760 + $0x2c] sm:$0xf]
        %v1773 = vld [vmem:[%s1760 + $0x30] sm:$0xf]
        %v1774 = vld [vmem:[%s1760 + $0x34] sm:$0xf]
        %v1775 = vld [vmem:[%s1760 + $0x38] sm:$0xf]
        %v1776 = vld [vmem:[%s1760 + $0x3c] sm:$0xf]
        %v1794 = vunpack.c.l.b16 %v1743
        %v1795 = vunpack.c.l.b16 %v1744
        %v1796 = vunpack.c.l.b16 %v1745
        %v1797 = vunpack.c.l.b16 %v1746
        %v1798 = vunpack.c.l.b16 %v1747
        %v1799 = vunpack.c.l.b16 %v1748
        %v1800 = vunpack.c.l.b16 %v1749
        %v1801 = vunpack.c.l.b16 %v1750
        %v1802 = vunpack.c.l.b16 %v1751
        %v1803 = vunpack.c.l.b16 %v1752
        %v1804 = vunpack.c.l.b16 %v1753
        %v1805 = vunpack.c.l.b16 %v1754
        %v1806 = vunpack.c.l.b16 %v1755
        %v1807 = vunpack.c.l.b16 %v1756
        %v1808 = vunpack.c.l.b16 %v1757
        %v1809 = vunpack.c.l.b16 %v1758
        %v1810 = vunpack.c.l.b16 %v1759
        %v1811 = vpack.c.b16 %v1795, %v1794
        %v1812 = vpack.c.b16 %v1797, %v1796
        %v1813 = vpack.c.b16 %v1799, %v1798
        %v1814 = vpack.c.b16 %v1801, %v1800
        %v1815 = vpack.c.b16 %v1803, %v1802
        %v1816 = vpack.c.b16 %v1805, %v1804
        %v1817 = vpack.c.b16 %v1807, %v1806
        %v1818 = vpack.c.b16 %v1809, %v1808
        %v1819 = vpack.c.b16 %v1810, %v1810
        %v1821 = vshrl.u32 %v1811, 16
        %v1823 = vshll.u32 %v1811, 16
        %v1825 = vrot.slane %v1823, 1
        %v1826 = vor.u32 %v1821, %v1825
        %v1828 = vshll.u32 %v1812, 16
        %v1830 = vrot.slane %v1828, 1
        %v1831 = vsel %vm491, %v1826, %v1830
        %v1832 = vshrl.u32 %v1812, 16
        %v1834 = vor.u32 %v1832, %v1830
        %v1836 = vshll.u32 %v1813, 16
        %v1838 = vrot.slane %v1836, 1
        %v1839 = vsel %vm491, %v1834, %v1838
        %v1840 = vshrl.u32 %v1813, 16
        %v1842 = vor.u32 %v1840, %v1838
        %v1844 = vshll.u32 %v1814, 16
        %v1846 = vrot.slane %v1844, 1
        %v1847 = vsel %vm491, %v1842, %v1846
        %v1848 = vshrl.u32 %v1814, 16
        %v1850 = vor.u32 %v1848, %v1846
        %v1852 = vshll.u32 %v1815, 16
        %v1854 = vrot.slane %v1852, 1
        %v1855 = vsel %vm491, %v1850, %v1854
        %v1856 = vshrl.u32 %v1815, 16
        %v1858 = vor.u32 %v1856, %v1854
        %v1860 = vshll.u32 %v1816, 16
        %v1862 = vrot.slane %v1860, 1
        %v1863 = vsel %vm491, %v1858, %v1862
        %v1864 = vshrl.u32 %v1816, 16
        %v1866 = vor.u32 %v1864, %v1862
        %v1868 = vshll.u32 %v1817, 16
        %v1870 = vrot.slane %v1868, 1
        %v1871 = vsel %vm491, %v1866, %v1870
        %v1872 = vshrl.u32 %v1817, 16
        %v1874 = vor.u32 %v1872, %v1870
        %v1876 = vshll.u32 %v1818, 16
        %v1878 = vrot.slane %v1876, 1
        %v1879 = vsel %vm491, %v1874, %v1878
        %v1880 = vshrl.u32 %v1818, 16
        %v1882 = vor.u32 %v1880, %v1878
        %v1884 = vshll.u32 %v1819, 16
        %v1886 = vrot.slane %v1884, 1
        %v1887 = vsel %vm491, %v1882, %v1886
        %v1912 = vunpack.c.l.b16 %v1761
        %v1913 = vunpack.c.l.b16 %v1762
        %v1914 = vunpack.c.l.b16 %v1763
        %v1915 = vunpack.c.l.b16 %v1764
        %v1916 = vunpack.c.l.b16 %v1765
        %v1917 = vunpack.c.l.b16 %v1766
        %v1918 = vunpack.c.l.b16 %v1767
        %v1919 = vunpack.c.l.b16 %v1768
        %v1920 = vunpack.c.l.b16 %v1769
        %v1921 = vunpack.c.l.b16 %v1770
        %v1922 = vunpack.c.l.b16 %v1771
        %v1923 = vunpack.c.l.b16 %v1772
        %v1924 = vunpack.c.l.b16 %v1773
        %v1925 = vunpack.c.l.b16 %v1774
        %v1926 = vunpack.c.l.b16 %v1775
        %v1927 = vunpack.c.l.b16 %v1776
        %v1928 = vpack.c.b16 %v1913, %v1912
        %v1929 = vpack.c.b16 %v1915, %v1914
        %v1930 = vpack.c.b16 %v1917, %v1916
        %v1931 = vpack.c.b16 %v1919, %v1918
        %v1932 = vpack.c.b16 %v1921, %v1920
        %v1933 = vpack.c.b16 %v1923, %v1922
        %v1934 = vpack.c.b16 %v1925, %v1924
        %v1935 = vpack.c.b16 %v1927, %v1926
        %1944 = vmatpush.bf16.msra.mxu0 %v1935
        %1945 = vmatpush.bf16.msra.mxu0 %v1934
        %1946 = vmatpush.bf16.msra.mxu0 %v1933
        %1947 = vmatpush.bf16.msra.mxu0 %v1932
        %1948 = vmatpush.bf16.msra.mxu0 %v1931
        %1949 = vmatpush.bf16.msra.mxu0 %v1930
        %1950 = vmatpush.bf16.msra.mxu0 %v1929
        %1951 = vmatpush.bf16.msra.mxu0 %v1928
        %1952 = vmatmul.bf16.gmra.mxu0 %v1831
        %v1953 = vpop.f32.mrf.mxu0
        %v1954 = vadd.f32 0.0, %v1953
        %v1955 = vpop.f32.mrf.mxu0
        %v1956 = vadd.f32 0.0, %v1955
        %1957 = vmatmul.bf16.gmra.mxu0 %v1839
        %v1958 = vpop.f32.mrf.mxu0
        %v1959 = vadd.f32 0.0, %v1958
        %v1960 = vpop.f32.mrf.mxu0
        %v1961 = vadd.f32 0.0, %v1960
        %1962 = vmatmul.bf16.gmra.mxu0 %v1847
        %v1963 = vpop.f32.mrf.mxu0
        %v1964 = vadd.f32 0.0, %v1963
        %v1965 = vpop.f32.mrf.mxu0
        %v1966 = vadd.f32 0.0, %v1965
        %1967 = vmatmul.bf16.gmra.mxu0 %v1855
        %v1968 = vpop.f32.mrf.mxu0
        %v1969 = vadd.f32 0.0, %v1968
        %v1970 = vpop.f32.mrf.mxu0
        %v1971 = vadd.f32 0.0, %v1970
        %1972 = vmatmul.bf16.gmra.mxu0 %v1863
        %v1973 = vpop.f32.mrf.mxu0
        %v1974 = vadd.f32 0.0, %v1973
        %v1975 = vpop.f32.mrf.mxu0
        %v1976 = vadd.f32 0.0, %v1975
        %1977 = vmatmul.bf16.gmra.mxu0 %v1871
        %v1978 = vpop.f32.mrf.mxu0
        %v1979 = vadd.f32 0.0, %v1978
        %v1980 = vpop.f32.mrf.mxu0
        %v1981 = vadd.f32 0.0, %v1980
        %1982 = vmatmul.bf16.gmra.mxu0 %v1879
        %v1983 = vpop.f32.mrf.mxu0
        %v1984 = vadd.f32 0.0, %v1983
        %v1985 = vpop.f32.mrf.mxu0
        %v1986 = vadd.f32 0.0, %v1985
        %1987 = vmatmul.bf16.gmra.mxu0 %v1887
        %v1988 = vpop.f32.mrf.mxu0
        %v1989 = vadd.f32 0.0, %v1988
        %v1990 = vpop.f32.mrf.mxu0
        %v1991 = vadd.f32 0.0, %v1990
        %1992 = vdwg.mxu0
        %v1993 = vadd.f32 %v1727, %v1954
        %v1994 = vadd.f32 %v1728, %v1956
        %v1995 = vadd.f32 %v1729, %v1959
        %v1996 = vadd.f32 %v1730, %v1961
        %v1997 = vadd.f32 %v1731, %v1964
        %v1998 = vadd.f32 %v1732, %v1966
        %v1999 = vadd.f32 %v1733, %v1969
        %v2000 = vadd.f32 %v1734, %v1971
        %v2001 = vadd.f32 %v1735, %v1974
        %v2002 = vadd.f32 %v1736, %v1976
        %v2003 = vadd.f32 %v1737, %v1979
        %v2004 = vadd.f32 %v1738, %v1981
        %v2005 = vadd.f32 %v1739, %v1984
        %v2006 = vadd.f32 %v1740, %v1986
        %v2007 = vadd.f32 %v1741, %v1989
        %v2008 = vadd.f32 %v1742, %v1991
        %v2009 = vld [vmem:[%s333 + $0x10] sm:$0xe]
        %s2010 = scalar_lea.vmem [#allocation8], 512
        %v2011 = vld [vmem:[%s2010] sm:$0xf]
        %v2012 = vld [vmem:[%s2010 + $0x4] sm:$0xf]
        %v2013 = vld [vmem:[%s2010 + $0x8] sm:$0xf]
        %v2014 = vld [vmem:[%s2010 + $0xc] sm:$0xf]
        %v2015 = vld [vmem:[%s2010 + $0x10] sm:$0xf]
        %v2016 = vld [vmem:[%s2010 + $0x14] sm:$0xf]
        %v2017 = vld [vmem:[%s2010 + $0x18] sm:$0xf]
        %v2018 = vld [vmem:[%s2010 + $0x1c] sm:$0xf]
        %v2019 = vld [vmem:[%s2010 + $0x20] sm:$0xf]
        %v2020 = vld [vmem:[%s2010 + $0x24] sm:$0xf]
        %v2021 = vld [vmem:[%s2010 + $0x28] sm:$0xf]
        %v2022 = vld [vmem:[%s2010 + $0x2c] sm:$0xf]
        %v2023 = vld [vmem:[%s2010 + $0x30] sm:$0xf]
        %v2024 = vld [vmem:[%s2010 + $0x34] sm:$0xf]
        %v2025 = vld [vmem:[%s2010 + $0x38] sm:$0xf]
        %v2026 = vld [vmem:[%s2010 + $0x3c] sm:$0xf]
        %v2028 = vunpack.c.l.b16 %v2009
        %v2029 = vpack.c.b16 %v1795, %v2028
        %v2030 = vrot.slane %v2029, 1
        %v2031 = vrot.slane %v1812, 1
        %v2032 = vsel %vm791, %v2030, %v2031
        %v2033 = vrot.slane %v1813, 1
        %v2034 = vsel %vm791, %v2031, %v2033
        %v2035 = vrot.slane %v1814, 1
        %v2036 = vsel %vm791, %v2033, %v2035
        %v2037 = vrot.slane %v1815, 1
        %v2038 = vsel %vm791, %v2035, %v2037
        %v2039 = vrot.slane %v1816, 1
        %v2040 = vsel %vm791, %v2037, %v2039
        %v2041 = vrot.slane %v1817, 1
        %v2042 = vsel %vm791, %v2039, %v2041
        %v2043 = vrot.slane %v1818, 1
        %v2044 = vsel %vm791, %v2041, %v2043
        %v2045 = vrot.slane %v1819, 1
        %v2046 = vsel %vm791, %v2043, %v2045
        %v2071 = vunpack.c.l.b16 %v2011
        %v2072 = vunpack.c.l.b16 %v2012
        %v2073 = vunpack.c.l.b16 %v2013
        %v2074 = vunpack.c.l.b16 %v2014
        %v2075 = vunpack.c.l.b16 %v2015
        %v2076 = vunpack.c.l.b16 %v2016
        %v2077 = vunpack.c.l.b16 %v2017
        %v2078 = vunpack.c.l.b16 %v2018
        %v2079 = vunpack.c.l.b16 %v2019
        %v2080 = vunpack.c.l.b16 %v2020
        %v2081 = vunpack.c.l.b16 %v2021
        %v2082 = vunpack.c.l.b16 %v2022
        %v2083 = vunpack.c.l.b16 %v2023
        %v2084 = vunpack.c.l.b16 %v2024
        %v2085 = vunpack.c.l.b16 %v2025
        %v2086 = vunpack.c.l.b16 %v2026
        %v2087 = vpack.c.b16 %v2072, %v2071
        %v2088 = vpack.c.b16 %v2074, %v2073
        %v2089 = vpack.c.b16 %v2076, %v2075
        %v2090 = vpack.c.b16 %v2078, %v2077
        %v2091 = vpack.c.b16 %v2080, %v2079
        %v2092 = vpack.c.b16 %v2082, %v2081
        %v2093 = vpack.c.b16 %v2084, %v2083
        %v2094 = vpack.c.b16 %v2086, %v2085
        %2103 = vmatpush.bf16.msra.mxu0 %v2094
        %2104 = vmatpush.bf16.msra.mxu0 %v2093
        %2105 = vmatpush.bf16.msra.mxu0 %v2092
        %2106 = vmatpush.bf16.msra.mxu0 %v2091
        %2107 = vmatpush.bf16.msra.mxu0 %v2090
        %2108 = vmatpush.bf16.msra.mxu0 %v2089
        %2109 = vmatpush.bf16.msra.mxu0 %v2088
        %2110 = vmatpush.bf16.msra.mxu0 %v2087
        %2111 = vmatmul.bf16.gmra.mxu0 %v2032
        %v2112 = vpop.f32.mrf.mxu0
        %v2113 = vadd.f32 0.0, %v2112
        %v2114 = vpop.f32.mrf.mxu0
        %v2115 = vadd.f32 0.0, %v2114
        %2116 = vmatmul.bf16.gmra.mxu0 %v2034
        %v2117 = vpop.f32.mrf.mxu0
        %v2118 = vadd.f32 0.0, %v2117
        %v2119 = vpop.f32.mrf.mxu0
        %v2120 = vadd.f32 0.0, %v2119
        %2121 = vmatmul.bf16.gmra.mxu0 %v2036
        %v2122 = vpop.f32.mrf.mxu0
        %v2123 = vadd.f32 0.0, %v2122
        %v2124 = vpop.f32.mrf.mxu0
        %v2125 = vadd.f32 0.0, %v2124
        %2126 = vmatmul.bf16.gmra.mxu0 %v2038
        %v2127 = vpop.f32.mrf.mxu0
        %v2128 = vadd.f32 0.0, %v2127
        %v2129 = vpop.f32.mrf.mxu0
        %v2130 = vadd.f32 0.0, %v2129
        %2131 = vmatmul.bf16.gmra.mxu0 %v2040
        %v2132 = vpop.f32.mrf.mxu0
        %v2133 = vadd.f32 0.0, %v2132
        %v2134 = vpop.f32.mrf.mxu0
        %v2135 = vadd.f32 0.0, %v2134
        %2136 = vmatmul.bf16.gmra.mxu0 %v2042
        %v2137 = vpop.f32.mrf.mxu0
        %v2138 = vadd.f32 0.0, %v2137
        %v2139 = vpop.f32.mrf.mxu0
        %v2140 = vadd.f32 0.0, %v2139
        %2141 = vmatmul.bf16.gmra.mxu0 %v2044
        %v2142 = vpop.f32.mrf.mxu0
        %v2143 = vadd.f32 0.0, %v2142
        %v2144 = vpop.f32.mrf.mxu0
        %v2145 = vadd.f32 0.0, %v2144
        %2146 = vmatmul.bf16.gmra.mxu0 %v2046
        %v2147 = vpop.f32.mrf.mxu0
        %v2148 = vadd.f32 0.0, %v2147
        %v2149 = vpop.f32.mrf.mxu0
        %v2150 = vadd.f32 0.0, %v2149
        %2151 = vdwg.mxu0
        %v2152 = vadd.f32 %v1993, %v2113
        %v2153 = vadd.f32 %v1994, %v2115
        %v2154 = vadd.f32 %v1995, %v2118
        %v2155 = vadd.f32 %v1996, %v2120
        %v2156 = vadd.f32 %v1997, %v2123
        %v2157 = vadd.f32 %v1998, %v2125
        %v2158 = vadd.f32 %v1999, %v2128
        %v2159 = vadd.f32 %v2000, %v2130
        %v2160 = vadd.f32 %v2001, %v2133
        %v2161 = vadd.f32 %v2002, %v2135
        %v2162 = vadd.f32 %v2003, %v2138
        %v2163 = vadd.f32 %v2004, %v2140
        %v2164 = vadd.f32 %v2005, %v2143
        %v2165 = vadd.f32 %v2006, %v2145
        %v2166 = vadd.f32 %v2007, %v2148
        %v2167 = vadd.f32 %v2008, %v2150
        %v2168 = vld [vmem:[%s343] sm:$0xf]
        %v2169 = vld [vmem:[%s343 + $0x4] sm:$0xf]
        %v2170 = vld [vmem:[%s343 + $0x8] sm:$0xf]
        %v2171 = vld [vmem:[%s343 + $0xc] sm:$0xf]
        %v2172 = vld [vmem:[%s343 + $0x10] sm:$0xf]
        %v2173 = vld [vmem:[%s343 + $0x14] sm:$0xf]
        %v2174 = vld [vmem:[%s343 + $0x18] sm:$0xf]
        %v2175 = vld [vmem:[%s343 + $0x1c] sm:$0xf]
        %v2176 = vld [vmem:[%s343 + $0x20] sm:$0xf]
        %v2177 = vld [vmem:[%s343 + $0x24] sm:$0xf]
        %v2178 = vld [vmem:[%s343 + $0x28] sm:$0xf]
        %v2179 = vld [vmem:[%s343 + $0x2c] sm:$0xf]
        %v2180 = vld [vmem:[%s343 + $0x30] sm:$0xf]
        %v2181 = vld [vmem:[%s343 + $0x34] sm:$0xf]
        %v2182 = vld [vmem:[%s343 + $0x38] sm:$0xf]
        %v2183 = vld [vmem:[%s343 + $0x3c] sm:$0xf]
        %s2184 = scalar_lea.vmem [#allocation8], 576
        %v2185 = vld [vmem:[%s2184] sm:$0xf]
        %v2186 = vld [vmem:[%s2184 + $0x4] sm:$0xf]
        %v2187 = vld [vmem:[%s2184 + $0x8] sm:$0xf]
        %v2188 = vld [vmem:[%s2184 + $0xc] sm:$0xf]
        %v2189 = vld [vmem:[%s2184 + $0x10] sm:$0xf]
        %v2190 = vld [vmem:[%s2184 + $0x14] sm:$0xf]
        %v2191 = vld [vmem:[%s2184 + $0x18] sm:$0xf]
        %v2192 = vld [vmem:[%s2184 + $0x1c] sm:$0xf]
        %v2193 = vld [vmem:[%s2184 + $0x20] sm:$0xf]
        %v2194 = vld [vmem:[%s2184 + $0x24] sm:$0xf]
        %v2195 = vld [vmem:[%s2184 + $0x28] sm:$0xf]
        %v2196 = vld [vmem:[%s2184 + $0x2c] sm:$0xf]
        %v2197 = vld [vmem:[%s2184 + $0x30] sm:$0xf]
        %v2198 = vld [vmem:[%s2184 + $0x34] sm:$0xf]
        %v2199 = vld [vmem:[%s2184 + $0x38] sm:$0xf]
        %v2200 = vld [vmem:[%s2184 + $0x3c] sm:$0xf]
        %v2217 = vunpack.c.l.b16 %v2168
        %v2218 = vunpack.c.l.b16 %v2169
        %v2219 = vunpack.c.l.b16 %v2170
        %v2220 = vunpack.c.l.b16 %v2171
        %v2221 = vunpack.c.l.b16 %v2172
        %v2222 = vunpack.c.l.b16 %v2173
        %v2223 = vunpack.c.l.b16 %v2174
        %v2224 = vunpack.c.l.b16 %v2175
        %v2225 = vunpack.c.l.b16 %v2176
        %v2226 = vunpack.c.l.b16 %v2177
        %v2227 = vunpack.c.l.b16 %v2178
        %v2228 = vunpack.c.l.b16 %v2179
        %v2229 = vunpack.c.l.b16 %v2180
        %v2230 = vunpack.c.l.b16 %v2181
        %v2231 = vunpack.c.l.b16 %v2182
        %v2232 = vunpack.c.l.b16 %v2183
        %v2233 = vpack.c.b16 %v2218, %v2217
        %v2234 = vpack.c.b16 %v2220, %v2219
        %v2235 = vpack.c.b16 %v2222, %v2221
        %v2236 = vpack.c.b16 %v2224, %v2223
        %v2237 = vpack.c.b16 %v2226, %v2225
        %v2238 = vpack.c.b16 %v2228, %v2227
        %v2239 = vpack.c.b16 %v2230, %v2229
        %v2240 = vpack.c.b16 %v2232, %v2231
        %v2265 = vunpack.c.l.b16 %v2185
        %v2266 = vunpack.c.l.b16 %v2186
        %v2267 = vunpack.c.l.b16 %v2187
        %v2268 = vunpack.c.l.b16 %v2188
        %v2269 = vunpack.c.l.b16 %v2189
        %v2270 = vunpack.c.l.b16 %v2190
        %v2271 = vunpack.c.l.b16 %v2191
        %v2272 = vunpack.c.l.b16 %v2192
        %v2273 = vunpack.c.l.b16 %v2193
        %v2274 = vunpack.c.l.b16 %v2194
        %v2275 = vunpack.c.l.b16 %v2195
        %v2276 = vunpack.c.l.b16 %v2196
        %v2277 = vunpack.c.l.b16 %v2197
        %v2278 = vunpack.c.l.b16 %v2198
        %v2279 = vunpack.c.l.b16 %v2199
        %v2280 = vunpack.c.l.b16 %v2200
        %v2281 = vpack.c.b16 %v2266, %v2265
        %v2282 = vpack.c.b16 %v2268, %v2267
        %v2283 = vpack.c.b16 %v2270, %v2269
        %v2284 = vpack.c.b16 %v2272, %v2271
        %v2285 = vpack.c.b16 %v2274, %v2273
        %v2286 = vpack.c.b16 %v2276, %v2275
        %v2287 = vpack.c.b16 %v2278, %v2277
        %v2288 = vpack.c.b16 %v2280, %v2279
        %2297 = vmatpush.bf16.msra.mxu0 %v2288
        %2298 = vmatpush.bf16.msra.mxu0 %v2287
        %2299 = vmatpush.bf16.msra.mxu0 %v2286
        %2300 = vmatpush.bf16.msra.mxu0 %v2285
        %2301 = vmatpush.bf16.msra.mxu0 %v2284
        %2302 = vmatpush.bf16.msra.mxu0 %v2283
        %2303 = vmatpush.bf16.msra.mxu0 %v2282
        %2304 = vmatpush.bf16.msra.mxu0 %v2281
        %2305 = vmatmul.bf16.gmra.mxu0 %v2233
        %v2306 = vpop.f32.mrf.mxu0
        %v2307 = vadd.f32 0.0, %v2306
        %v2308 = vpop.f32.mrf.mxu0
        %v2309 = vadd.f32 0.0, %v2308
        %2310 = vmatmul.bf16.gmra.mxu0 %v2234
        %v2311 = vpop.f32.mrf.mxu0
        %v2312 = vadd.f32 0.0, %v2311
        %v2313 = vpop.f32.mrf.mxu0
        %v2314 = vadd.f32 0.0, %v2313
        %2315 = vmatmul.bf16.gmra.mxu0 %v2235
        %v2316 = vpop.f32.mrf.mxu0
        %v2317 = vadd.f32 0.0, %v2316
        %v2318 = vpop.f32.mrf.mxu0
        %v2319 = vadd.f32 0.0, %v2318
        %2320 = vmatmul.bf16.gmra.mxu0 %v2236
        %v2321 = vpop.f32.mrf.mxu0
        %v2322 = vadd.f32 0.0, %v2321
        %v2323 = vpop.f32.mrf.mxu0
        %v2324 = vadd.f32 0.0, %v2323
        %2325 = vmatmul.bf16.gmra.mxu0 %v2237
        %v2326 = vpop.f32.mrf.mxu0
        %v2327 = vadd.f32 0.0, %v2326
        %v2328 = vpop.f32.mrf.mxu0
        %v2329 = vadd.f32 0.0, %v2328
        %2330 = vmatmul.bf16.gmra.mxu0 %v2238
        %v2331 = vpop.f32.mrf.mxu0
        %v2332 = vadd.f32 0.0, %v2331
        %v2333 = vpop.f32.mrf.mxu0
        %v2334 = vadd.f32 0.0, %v2333
        %2335 = vmatmul.bf16.gmra.mxu0 %v2239
        %v2336 = vpop.f32.mrf.mxu0
        %v2337 = vadd.f32 0.0, %v2336
        %v2338 = vpop.f32.mrf.mxu0
        %v2339 = vadd.f32 0.0, %v2338
        %2340 = vmatmul.bf16.gmra.mxu0 %v2240
        %v2341 = vpop.f32.mrf.mxu0
        %v2342 = vadd.f32 0.0, %v2341
        %v2343 = vpop.f32.mrf.mxu0
        %v2344 = vadd.f32 0.0, %v2343
        %2345 = vdwg.mxu0
        %v2346 = vadd.f32 %v2152, %v2307
        %v2347 = vadd.f32 %v2153, %v2309
        %v2348 = vadd.f32 %v2154, %v2312
        %v2349 = vadd.f32 %v2155, %v2314
        %v2350 = vadd.f32 %v2156, %v2317
        %v2351 = vadd.f32 %v2157, %v2319
        %v2352 = vadd.f32 %v2158, %v2322
        %v2353 = vadd.f32 %v2159, %v2324
        %v2354 = vadd.f32 %v2160, %v2327
        %v2355 = vadd.f32 %v2161, %v2329
        %v2356 = vadd.f32 %v2162, %v2332
        %v2357 = vadd.f32 %v2163, %v2334
        %v2358 = vadd.f32 %v2164, %v2337
        %v2359 = vadd.f32 %v2165, %v2339
        %v2360 = vadd.f32 %v2166, %v2342
        %v2361 = vadd.f32 %v2167, %v2344
        %v2362 = vld [vmem:[%s343] sm:$0xf]
        %v2363 = vld [vmem:[%s343 + $0x4] sm:$0xf]
        %v2364 = vld [vmem:[%s343 + $0x8] sm:$0xf]
        %v2365 = vld [vmem:[%s343 + $0xc] sm:$0xf]
        %v2366 = vld [vmem:[%s343 + $0x10] sm:$0xf]
        %v2367 = vld [vmem:[%s343 + $0x14] sm:$0xf]
        %v2368 = vld [vmem:[%s343 + $0x18] sm:$0xf]
        %v2369 = vld [vmem:[%s343 + $0x1c] sm:$0xf]
        %v2370 = vld [vmem:[%s343 + $0x20] sm:$0xf]
        %v2371 = vld [vmem:[%s343 + $0x24] sm:$0xf]
        %v2372 = vld [vmem:[%s343 + $0x28] sm:$0xf]
        %v2373 = vld [vmem:[%s343 + $0x2c] sm:$0xf]
        %v2374 = vld [vmem:[%s343 + $0x30] sm:$0xf]
        %v2375 = vld [vmem:[%s343 + $0x34] sm:$0xf]
        %v2376 = vld [vmem:[%s343 + $0x38] sm:$0xf]
        %v2377 = vld [vmem:[%s343 + $0x3c] sm:$0xf]
        %v2378 = vld [vmem:[%s343 + $0x40] sm:$0x1]
        %s2379 = scalar_lea.vmem [#allocation8], 640
        %v2380 = vld [vmem:[%s2379] sm:$0xf]
        %v2381 = vld [vmem:[%s2379 + $0x4] sm:$0xf]
        %v2382 = vld [vmem:[%s2379 + $0x8] sm:$0xf]
        %v2383 = vld [vmem:[%s2379 + $0xc] sm:$0xf]
        %v2384 = vld [vmem:[%s2379 + $0x10] sm:$0xf]
        %v2385 = vld [vmem:[%s2379 + $0x14] sm:$0xf]
        %v2386 = vld [vmem:[%s2379 + $0x18] sm:$0xf]
        %v2387 = vld [vmem:[%s2379 + $0x1c] sm:$0xf]
        %v2388 = vld [vmem:[%s2379 + $0x20] sm:$0xf]
        %v2389 = vld [vmem:[%s2379 + $0x24] sm:$0xf]
        %v2390 = vld [vmem:[%s2379 + $0x28] sm:$0xf]
        %v2391 = vld [vmem:[%s2379 + $0x2c] sm:$0xf]
        %v2392 = vld [vmem:[%s2379 + $0x30] sm:$0xf]
        %v2393 = vld [vmem:[%s2379 + $0x34] sm:$0xf]
        %v2394 = vld [vmem:[%s2379 + $0x38] sm:$0xf]
        %v2395 = vld [vmem:[%s2379 + $0x3c] sm:$0xf]
        %v2413 = vunpack.c.l.b16 %v2362
        %v2414 = vunpack.c.l.b16 %v2363
        %v2415 = vunpack.c.l.b16 %v2364
        %v2416 = vunpack.c.l.b16 %v2365
        %v2417 = vunpack.c.l.b16 %v2366
        %v2418 = vunpack.c.l.b16 %v2367
        %v2419 = vunpack.c.l.b16 %v2368
        %v2420 = vunpack.c.l.b16 %v2369
        %v2421 = vunpack.c.l.b16 %v2370
        %v2422 = vunpack.c.l.b16 %v2371
        %v2423 = vunpack.c.l.b16 %v2372
        %v2424 = vunpack.c.l.b16 %v2373
        %v2425 = vunpack.c.l.b16 %v2374
        %v2426 = vunpack.c.l.b16 %v2375
        %v2427 = vunpack.c.l.b16 %v2376
        %v2428 = vunpack.c.l.b16 %v2377
        %v2429 = vunpack.c.l.b16 %v2378
        %v2430 = vpack.c.b16 %v2414, %v2413
        %v2431 = vpack.c.b16 %v2416, %v2415
        %v2432 = vpack.c.b16 %v2418, %v2417
        %v2433 = vpack.c.b16 %v2420, %v2419
        %v2434 = vpack.c.b16 %v2422, %v2421
        %v2435 = vpack.c.b16 %v2424, %v2423
        %v2436 = vpack.c.b16 %v2426, %v2425
        %v2437 = vpack.c.b16 %v2428, %v2427
        %v2438 = vpack.c.b16 %v2429, %v2429
        %v2440 = vshrl.u32 %v2430, 16
        %v2442 = vshll.u32 %v2430, 16
        %v2444 = vrot.slane %v2442, 1
        %v2445 = vor.u32 %v2440, %v2444
        %v2447 = vshll.u32 %v2431, 16
        %v2449 = vrot.slane %v2447, 1
        %v2450 = vsel %vm491, %v2445, %v2449
        %v2451 = vshrl.u32 %v2431, 16
        %v2453 = vor.u32 %v2451, %v2449
        %v2455 = vshll.u32 %v2432, 16
        %v2457 = vrot.slane %v2455, 1
        %v2458 = vsel %vm491, %v2453, %v2457
        %v2459 = vshrl.u32 %v2432, 16
        %v2461 = vor.u32 %v2459, %v2457
        %v2463 = vshll.u32 %v2433, 16
        %v2465 = vrot.slane %v2463, 1
        %v2466 = vsel %vm491, %v2461, %v2465
        %v2467 = vshrl.u32 %v2433, 16
        %v2469 = vor.u32 %v2467, %v2465
        %v2471 = vshll.u32 %v2434, 16
        %v2473 = vrot.slane %v2471, 1
        %v2474 = vsel %vm491, %v2469, %v2473
        %v2475 = vshrl.u32 %v2434, 16
        %v2477 = vor.u32 %v2475, %v2473
        %v2479 = vshll.u32 %v2435, 16
        %v2481 = vrot.slane %v2479, 1
        %v2482 = vsel %vm491, %v2477, %v2481
        %v2483 = vshrl.u32 %v2435, 16
        %v2485 = vor.u32 %v2483, %v2481
        %v2487 = vshll.u32 %v2436, 16
        %v2489 = vrot.slane %v2487, 1
        %v2490 = vsel %vm491, %v2485, %v2489
        %v2491 = vshrl.u32 %v2436, 16
        %v2493 = vor.u32 %v2491, %v2489
        %v2495 = vshll.u32 %v2437, 16
        %v2497 = vrot.slane %v2495, 1
        %v2498 = vsel %vm491, %v2493, %v2497
        %v2499 = vshrl.u32 %v2437, 16
        %v2501 = vor.u32 %v2499, %v2497
        %v2503 = vshll.u32 %v2438, 16
        %v2505 = vrot.slane %v2503, 1
        %v2506 = vsel %vm491, %v2501, %v2505
        %v2531 = vunpack.c.l.b16 %v2380
        %v2532 = vunpack.c.l.b16 %v2381
        %v2533 = vunpack.c.l.b16 %v2382
        %v2534 = vunpack.c.l.b16 %v2383
        %v2535 = vunpack.c.l.b16 %v2384
        %v2536 = vunpack.c.l.b16 %v2385
        %v2537 = vunpack.c.l.b16 %v2386
        %v2538 = vunpack.c.l.b16 %v2387
        %v2539 = vunpack.c.l.b16 %v2388
        %v2540 = vunpack.c.l.b16 %v2389
        %v2541 = vunpack.c.l.b16 %v2390
        %v2542 = vunpack.c.l.b16 %v2391
        %v2543 = vunpack.c.l.b16 %v2392
        %v2544 = vunpack.c.l.b16 %v2393
        %v2545 = vunpack.c.l.b16 %v2394
        %v2546 = vunpack.c.l.b16 %v2395
        %v2547 = vpack.c.b16 %v2532, %v2531
        %v2548 = vpack.c.b16 %v2534, %v2533
        %v2549 = vpack.c.b16 %v2536, %v2535
        %v2550 = vpack.c.b16 %v2538, %v2537
        %v2551 = vpack.c.b16 %v2540, %v2539
        %v2552 = vpack.c.b16 %v2542, %v2541
        %v2553 = vpack.c.b16 %v2544, %v2543
        %v2554 = vpack.c.b16 %v2546, %v2545
        %2563 = vmatpush.bf16.msra.mxu0 %v2554
        %2564 = vmatpush.bf16.msra.mxu0 %v2553
        %2565 = vmatpush.bf16.msra.mxu0 %v2552
        %2566 = vmatpush.bf16.msra.mxu0 %v2551
        %2567 = vmatpush.bf16.msra.mxu0 %v2550
        %2568 = vmatpush.bf16.msra.mxu0 %v2549
        %2569 = vmatpush.bf16.msra.mxu0 %v2548
        %2570 = vmatpush.bf16.msra.mxu0 %v2547
        %2571 = vmatmul.bf16.gmra.mxu0 %v2450
        %v2572 = vpop.f32.mrf.mxu0
        %v2573 = vadd.f32 0.0, %v2572
        %v2574 = vpop.f32.mrf.mxu0
        %v2575 = vadd.f32 0.0, %v2574
        %2576 = vmatmul.bf16.gmra.mxu0 %v2458
        %v2577 = vpop.f32.mrf.mxu0
        %v2578 = vadd.f32 0.0, %v2577
        %v2579 = vpop.f32.mrf.mxu0
        %v2580 = vadd.f32 0.0, %v2579
        %2581 = vmatmul.bf16.gmra.mxu0 %v2466
        %v2582 = vpop.f32.mrf.mxu0
        %v2583 = vadd.f32 0.0, %v2582
        %v2584 = vpop.f32.mrf.mxu0
        %v2585 = vadd.f32 0.0, %v2584
        %2586 = vmatmul.bf16.gmra.mxu0 %v2474
        %v2587 = vpop.f32.mrf.mxu0
        %v2588 = vadd.f32 0.0, %v2587
        %v2589 = vpop.f32.mrf.mxu0
        %v2590 = vadd.f32 0.0, %v2589
        %2591 = vmatmul.bf16.gmra.mxu0 %v2482
        %v2592 = vpop.f32.mrf.mxu0
        %v2593 = vadd.f32 0.0, %v2592
        %v2594 = vpop.f32.mrf.mxu0
        %v2595 = vadd.f32 0.0, %v2594
        %2596 = vmatmul.bf16.gmra.mxu0 %v2490
        %v2597 = vpop.f32.mrf.mxu0
        %v2598 = vadd.f32 0.0, %v2597
        %v2599 = vpop.f32.mrf.mxu0
        %v2600 = vadd.f32 0.0, %v2599
        %2601 = vmatmul.bf16.gmra.mxu0 %v2498
        %v2602 = vpop.f32.mrf.mxu0
        %v2603 = vadd.f32 0.0, %v2602
        %v2604 = vpop.f32.mrf.mxu0
        %v2605 = vadd.f32 0.0, %v2604
        %2606 = vmatmul.bf16.gmra.mxu0 %v2506
        %v2607 = vpop.f32.mrf.mxu0
        %v2608 = vadd.f32 0.0, %v2607
        %v2609 = vpop.f32.mrf.mxu0
        %v2610 = vadd.f32 0.0, %v2609
        %2611 = vdwg.mxu0
        %v2612 = vadd.f32 %v2346, %v2573
        %v2613 = vadd.f32 %v2347, %v2575
        %v2614 = vadd.f32 %v2348, %v2578
        %v2615 = vadd.f32 %v2349, %v2580
        %v2616 = vadd.f32 %v2350, %v2583
        %v2617 = vadd.f32 %v2351, %v2585
        %v2618 = vadd.f32 %v2352, %v2588
        %v2619 = vadd.f32 %v2353, %v2590
        %v2620 = vadd.f32 %v2354, %v2593
        %v2621 = vadd.f32 %v2355, %v2595
        %v2622 = vadd.f32 %v2356, %v2598
        %v2623 = vadd.f32 %v2357, %v2600
        %v2624 = vadd.f32 %v2358, %v2603
        %v2625 = vadd.f32 %v2359, %v2605
        %v2626 = vadd.f32 %v2360, %v2608
        %v2627 = vadd.f32 %v2361, %v2610
        %v2628 = vld [vmem:[%s343] sm:$0xe]
        %s2629 = scalar_lea.vmem [#allocation8], 704
        %v2630 = vld [vmem:[%s2629] sm:$0xf]
        %v2631 = vld [vmem:[%s2629 + $0x4] sm:$0xf]
        %v2632 = vld [vmem:[%s2629 + $0x8] sm:$0xf]
        %v2633 = vld [vmem:[%s2629 + $0xc] sm:$0xf]
        %v2634 = vld [vmem:[%s2629 + $0x10] sm:$0xf]
        %v2635 = vld [vmem:[%s2629 + $0x14] sm:$0xf]
        %v2636 = vld [vmem:[%s2629 + $0x18] sm:$0xf]
        %v2637 = vld [vmem:[%s2629 + $0x1c] sm:$0xf]
        %v2638 = vld [vmem:[%s2629 + $0x20] sm:$0xf]
        %v2639 = vld [vmem:[%s2629 + $0x24] sm:$0xf]
        %v2640 = vld [vmem:[%s2629 + $0x28] sm:$0xf]
        %v2641 = vld [vmem:[%s2629 + $0x2c] sm:$0xf]
        %v2642 = vld [vmem:[%s2629 + $0x30] sm:$0xf]
        %v2643 = vld [vmem:[%s2629 + $0x34] sm:$0xf]
        %v2644 = vld [vmem:[%s2629 + $0x38] sm:$0xf]
        %v2645 = vld [vmem:[%s2629 + $0x3c] sm:$0xf]
        %v2647 = vunpack.c.l.b16 %v2628
        %v2648 = vpack.c.b16 %v2414, %v2647
        %v2649 = vrot.slane %v2648, 1
        %v2650 = vrot.slane %v2431, 1
        %v2651 = vsel %vm791, %v2649, %v2650
        %v2652 = vrot.slane %v2432, 1
        %v2653 = vsel %vm791, %v2650, %v2652
        %v2654 = vrot.slane %v2433, 1
        %v2655 = vsel %vm791, %v2652, %v2654
        %v2656 = vrot.slane %v2434, 1
        %v2657 = vsel %vm791, %v2654, %v2656
        %v2658 = vrot.slane %v2435, 1
        %v2659 = vsel %vm791, %v2656, %v2658
        %v2660 = vrot.slane %v2436, 1
        %v2661 = vsel %vm791, %v2658, %v2660
        %v2662 = vrot.slane %v2437, 1
        %v2663 = vsel %vm791, %v2660, %v2662
        %v2664 = vrot.slane %v2438, 1
        %v2665 = vsel %vm791, %v2662, %v2664
        %v2690 = vunpack.c.l.b16 %v2630
        %v2691 = vunpack.c.l.b16 %v2631
        %v2692 = vunpack.c.l.b16 %v2632
        %v2693 = vunpack.c.l.b16 %v2633
        %v2694 = vunpack.c.l.b16 %v2634
        %v2695 = vunpack.c.l.b16 %v2635
        %v2696 = vunpack.c.l.b16 %v2636
        %v2697 = vunpack.c.l.b16 %v2637
        %v2698 = vunpack.c.l.b16 %v2638
        %v2699 = vunpack.c.l.b16 %v2639
        %v2700 = vunpack.c.l.b16 %v2640
        %v2701 = vunpack.c.l.b16 %v2641
        %v2702 = vunpack.c.l.b16 %v2642
        %v2703 = vunpack.c.l.b16 %v2643
        %v2704 = vunpack.c.l.b16 %v2644
        %v2705 = vunpack.c.l.b16 %v2645
        %v2706 = vpack.c.b16 %v2691, %v2690
        %v2707 = vpack.c.b16 %v2693, %v2692
        %v2708 = vpack.c.b16 %v2695, %v2694
        %v2709 = vpack.c.b16 %v2697, %v2696
        %v2710 = vpack.c.b16 %v2699, %v2698
        %v2711 = vpack.c.b16 %v2701, %v2700
        %v2712 = vpack.c.b16 %v2703, %v2702
        %v2713 = vpack.c.b16 %v2705, %v2704
        %2722 = vmatpush.bf16.msra.mxu0 %v2713
        %2723 = vmatpush.bf16.msra.mxu0 %v2712
        %2724 = vmatpush.bf16.msra.mxu0 %v2711
        %2725 = vmatpush.bf16.msra.mxu0 %v2710
        %2726 = vmatpush.bf16.msra.mxu0 %v2709
        %2727 = vmatpush.bf16.msra.mxu0 %v2708
        %2728 = vmatpush.bf16.msra.mxu0 %v2707
        %2729 = vmatpush.bf16.msra.mxu0 %v2706
        %2730 = vmatmul.bf16.gmra.mxu0 %v2651
        %v2731 = vpop.f32.mrf.mxu0
        %v2732 = vadd.f32 0.0, %v2731
        %v2733 = vpop.f32.mrf.mxu0
        %v2734 = vadd.f32 0.0, %v2733
        %2735 = vmatmul.bf16.gmra.mxu0 %v2653
        %v2736 = vpop.f32.mrf.mxu0
        %v2737 = vadd.f32 0.0, %v2736
        %v2738 = vpop.f32.mrf.mxu0
        %v2739 = vadd.f32 0.0, %v2738
        %2740 = vmatmul.bf16.gmra.mxu0 %v2655
        %v2741 = vpop.f32.mrf.mxu0
        %v2742 = vadd.f32 0.0, %v2741
        %v2743 = vpop.f32.mrf.mxu0
        %v2744 = vadd.f32 0.0, %v2743
        %2745 = vmatmul.bf16.gmra.mxu0 %v2657
        %v2746 = vpop.f32.mrf.mxu0
        %v2747 = vadd.f32 0.0, %v2746
        %v2748 = vpop.f32.mrf.mxu0
        %v2749 = vadd.f32 0.0, %v2748
        %2750 = vmatmul.bf16.gmra.mxu0 %v2659
        %v2751 = vpop.f32.mrf.mxu0
        %v2752 = vadd.f32 0.0, %v2751
        %v2753 = vpop.f32.mrf.mxu0
        %v2754 = vadd.f32 0.0, %v2753
        %2755 = vmatmul.bf16.gmra.mxu0 %v2661
        %v2756 = vpop.f32.mrf.mxu0
        %v2757 = vadd.f32 0.0, %v2756
        %v2758 = vpop.f32.mrf.mxu0
        %v2759 = vadd.f32 0.0, %v2758
        %2760 = vmatmul.bf16.gmra.mxu0 %v2663
        %v2761 = vpop.f32.mrf.mxu0
        %v2762 = vadd.f32 0.0, %v2761
        %v2763 = vpop.f32.mrf.mxu0
        %v2764 = vadd.f32 0.0, %v2763
        %2765 = vmatmul.bf16.gmra.mxu0 %v2665
        %v2766 = vpop.f32.mrf.mxu0
        %v2767 = vadd.f32 0.0, %v2766
        %v2768 = vpop.f32.mrf.mxu0
        %v2769 = vadd.f32 0.0, %v2768
        %2770 = vdwg.mxu0
        %v2771 = vadd.f32 %v2612, %v2732
        %v2772 = vadd.f32 %v2613, %v2734
        %v2773 = vadd.f32 %v2614, %v2737
        %v2774 = vadd.f32 %v2615, %v2739
        %v2775 = vadd.f32 %v2616, %v2742
        %v2776 = vadd.f32 %v2617, %v2744
        %v2777 = vadd.f32 %v2618, %v2747
        %v2778 = vadd.f32 %v2619, %v2749
        %v2779 = vadd.f32 %v2620, %v2752
        %v2780 = vadd.f32 %v2621, %v2754
        %v2781 = vadd.f32 %v2622, %v2757
        %v2782 = vadd.f32 %v2623, %v2759
        %v2783 = vadd.f32 %v2624, %v2762
        %v2784 = vadd.f32 %v2625, %v2764
        %v2785 = vadd.f32 %v2626, %v2767
        %v2786 = vadd.f32 %v2627, %v2769
        %v2787 = vld [vmem:[%s343 + $0x8] sm:$0xf]
        %v2788 = vld [vmem:[%s343 + $0xc] sm:$0xf]
        %v2789 = vld [vmem:[%s343 + $0x10] sm:$0xf]
        %v2790 = vld [vmem:[%s343 + $0x14] sm:$0xf]
        %v2791 = vld [vmem:[%s343 + $0x18] sm:$0xf]
        %v2792 = vld [vmem:[%s343 + $0x1c] sm:$0xf]
        %v2793 = vld [vmem:[%s343 + $0x20] sm:$0xf]
        %v2794 = vld [vmem:[%s343 + $0x24] sm:$0xf]
        %v2795 = vld [vmem:[%s343 + $0x28] sm:$0xf]
        %v2796 = vld [vmem:[%s343 + $0x2c] sm:$0xf]
        %v2797 = vld [vmem:[%s343 + $0x30] sm:$0xf]
        %v2798 = vld [vmem:[%s343 + $0x34] sm:$0xf]
        %v2799 = vld [vmem:[%s343 + $0x38] sm:$0xf]
        %v2800 = vld [vmem:[%s343 + $0x3c] sm:$0xf]
        %v2801 = vld [vmem:[%s343 + $0x40] sm:$0xf]
        %v2802 = vld [vmem:[%s343 + $0x44] sm:$0xf]
        %s2803 = scalar_lea.vmem [#allocation8], 768
        %v2804 = vld [vmem:[%s2803] sm:$0xf]
        %v2805 = vld [vmem:[%s2803 + $0x4] sm:$0xf]
        %v2806 = vld [vmem:[%s2803 + $0x8] sm:$0xf]
        %v2807 = vld [vmem:[%s2803 + $0xc] sm:$0xf]
        %v2808 = vld [vmem:[%s2803 + $0x10] sm:$0xf]
        %v2809 = vld [vmem:[%s2803 + $0x14] sm:$0xf]
        %v2810 = vld [vmem:[%s2803 + $0x18] sm:$0xf]
        %v2811 = vld [vmem:[%s2803 + $0x1c] sm:$0xf]
        %v2812 = vld [vmem:[%s2803 + $0x20] sm:$0xf]
        %v2813 = vld [vmem:[%s2803 + $0x24] sm:$0xf]
        %v2814 = vld [vmem:[%s2803 + $0x28] sm:$0xf]
        %v2815 = vld [vmem:[%s2803 + $0x2c] sm:$0xf]
        %v2816 = vld [vmem:[%s2803 + $0x30] sm:$0xf]
        %v2817 = vld [vmem:[%s2803 + $0x34] sm:$0xf]
        %v2818 = vld [vmem:[%s2803 + $0x38] sm:$0xf]
        %v2819 = vld [vmem:[%s2803 + $0x3c] sm:$0xf]
        %v2836 = vunpack.c.l.b16 %v2787
        %v2837 = vunpack.c.l.b16 %v2788
        %v2838 = vunpack.c.l.b16 %v2789
        %v2839 = vunpack.c.l.b16 %v2790
        %v2840 = vunpack.c.l.b16 %v2791
        %v2841 = vunpack.c.l.b16 %v2792
        %v2842 = vunpack.c.l.b16 %v2793
        %v2843 = vunpack.c.l.b16 %v2794
        %v2844 = vunpack.c.l.b16 %v2795
        %v2845 = vunpack.c.l.b16 %v2796
        %v2846 = vunpack.c.l.b16 %v2797
        %v2847 = vunpack.c.l.b16 %v2798
        %v2848 = vunpack.c.l.b16 %v2799
        %v2849 = vunpack.c.l.b16 %v2800
        %v2850 = vunpack.c.l.b16 %v2801
        %v2851 = vunpack.c.l.b16 %v2802
        %v2852 = vpack.c.b16 %v2837, %v2836
        %v2853 = vpack.c.b16 %v2839, %v2838
        %v2854 = vpack.c.b16 %v2841, %v2840
        %v2855 = vpack.c.b16 %v2843, %v2842
        %v2856 = vpack.c.b16 %v2845, %v2844
        %v2857 = vpack.c.b16 %v2847, %v2846
        %v2858 = vpack.c.b16 %v2849, %v2848
        %v2859 = vpack.c.b16 %v2851, %v2850
        %v2884 = vunpack.c.l.b16 %v2804
        %v2885 = vunpack.c.l.b16 %v2805
        %v2886 = vunpack.c.l.b16 %v2806
        %v2887 = vunpack.c.l.b16 %v2807
        %v2888 = vunpack.c.l.b16 %v2808
        %v2889 = vunpack.c.l.b16 %v2809
        %v2890 = vunpack.c.l.b16 %v2810
        %v2891 = vunpack.c.l.b16 %v2811
        %v2892 = vunpack.c.l.b16 %v2812
        %v2893 = vunpack.c.l.b16 %v2813
        %v2894 = vunpack.c.l.b16 %v2814
        %v2895 = vunpack.c.l.b16 %v2815
        %v2896 = vunpack.c.l.b16 %v2816
        %v2897 = vunpack.c.l.b16 %v2817
        %v2898 = vunpack.c.l.b16 %v2818
        %v2899 = vunpack.c.l.b16 %v2819
        %v2900 = vpack.c.b16 %v2885, %v2884
        %v2901 = vpack.c.b16 %v2887, %v2886
        %v2902 = vpack.c.b16 %v2889, %v2888
        %v2903 = vpack.c.b16 %v2891, %v2890
        %v2904 = vpack.c.b16 %v2893, %v2892
        %v2905 = vpack.c.b16 %v2895, %v2894
        %v2906 = vpack.c.b16 %v2897, %v2896
        %v2907 = vpack.c.b16 %v2899, %v2898
        %2916 = vmatpush.bf16.msra.mxu0 %v2907
        %2917 = vmatpush.bf16.msra.mxu0 %v2906
        %2918 = vmatpush.bf16.msra.mxu0 %v2905
        %2919 = vmatpush.bf16.msra.mxu0 %v2904
        %2920 = vmatpush.bf16.msra.mxu0 %v2903
        %2921 = vmatpush.bf16.msra.mxu0 %v2902
        %2922 = vmatpush.bf16.msra.mxu0 %v2901
        %2923 = vmatpush.bf16.msra.mxu0 %v2900
        %2924 = vmatmul.bf16.gmra.mxu0 %v2852
        %v2925 = vpop.f32.mrf.mxu0
        %v2926 = vadd.f32 0.0, %v2925
        %v2927 = vpop.f32.mrf.mxu0
        %v2928 = vadd.f32 0.0, %v2927
        %2929 = vmatmul.bf16.gmra.mxu0 %v2853
        %v2930 = vpop.f32.mrf.mxu0
        %v2931 = vadd.f32 0.0, %v2930
        %v2932 = vpop.f32.mrf.mxu0
        %v2933 = vadd.f32 0.0, %v2932
        %2934 = vmatmul.bf16.gmra.mxu0 %v2854
        %v2935 = vpop.f32.mrf.mxu0
        %v2936 = vadd.f32 0.0, %v2935
        %v2937 = vpop.f32.mrf.mxu0
        %v2938 = vadd.f32 0.0, %v2937
        %2939 = vmatmul.bf16.gmra.mxu0 %v2855
        %v2940 = vpop.f32.mrf.mxu0
        %v2941 = vadd.f32 0.0, %v2940
        %v2942 = vpop.f32.mrf.mxu0
        %v2943 = vadd.f32 0.0, %v2942
        %2944 = vmatmul.bf16.gmra.mxu0 %v2856
        %v2945 = vpop.f32.mrf.mxu0
        %v2946 = vadd.f32 0.0, %v2945
        %v2947 = vpop.f32.mrf.mxu0
        %v2948 = vadd.f32 0.0, %v2947
        %2949 = vmatmul.bf16.gmra.mxu0 %v2857
        %v2950 = vpop.f32.mrf.mxu0
        %v2951 = vadd.f32 0.0, %v2950
        %v2952 = vpop.f32.mrf.mxu0
        %v2953 = vadd.f32 0.0, %v2952
        %2954 = vmatmul.bf16.gmra.mxu0 %v2858
        %v2955 = vpop.f32.mrf.mxu0
        %v2956 = vadd.f32 0.0, %v2955
        %v2957 = vpop.f32.mrf.mxu0
        %v2958 = vadd.f32 0.0, %v2957
        %2959 = vmatmul.bf16.gmra.mxu0 %v2859
        %v2960 = vpop.f32.mrf.mxu0
        %v2961 = vadd.f32 0.0, %v2960
        %v2962 = vpop.f32.mrf.mxu0
        %v2963 = vadd.f32 0.0, %v2962
        %2964 = vdwg.mxu0
        %v2965 = vadd.f32 %v2771, %v2926
        %v2966 = vadd.f32 %v2772, %v2928
        %v2967 = vadd.f32 %v2773, %v2931
        %v2968 = vadd.f32 %v2774, %v2933
        %v2969 = vadd.f32 %v2775, %v2936
        %v2970 = vadd.f32 %v2776, %v2938
        %v2971 = vadd.f32 %v2777, %v2941
        %v2972 = vadd.f32 %v2778, %v2943
        %v2973 = vadd.f32 %v2779, %v2946
        %v2974 = vadd.f32 %v2780, %v2948
        %v2975 = vadd.f32 %v2781, %v2951
        %v2976 = vadd.f32 %v2782, %v2953
        %v2977 = vadd.f32 %v2783, %v2956
        %v2978 = vadd.f32 %v2784, %v2958
        %v2979 = vadd.f32 %v2785, %v2961
        %v2980 = vadd.f32 %v2786, %v2963
        %v2981 = vld [vmem:[%s343 + $0x8] sm:$0xf]
        %v2982 = vld [vmem:[%s343 + $0xc] sm:$0xf]
        %v2983 = vld [vmem:[%s343 + $0x10] sm:$0xf]
        %v2984 = vld [vmem:[%s343 + $0x14] sm:$0xf]
        %v2985 = vld [vmem:[%s343 + $0x18] sm:$0xf]
        %v2986 = vld [vmem:[%s343 + $0x1c] sm:$0xf]
        %v2987 = vld [vmem:[%s343 + $0x20] sm:$0xf]
        %v2988 = vld [vmem:[%s343 + $0x24] sm:$0xf]
        %v2989 = vld [vmem:[%s343 + $0x28] sm:$0xf]
        %v2990 = vld [vmem:[%s343 + $0x2c] sm:$0xf]
        %v2991 = vld [vmem:[%s343 + $0x30] sm:$0xf]
        %v2992 = vld [vmem:[%s343 + $0x34] sm:$0xf]
        %v2993 = vld [vmem:[%s343 + $0x38] sm:$0xf]
        %v2994 = vld [vmem:[%s343 + $0x3c] sm:$0xf]
        %v2995 = vld [vmem:[%s343 + $0x40] sm:$0xf]
        %v2996 = vld [vmem:[%s343 + $0x44] sm:$0xf]
        %v2997 = vld [vmem:[%s343 + $0x48] sm:$0x1]
        %s2998 = scalar_lea.vmem [#allocation8], 832
        %v2999 = vld [vmem:[%s2998] sm:$0xf]
        %v3000 = vld [vmem:[%s2998 + $0x4] sm:$0xf]
        %v3001 = vld [vmem:[%s2998 + $0x8] sm:$0xf]
        %v3002 = vld [vmem:[%s2998 + $0xc] sm:$0xf]
        %v3003 = vld [vmem:[%s2998 + $0x10] sm:$0xf]
        %v3004 = vld [vmem:[%s2998 + $0x14] sm:$0xf]
        %v3005 = vld [vmem:[%s2998 + $0x18] sm:$0xf]
        %v3006 = vld [vmem:[%s2998 + $0x1c] sm:$0xf]
        %v3007 = vld [vmem:[%s2998 + $0x20] sm:$0xf]
        %v3008 = vld [vmem:[%s2998 + $0x24] sm:$0xf]
        %v3009 = vld [vmem:[%s2998 + $0x28] sm:$0xf]
        %v3010 = vld [vmem:[%s2998 + $0x2c] sm:$0xf]
        %v3011 = vld [vmem:[%s2998 + $0x30] sm:$0xf]
        %v3012 = vld [vmem:[%s2998 + $0x34] sm:$0xf]
        %v3013 = vld [vmem:[%s2998 + $0x38] sm:$0xf]
        %v3014 = vld [vmem:[%s2998 + $0x3c] sm:$0xf]
        %v3032 = vunpack.c.l.b16 %v2981
        %v3033 = vunpack.c.l.b16 %v2982
        %v3034 = vunpack.c.l.b16 %v2983
        %v3035 = vunpack.c.l.b16 %v2984
        %v3036 = vunpack.c.l.b16 %v2985
        %v3037 = vunpack.c.l.b16 %v2986
        %v3038 = vunpack.c.l.b16 %v2987
        %v3039 = vunpack.c.l.b16 %v2988
        %v3040 = vunpack.c.l.b16 %v2989
        %v3041 = vunpack.c.l.b16 %v2990
        %v3042 = vunpack.c.l.b16 %v2991
        %v3043 = vunpack.c.l.b16 %v2992
        %v3044 = vunpack.c.l.b16 %v2993
        %v3045 = vunpack.c.l.b16 %v2994
        %v3046 = vunpack.c.l.b16 %v2995
        %v3047 = vunpack.c.l.b16 %v2996
        %v3048 = vunpack.c.l.b16 %v2997
        %v3049 = vpack.c.b16 %v3033, %v3032
        %v3050 = vpack.c.b16 %v3035, %v3034
        %v3051 = vpack.c.b16 %v3037, %v3036
        %v3052 = vpack.c.b16 %v3039, %v3038
        %v3053 = vpack.c.b16 %v3041, %v3040
        %v3054 = vpack.c.b16 %v3043, %v3042
        %v3055 = vpack.c.b16 %v3045, %v3044
        %v3056 = vpack.c.b16 %v3047, %v3046
        %v3057 = vpack.c.b16 %v3048, %v3048
        %v3059 = vshrl.u32 %v3049, 16
        %v3061 = vshll.u32 %v3049, 16
        %v3063 = vrot.slane %v3061, 1
        %v3064 = vor.u32 %v3059, %v3063
        %v3066 = vshll.u32 %v3050, 16
        %v3068 = vrot.slane %v3066, 1
        %v3069 = vsel %vm491, %v3064, %v3068
        %v3070 = vshrl.u32 %v3050, 16
        %v3072 = vor.u32 %v3070, %v3068
        %v3074 = vshll.u32 %v3051, 16
        %v3076 = vrot.slane %v3074, 1
        %v3077 = vsel %vm491, %v3072, %v3076
        %v3078 = vshrl.u32 %v3051, 16
        %v3080 = vor.u32 %v3078, %v3076
        %v3082 = vshll.u32 %v3052, 16
        %v3084 = vrot.slane %v3082, 1
        %v3085 = vsel %vm491, %v3080, %v3084
        %v3086 = vshrl.u32 %v3052, 16
        %v3088 = vor.u32 %v3086, %v3084
        %v3090 = vshll.u32 %v3053, 16
        %v3092 = vrot.slane %v3090, 1
        %v3093 = vsel %vm491, %v3088, %v3092
        %v3094 = vshrl.u32 %v3053, 16
        %v3096 = vor.u32 %v3094, %v3092
        %v3098 = vshll.u32 %v3054, 16
        %v3100 = vrot.slane %v3098, 1
        %v3101 = vsel %vm491, %v3096, %v3100
        %v3102 = vshrl.u32 %v3054, 16
        %v3104 = vor.u32 %v3102, %v3100
        %v3106 = vshll.u32 %v3055, 16
        %v3108 = vrot.slane %v3106, 1
        %v3109 = vsel %vm491, %v3104, %v3108
        %v3110 = vshrl.u32 %v3055, 16
        %v3112 = vor.u32 %v3110, %v3108
        %v3114 = vshll.u32 %v3056, 16
        %v3116 = vrot.slane %v3114, 1
        %v3117 = vsel %vm491, %v3112, %v3116
        %v3118 = vshrl.u32 %v3056, 16
        %v3120 = vor.u32 %v3118, %v3116
        %v3122 = vshll.u32 %v3057, 16
        %v3124 = vrot.slane %v3122, 1
        %v3125 = vsel %vm491, %v3120, %v3124
        %v3150 = vunpack.c.l.b16 %v2999
        %v3151 = vunpack.c.l.b16 %v3000
        %v3152 = vunpack.c.l.b16 %v3001
        %v3153 = vunpack.c.l.b16 %v3002
        %v3154 = vunpack.c.l.b16 %v3003
        %v3155 = vunpack.c.l.b16 %v3004
        %v3156 = vunpack.c.l.b16 %v3005
        %v3157 = vunpack.c.l.b16 %v3006
        %v3158 = vunpack.c.l.b16 %v3007
        %v3159 = vunpack.c.l.b16 %v3008
        %v3160 = vunpack.c.l.b16 %v3009
        %v3161 = vunpack.c.l.b16 %v3010
        %v3162 = vunpack.c.l.b16 %v3011
        %v3163 = vunpack.c.l.b16 %v3012
        %v3164 = vunpack.c.l.b16 %v3013
        %v3165 = vunpack.c.l.b16 %v3014
        %v3166 = vpack.c.b16 %v3151, %v3150
        %v3167 = vpack.c.b16 %v3153, %v3152
        %v3168 = vpack.c.b16 %v3155, %v3154
        %v3169 = vpack.c.b16 %v3157, %v3156
        %v3170 = vpack.c.b16 %v3159, %v3158
        %v3171 = vpack.c.b16 %v3161, %v3160
        %v3172 = vpack.c.b16 %v3163, %v3162
        %v3173 = vpack.c.b16 %v3165, %v3164
        %3182 = vmatpush.bf16.msra.mxu0 %v3173
        %3183 = vmatpush.bf16.msra.mxu0 %v3172
        %3184 = vmatpush.bf16.msra.mxu0 %v3171
        %3185 = vmatpush.bf16.msra.mxu0 %v3170
        %3186 = vmatpush.bf16.msra.mxu0 %v3169
        %3187 = vmatpush.bf16.msra.mxu0 %v3168
        %3188 = vmatpush.bf16.msra.mxu0 %v3167
        %3189 = vmatpush.bf16.msra.mxu0 %v3166
        %3190 = vmatmul.bf16.gmra.mxu0 %v3069
        %v3191 = vpop.f32.mrf.mxu0
        %v3192 = vadd.f32 0.0, %v3191
        %v3193 = vpop.f32.mrf.mxu0
        %v3194 = vadd.f32 0.0, %v3193
        %3195 = vmatmul.bf16.gmra.mxu0 %v3077
        %v3196 = vpop.f32.mrf.mxu0
        %v3197 = vadd.f32 0.0, %v3196
        %v3198 = vpop.f32.mrf.mxu0
        %v3199 = vadd.f32 0.0, %v3198
        %3200 = vmatmul.bf16.gmra.mxu0 %v3085
        %v3201 = vpop.f32.mrf.mxu0
        %v3202 = vadd.f32 0.0, %v3201
        %v3203 = vpop.f32.mrf.mxu0
        %v3204 = vadd.f32 0.0, %v3203
        %3205 = vmatmul.bf16.gmra.mxu0 %v3093
        %v3206 = vpop.f32.mrf.mxu0
        %v3207 = vadd.f32 0.0, %v3206
        %v3208 = vpop.f32.mrf.mxu0
        %v3209 = vadd.f32 0.0, %v3208
        %3210 = vmatmul.bf16.gmra.mxu0 %v3101
        %v3211 = vpop.f32.mrf.mxu0
        %v3212 = vadd.f32 0.0, %v3211
        %v3213 = vpop.f32.mrf.mxu0
        %v3214 = vadd.f32 0.0, %v3213
        %3215 = vmatmul.bf16.gmra.mxu0 %v3109
        %v3216 = vpop.f32.mrf.mxu0
        %v3217 = vadd.f32 0.0, %v3216
        %v3218 = vpop.f32.mrf.mxu0
        %v3219 = vadd.f32 0.0, %v3218
        %3220 = vmatmul.bf16.gmra.mxu0 %v3117
        %v3221 = vpop.f32.mrf.mxu0
        %v3222 = vadd.f32 0.0, %v3221
        %v3223 = vpop.f32.mrf.mxu0
        %v3224 = vadd.f32 0.0, %v3223
        %3225 = vmatmul.bf16.gmra.mxu0 %v3125
        %v3226 = vpop.f32.mrf.mxu0
        %v3227 = vadd.f32 0.0, %v3226
        %v3228 = vpop.f32.mrf.mxu0
        %v3229 = vadd.f32 0.0, %v3228
        %3230 = vdwg.mxu0
        %v3231 = vadd.f32 %v2965, %v3192
        %v3232 = vadd.f32 %v2966, %v3194
        %v3233 = vadd.f32 %v2967, %v3197
        %v3234 = vadd.f32 %v2968, %v3199
        %v3235 = vadd.f32 %v2969, %v3202
        %v3236 = vadd.f32 %v2970, %v3204
        %v3237 = vadd.f32 %v2971, %v3207
        %v3238 = vadd.f32 %v2972, %v3209
        %v3239 = vadd.f32 %v2973, %v3212
        %v3240 = vadd.f32 %v2974, %v3214
        %v3241 = vadd.f32 %v2975, %v3217
        %v3242 = vadd.f32 %v2976, %v3219
        %v3243 = vadd.f32 %v2977, %v3222
        %v3244 = vadd.f32 %v2978, %v3224
        %v3245 = vadd.f32 %v2979, %v3227
        %v3246 = vadd.f32 %v2980, %v3229
        %v3247 = vld [vmem:[%s343 + $0x8] sm:$0xe]
        %s3248 = scalar_lea.vmem [#allocation8], 896
        %v3249 = vld [vmem:[%s3248] sm:$0xf]
        %v3250 = vld [vmem:[%s3248 + $0x4] sm:$0xf]
        %v3251 = vld [vmem:[%s3248 + $0x8] sm:$0xf]
        %v3252 = vld [vmem:[%s3248 + $0xc] sm:$0xf]
        %v3253 = vld [vmem:[%s3248 + $0x10] sm:$0xf]
        %v3254 = vld [vmem:[%s3248 + $0x14] sm:$0xf]
        %v3255 = vld [vmem:[%s3248 + $0x18] sm:$0xf]
        %v3256 = vld [vmem:[%s3248 + $0x1c] sm:$0xf]
        %v3257 = vld [vmem:[%s3248 + $0x20] sm:$0xf]
        %v3258 = vld [vmem:[%s3248 + $0x24] sm:$0xf]
        %v3259 = vld [vmem:[%s3248 + $0x28] sm:$0xf]
        %v3260 = vld [vmem:[%s3248 + $0x2c] sm:$0xf]
        %v3261 = vld [vmem:[%s3248 + $0x30] sm:$0xf]
        %v3262 = vld [vmem:[%s3248 + $0x34] sm:$0xf]
        %v3263 = vld [vmem:[%s3248 + $0x38] sm:$0xf]
        %v3264 = vld [vmem:[%s3248 + $0x3c] sm:$0xf]
        %v3266 = vunpack.c.l.b16 %v3247
        %v3267 = vpack.c.b16 %v3033, %v3266
        %v3268 = vrot.slane %v3267, 1
        %v3269 = vrot.slane %v3050, 1
        %v3270 = vsel %vm791, %v3268, %v3269
        %v3271 = vrot.slane %v3051, 1
        %v3272 = vsel %vm791, %v3269, %v3271
        %v3273 = vrot.slane %v3052, 1
        %v3274 = vsel %vm791, %v3271, %v3273
        %v3275 = vrot.slane %v3053, 1
        %v3276 = vsel %vm791, %v3273, %v3275
        %v3277 = vrot.slane %v3054, 1
        %v3278 = vsel %vm791, %v3275, %v3277
        %v3279 = vrot.slane %v3055, 1
        %v3280 = vsel %vm791, %v3277, %v3279
        %v3281 = vrot.slane %v3056, 1
        %v3282 = vsel %vm791, %v3279, %v3281
        %v3283 = vrot.slane %v3057, 1
        %v3284 = vsel %vm791, %v3281, %v3283
        %v3309 = vunpack.c.l.b16 %v3249
        %v3310 = vunpack.c.l.b16 %v3250
        %v3311 = vunpack.c.l.b16 %v3251
        %v3312 = vunpack.c.l.b16 %v3252
        %v3313 = vunpack.c.l.b16 %v3253
        %v3314 = vunpack.c.l.b16 %v3254
        %v3315 = vunpack.c.l.b16 %v3255
        %v3316 = vunpack.c.l.b16 %v3256
        %v3317 = vunpack.c.l.b16 %v3257
        %v3318 = vunpack.c.l.b16 %v3258
        %v3319 = vunpack.c.l.b16 %v3259
        %v3320 = vunpack.c.l.b16 %v3260
        %v3321 = vunpack.c.l.b16 %v3261
        %v3322 = vunpack.c.l.b16 %v3262
        %v3323 = vunpack.c.l.b16 %v3263
        %v3324 = vunpack.c.l.b16 %v3264
        %v3325 = vpack.c.b16 %v3310, %v3309
        %v3326 = vpack.c.b16 %v3312, %v3311
        %v3327 = vpack.c.b16 %v3314, %v3313
        %v3328 = vpack.c.b16 %v3316, %v3315
        %v3329 = vpack.c.b16 %v3318, %v3317
        %v3330 = vpack.c.b16 %v3320, %v3319
        %v3331 = vpack.c.b16 %v3322, %v3321
        %v3332 = vpack.c.b16 %v3324, %v3323
        %3341 = vmatpush.bf16.msra.mxu0 %v3332
        %3342 = vmatpush.bf16.msra.mxu0 %v3331
        %3343 = vmatpush.bf16.msra.mxu0 %v3330
        %3344 = vmatpush.bf16.msra.mxu0 %v3329
        %3345 = vmatpush.bf16.msra.mxu0 %v3328
        %3346 = vmatpush.bf16.msra.mxu0 %v3327
        %3347 = vmatpush.bf16.msra.mxu0 %v3326
        %3348 = vmatpush.bf16.msra.mxu0 %v3325
        %3349 = vmatmul.bf16.gmra.mxu0 %v3270
        %v3350 = vpop.f32.mrf.mxu0
        %v3351 = vadd.f32 0.0, %v3350
        %v3352 = vpop.f32.mrf.mxu0
        %v3353 = vadd.f32 0.0, %v3352
        %3354 = vmatmul.bf16.gmra.mxu0 %v3272
        %v3355 = vpop.f32.mrf.mxu0
        %v3356 = vadd.f32 0.0, %v3355
        %v3357 = vpop.f32.mrf.mxu0
        %v3358 = vadd.f32 0.0, %v3357
        %3359 = vmatmul.bf16.gmra.mxu0 %v3274
        %v3360 = vpop.f32.mrf.mxu0
        %v3361 = vadd.f32 0.0, %v3360
        %v3362 = vpop.f32.mrf.mxu0
        %v3363 = vadd.f32 0.0, %v3362
        %3364 = vmatmul.bf16.gmra.mxu0 %v3276
        %v3365 = vpop.f32.mrf.mxu0
        %v3366 = vadd.f32 0.0, %v3365
        %v3367 = vpop.f32.mrf.mxu0
        %v3368 = vadd.f32 0.0, %v3367
        %3369 = vmatmul.bf16.gmra.mxu0 %v3278
        %v3370 = vpop.f32.mrf.mxu0
        %v3371 = vadd.f32 0.0, %v3370
        %v3372 = vpop.f32.mrf.mxu0
        %v3373 = vadd.f32 0.0, %v3372
        %3374 = vmatmul.bf16.gmra.mxu0 %v3280
        %v3375 = vpop.f32.mrf.mxu0
        %v3376 = vadd.f32 0.0, %v3375
        %v3377 = vpop.f32.mrf.mxu0
        %v3378 = vadd.f32 0.0, %v3377
        %3379 = vmatmul.bf16.gmra.mxu0 %v3282
        %v3380 = vpop.f32.mrf.mxu0
        %v3381 = vadd.f32 0.0, %v3380
        %v3382 = vpop.f32.mrf.mxu0
        %v3383 = vadd.f32 0.0, %v3382
        %3384 = vmatmul.bf16.gmra.mxu0 %v3284
        %v3385 = vpop.f32.mrf.mxu0
        %v3386 = vadd.f32 0.0, %v3385
        %v3387 = vpop.f32.mrf.mxu0
        %v3388 = vadd.f32 0.0, %v3387
        %3389 = vdwg.mxu0
        %v3390 = vadd.f32 %v3231, %v3351
        %v3391 = vadd.f32 %v3232, %v3353
        %v3392 = vadd.f32 %v3233, %v3356
        %v3393 = vadd.f32 %v3234, %v3358
        %v3394 = vadd.f32 %v3235, %v3361
        %v3395 = vadd.f32 %v3236, %v3363
        %v3396 = vadd.f32 %v3237, %v3366
        %v3397 = vadd.f32 %v3238, %v3368
        %v3398 = vadd.f32 %v3239, %v3371
        %v3399 = vadd.f32 %v3240, %v3373
        %v3400 = vadd.f32 %v3241, %v3376
        %v3401 = vadd.f32 %v3242, %v3378
        %v3402 = vadd.f32 %v3243, %v3381
        %v3403 = vadd.f32 %v3244, %v3383
        %v3404 = vadd.f32 %v3245, %v3386
        %v3405 = vadd.f32 %v3246, %v3388
        %v3406 = vld [vmem:[%s343 + $0x10] sm:$0xf]
        %v3407 = vld [vmem:[%s343 + $0x14] sm:$0xf]
        %v3408 = vld [vmem:[%s343 + $0x18] sm:$0xf]
        %v3409 = vld [vmem:[%s343 + $0x1c] sm:$0xf]
        %v3410 = vld [vmem:[%s343 + $0x20] sm:$0xf]
        %v3411 = vld [vmem:[%s343 + $0x24] sm:$0xf]
        %v3412 = vld [vmem:[%s343 + $0x28] sm:$0xf]
        %v3413 = vld [vmem:[%s343 + $0x2c] sm:$0xf]
        %v3414 = vld [vmem:[%s343 + $0x30] sm:$0xf]
        %v3415 = vld [vmem:[%s343 + $0x34] sm:$0xf]
        %v3416 = vld [vmem:[%s343 + $0x38] sm:$0xf]
        %v3417 = vld [vmem:[%s343 + $0x3c] sm:$0xf]
        %v3418 = vld [vmem:[%s343 + $0x40] sm:$0xf]
        %v3419 = vld [vmem:[%s343 + $0x44] sm:$0xf]
        %v3420 = vld [vmem:[%s343 + $0x48] sm:$0xf]
        %v3421 = vld [vmem:[%s343 + $0x4c] sm:$0xf]
        %s3422 = scalar_lea.vmem [#allocation8], 960
        %v3423 = vld [vmem:[%s3422] sm:$0xf]
        %v3424 = vld [vmem:[%s3422 + $0x4] sm:$0xf]
        %v3425 = vld [vmem:[%s3422 + $0x8] sm:$0xf]
        %v3426 = vld [vmem:[%s3422 + $0xc] sm:$0xf]
        %v3427 = vld [vmem:[%s3422 + $0x10] sm:$0xf]
        %v3428 = vld [vmem:[%s3422 + $0x14] sm:$0xf]
        %v3429 = vld [vmem:[%s3422 + $0x18] sm:$0xf]
        %v3430 = vld [vmem:[%s3422 + $0x1c] sm:$0xf]
        %v3431 = vld [vmem:[%s3422 + $0x20] sm:$0xf]
        %v3432 = vld [vmem:[%s3422 + $0x24] sm:$0xf]
        %v3433 = vld [vmem:[%s3422 + $0x28] sm:$0xf]
        %v3434 = vld [vmem:[%s3422 + $0x2c] sm:$0xf]
        %v3435 = vld [vmem:[%s3422 + $0x30] sm:$0xf]
        %v3436 = vld [vmem:[%s3422 + $0x34] sm:$0xf]
        %v3437 = vld [vmem:[%s3422 + $0x38] sm:$0xf]
        %v3438 = vld [vmem:[%s3422 + $0x3c] sm:$0xf]
        %v3455 = vunpack.c.l.b16 %v3406
        %v3456 = vunpack.c.l.b16 %v3407
        %v3457 = vunpack.c.l.b16 %v3408
        %v3458 = vunpack.c.l.b16 %v3409
        %v3459 = vunpack.c.l.b16 %v3410
        %v3460 = vunpack.c.l.b16 %v3411
        %v3461 = vunpack.c.l.b16 %v3412
        %v3462 = vunpack.c.l.b16 %v3413
        %v3463 = vunpack.c.l.b16 %v3414
        %v3464 = vunpack.c.l.b16 %v3415
        %v3465 = vunpack.c.l.b16 %v3416
        %v3466 = vunpack.c.l.b16 %v3417
        %v3467 = vunpack.c.l.b16 %v3418
        %v3468 = vunpack.c.l.b16 %v3419
        %v3469 = vunpack.c.l.b16 %v3420
        %v3470 = vunpack.c.l.b16 %v3421
        %v3471 = vpack.c.b16 %v3456, %v3455
        %v3472 = vpack.c.b16 %v3458, %v3457
        %v3473 = vpack.c.b16 %v3460, %v3459
        %v3474 = vpack.c.b16 %v3462, %v3461
        %v3475 = vpack.c.b16 %v3464, %v3463
        %v3476 = vpack.c.b16 %v3466, %v3465
        %v3477 = vpack.c.b16 %v3468, %v3467
        %v3478 = vpack.c.b16 %v3470, %v3469
        %v3503 = vunpack.c.l.b16 %v3423
        %v3504 = vunpack.c.l.b16 %v3424
        %v3505 = vunpack.c.l.b16 %v3425
        %v3506 = vunpack.c.l.b16 %v3426
        %v3507 = vunpack.c.l.b16 %v3427
        %v3508 = vunpack.c.l.b16 %v3428
        %v3509 = vunpack.c.l.b16 %v3429
        %v3510 = vunpack.c.l.b16 %v3430
        %v3511 = vunpack.c.l.b16 %v3431
        %v3512 = vunpack.c.l.b16 %v3432
        %v3513 = vunpack.c.l.b16 %v3433
        %v3514 = vunpack.c.l.b16 %v3434
        %v3515 = vunpack.c.l.b16 %v3435
        %v3516 = vunpack.c.l.b16 %v3436
        %v3517 = vunpack.c.l.b16 %v3437
        %v3518 = vunpack.c.l.b16 %v3438
        %v3519 = vpack.c.b16 %v3504, %v3503
        %v3520 = vpack.c.b16 %v3506, %v3505
        %v3521 = vpack.c.b16 %v3508, %v3507
        %v3522 = vpack.c.b16 %v3510, %v3509
        %v3523 = vpack.c.b16 %v3512, %v3511
        %v3524 = vpack.c.b16 %v3514, %v3513
        %v3525 = vpack.c.b16 %v3516, %v3515
        %v3526 = vpack.c.b16 %v3518, %v3517
        %3535 = vmatpush.bf16.msra.mxu0 %v3526
        %3536 = vmatpush.bf16.msra.mxu0 %v3525
        %3537 = vmatpush.bf16.msra.mxu0 %v3524
        %3538 = vmatpush.bf16.msra.mxu0 %v3523
        %3539 = vmatpush.bf16.msra.mxu0 %v3522
        %3540 = vmatpush.bf16.msra.mxu0 %v3521
        %3541 = vmatpush.bf16.msra.mxu0 %v3520
        %3542 = vmatpush.bf16.msra.mxu0 %v3519
        %3543 = vmatmul.bf16.gmra.mxu0 %v3471
        %v3544 = vpop.f32.mrf.mxu0
        %v3545 = vadd.f32 0.0, %v3544
        %v3546 = vpop.f32.mrf.mxu0
        %v3547 = vadd.f32 0.0, %v3546
        %3548 = vmatmul.bf16.gmra.mxu0 %v3472
        %v3549 = vpop.f32.mrf.mxu0
        %v3550 = vadd.f32 0.0, %v3549
        %v3551 = vpop.f32.mrf.mxu0
        %v3552 = vadd.f32 0.0, %v3551
        %3553 = vmatmul.bf16.gmra.mxu0 %v3473
        %v3554 = vpop.f32.mrf.mxu0
        %v3555 = vadd.f32 0.0, %v3554
        %v3556 = vpop.f32.mrf.mxu0
        %v3557 = vadd.f32 0.0, %v3556
        %3558 = vmatmul.bf16.gmra.mxu0 %v3474
        %v3559 = vpop.f32.mrf.mxu0
        %v3560 = vadd.f32 0.0, %v3559
        %v3561 = vpop.f32.mrf.mxu0
        %v3562 = vadd.f32 0.0, %v3561
        %3563 = vmatmul.bf16.gmra.mxu0 %v3475
        %v3564 = vpop.f32.mrf.mxu0
        %v3565 = vadd.f32 0.0, %v3564
        %v3566 = vpop.f32.mrf.mxu0
        %v3567 = vadd.f32 0.0, %v3566
        %3568 = vmatmul.bf16.gmra.mxu0 %v3476
        %v3569 = vpop.f32.mrf.mxu0
        %v3570 = vadd.f32 0.0, %v3569
        %v3571 = vpop.f32.mrf.mxu0
        %v3572 = vadd.f32 0.0, %v3571
        %3573 = vmatmul.bf16.gmra.mxu0 %v3477
        %v3574 = vpop.f32.mrf.mxu0
        %v3575 = vadd.f32 0.0, %v3574
        %v3576 = vpop.f32.mrf.mxu0
        %v3577 = vadd.f32 0.0, %v3576
        %3578 = vmatmul.bf16.gmra.mxu0 %v3478
        %v3579 = vpop.f32.mrf.mxu0
        %v3580 = vadd.f32 0.0, %v3579
        %v3581 = vpop.f32.mrf.mxu0
        %v3582 = vadd.f32 0.0, %v3581
        %3583 = vdwg.mxu0
        %v3584 = vadd.f32 %v3390, %v3545
        %v3585 = vadd.f32 %v3391, %v3547
        %v3586 = vadd.f32 %v3392, %v3550
        %v3587 = vadd.f32 %v3393, %v3552
        %v3588 = vadd.f32 %v3394, %v3555
        %v3589 = vadd.f32 %v3395, %v3557
        %v3590 = vadd.f32 %v3396, %v3560
        %v3591 = vadd.f32 %v3397, %v3562
        %v3592 = vadd.f32 %v3398, %v3565
        %v3593 = vadd.f32 %v3399, %v3567
        %v3594 = vadd.f32 %v3400, %v3570
        %v3595 = vadd.f32 %v3401, %v3572
        %v3596 = vadd.f32 %v3402, %v3575
        %v3597 = vadd.f32 %v3403, %v3577
        %v3598 = vadd.f32 %v3404, %v3580
        %v3599 = vadd.f32 %v3405, %v3582
        %v3600 = vld [vmem:[%s343 + $0x10] sm:$0xf]
        %v3601 = vld [vmem:[%s343 + $0x14] sm:$0xf]
        %v3602 = vld [vmem:[%s343 + $0x18] sm:$0xf]
        %v3603 = vld [vmem:[%s343 + $0x1c] sm:$0xf]
        %v3604 = vld [vmem:[%s343 + $0x20] sm:$0xf]
        %v3605 = vld [vmem:[%s343 + $0x24] sm:$0xf]
        %v3606 = vld [vmem:[%s343 + $0x28] sm:$0xf]
        %v3607 = vld [vmem:[%s343 + $0x2c] sm:$0xf]
        %v3608 = vld [vmem:[%s343 + $0x30] sm:$0xf]
        %v3609 = vld [vmem:[%s343 + $0x34] sm:$0xf]
        %v3610 = vld [vmem:[%s343 + $0x38] sm:$0xf]
        %v3611 = vld [vmem:[%s343 + $0x3c] sm:$0xf]
        %v3612 = vld [vmem:[%s343 + $0x40] sm:$0xf]
        %v3613 = vld [vmem:[%s343 + $0x44] sm:$0xf]
        %v3614 = vld [vmem:[%s343 + $0x48] sm:$0xf]
        %v3615 = vld [vmem:[%s343 + $0x4c] sm:$0xf]
        %v3616 = vld [vmem:[%s343 + $0x50] sm:$0x1]
        %s3617 = scalar_lea.vmem [#allocation8], 1024
        %v3618 = vld [vmem:[%s3617] sm:$0xf]
        %v3619 = vld [vmem:[%s3617 + $0x4] sm:$0xf]
        %v3620 = vld [vmem:[%s3617 + $0x8] sm:$0xf]
        %v3621 = vld [vmem:[%s3617 + $0xc] sm:$0xf]
        %v3622 = vld [vmem:[%s3617 + $0x10] sm:$0xf]
        %v3623 = vld [vmem:[%s3617 + $0x14] sm:$0xf]
        %v3624 = vld [vmem:[%s3617 + $0x18] sm:$0xf]
        %v3625 = vld [vmem:[%s3617 + $0x1c] sm:$0xf]
        %v3626 = vld [vmem:[%s3617 + $0x20] sm:$0xf]
        %v3627 = vld [vmem:[%s3617 + $0x24] sm:$0xf]
        %v3628 = vld [vmem:[%s3617 + $0x28] sm:$0xf]
        %v3629 = vld [vmem:[%s3617 + $0x2c] sm:$0xf]
        %v3630 = vld [vmem:[%s3617 + $0x30] sm:$0xf]
        %v3631 = vld [vmem:[%s3617 + $0x34] sm:$0xf]
        %v3632 = vld [vmem:[%s3617 + $0x38] sm:$0xf]
        %v3633 = vld [vmem:[%s3617 + $0x3c] sm:$0xf]
        %v3651 = vunpack.c.l.b16 %v3600
        %v3652 = vunpack.c.l.b16 %v3601
        %v3653 = vunpack.c.l.b16 %v3602
        %v3654 = vunpack.c.l.b16 %v3603
        %v3655 = vunpack.c.l.b16 %v3604
        %v3656 = vunpack.c.l.b16 %v3605
        %v3657 = vunpack.c.l.b16 %v3606
        %v3658 = vunpack.c.l.b16 %v3607
        %v3659 = vunpack.c.l.b16 %v3608
        %v3660 = vunpack.c.l.b16 %v3609
        %v3661 = vunpack.c.l.b16 %v3610
        %v3662 = vunpack.c.l.b16 %v3611
        %v3663 = vunpack.c.l.b16 %v3612
        %v3664 = vunpack.c.l.b16 %v3613
        %v3665 = vunpack.c.l.b16 %v3614
        %v3666 = vunpack.c.l.b16 %v3615
        %v3667 = vunpack.c.l.b16 %v3616
        %v3668 = vpack.c.b16 %v3652, %v3651
        %v3669 = vpack.c.b16 %v3654, %v3653
        %v3670 = vpack.c.b16 %v3656, %v3655
        %v3671 = vpack.c.b16 %v3658, %v3657
        %v3672 = vpack.c.b16 %v3660, %v3659
        %v3673 = vpack.c.b16 %v3662, %v3661
        %v3674 = vpack.c.b16 %v3664, %v3663
        %v3675 = vpack.c.b16 %v3666, %v3665
        %v3676 = vpack.c.b16 %v3667, %v3667
        %v3678 = vshrl.u32 %v3668, 16
        %v3680 = vshll.u32 %v3668, 16
        %v3682 = vrot.slane %v3680, 1
        %v3683 = vor.u32 %v3678, %v3682
        %v3685 = vshll.u32 %v3669, 16
        %v3687 = vrot.slane %v3685, 1
        %v3688 = vsel %vm491, %v3683, %v3687
        %v3689 = vshrl.u32 %v3669, 16
        %v3691 = vor.u32 %v3689, %v3687
        %v3693 = vshll.u32 %v3670, 16
        %v3695 = vrot.slane %v3693, 1
        %v3696 = vsel %vm491, %v3691, %v3695
        %v3697 = vshrl.u32 %v3670, 16
        %v3699 = vor.u32 %v3697, %v3695
        %v3701 = vshll.u32 %v3671, 16
        %v3703 = vrot.slane %v3701, 1
        %v3704 = vsel %vm491, %v3699, %v3703
        %v3705 = vshrl.u32 %v3671, 16
        %v3707 = vor.u32 %v3705, %v3703
        %v3709 = vshll.u32 %v3672, 16
        %v3711 = vrot.slane %v3709, 1
        %v3712 = vsel %vm491, %v3707, %v3711
        %v3713 = vshrl.u32 %v3672, 16
        %v3715 = vor.u32 %v3713, %v3711
        %v3717 = vshll.u32 %v3673, 16
        %v3719 = vrot.slane %v3717, 1
        %v3720 = vsel %vm491, %v3715, %v3719
        %v3721 = vshrl.u32 %v3673, 16
        %v3723 = vor.u32 %v3721, %v3719
        %v3725 = vshll.u32 %v3674, 16
        %v3727 = vrot.slane %v3725, 1
        %v3728 = vsel %vm491, %v3723, %v3727
        %v3729 = vshrl.u32 %v3674, 16
        %v3731 = vor.u32 %v3729, %v3727
        %v3733 = vshll.u32 %v3675, 16
        %v3735 = vrot.slane %v3733, 1
        %v3736 = vsel %vm491, %v3731, %v3735
        %v3737 = vshrl.u32 %v3675, 16
        %v3739 = vor.u32 %v3737, %v3735
        %v3741 = vshll.u32 %v3676, 16
        %v3743 = vrot.slane %v3741, 1
        %v3744 = vsel %vm491, %v3739, %v3743
        %v3769 = vunpack.c.l.b16 %v3618
        %v3770 = vunpack.c.l.b16 %v3619
        %v3771 = vunpack.c.l.b16 %v3620
        %v3772 = vunpack.c.l.b16 %v3621
        %v3773 = vunpack.c.l.b16 %v3622
        %v3774 = vunpack.c.l.b16 %v3623
        %v3775 = vunpack.c.l.b16 %v3624
        %v3776 = vunpack.c.l.b16 %v3625
        %v3777 = vunpack.c.l.b16 %v3626
        %v3778 = vunpack.c.l.b16 %v3627
        %v3779 = vunpack.c.l.b16 %v3628
        %v3780 = vunpack.c.l.b16 %v3629
        %v3781 = vunpack.c.l.b16 %v3630
        %v3782 = vunpack.c.l.b16 %v3631
        %v3783 = vunpack.c.l.b16 %v3632
        %v3784 = vunpack.c.l.b16 %v3633
        %v3785 = vpack.c.b16 %v3770, %v3769
        %v3786 = vpack.c.b16 %v3772, %v3771
        %v3787 = vpack.c.b16 %v3774, %v3773
        %v3788 = vpack.c.b16 %v3776, %v3775
        %v3789 = vpack.c.b16 %v3778, %v3777
        %v3790 = vpack.c.b16 %v3780, %v3779
        %v3791 = vpack.c.b16 %v3782, %v3781
        %v3792 = vpack.c.b16 %v3784, %v3783
        %3801 = vmatpush.bf16.msra.mxu0 %v3792
        %3802 = vmatpush.bf16.msra.mxu0 %v3791
        %3803 = vmatpush.bf16.msra.mxu0 %v3790
        %3804 = vmatpush.bf16.msra.mxu0 %v3789
        %3805 = vmatpush.bf16.msra.mxu0 %v3788
        %3806 = vmatpush.bf16.msra.mxu0 %v3787
        %3807 = vmatpush.bf16.msra.mxu0 %v3786
        %3808 = vmatpush.bf16.msra.mxu0 %v3785
        %3809 = vmatmul.bf16.gmra.mxu0 %v3688
        %v3810 = vpop.f32.mrf.mxu0
        %v3811 = vadd.f32 0.0, %v3810
        %v3812 = vpop.f32.mrf.mxu0
        %v3813 = vadd.f32 0.0, %v3812
        %3814 = vmatmul.bf16.gmra.mxu0 %v3696
        %v3815 = vpop.f32.mrf.mxu0
        %v3816 = vadd.f32 0.0, %v3815
        %v3817 = vpop.f32.mrf.mxu0
        %v3818 = vadd.f32 0.0, %v3817
        %3819 = vmatmul.bf16.gmra.mxu0 %v3704
        %v3820 = vpop.f32.mrf.mxu0
        %v3821 = vadd.f32 0.0, %v3820
        %v3822 = vpop.f32.mrf.mxu0
        %v3823 = vadd.f32 0.0, %v3822
        %3824 = vmatmul.bf16.gmra.mxu0 %v3712
        %v3825 = vpop.f32.mrf.mxu0
        %v3826 = vadd.f32 0.0, %v3825
        %v3827 = vpop.f32.mrf.mxu0
        %v3828 = vadd.f32 0.0, %v3827
        %3829 = vmatmul.bf16.gmra.mxu0 %v3720
        %v3830 = vpop.f32.mrf.mxu0
        %v3831 = vadd.f32 0.0, %v3830
        %v3832 = vpop.f32.mrf.mxu0
        %v3833 = vadd.f32 0.0, %v3832
        %3834 = vmatmul.bf16.gmra.mxu0 %v3728
        %v3835 = vpop.f32.mrf.mxu0
        %v3836 = vadd.f32 0.0, %v3835
        %v3837 = vpop.f32.mrf.mxu0
        %v3838 = vadd.f32 0.0, %v3837
        %3839 = vmatmul.bf16.gmra.mxu0 %v3736
        %v3840 = vpop.f32.mrf.mxu0
        %v3841 = vadd.f32 0.0, %v3840
        %v3842 = vpop.f32.mrf.mxu0
        %v3843 = vadd.f32 0.0, %v3842
        %3844 = vmatmul.bf16.gmra.mxu0 %v3744
        %v3845 = vpop.f32.mrf.mxu0
        %v3846 = vadd.f32 0.0, %v3845
        %v3847 = vpop.f32.mrf.mxu0
        %v3848 = vadd.f32 0.0, %v3847
        %3849 = vdwg.mxu0
        %v3850 = vadd.f32 %v3584, %v3811
        %v3851 = vadd.f32 %v3585, %v3813
        %v3852 = vadd.f32 %v3586, %v3816
        %v3853 = vadd.f32 %v3587, %v3818
        %v3854 = vadd.f32 %v3588, %v3821
        %v3855 = vadd.f32 %v3589, %v3823
        %v3856 = vadd.f32 %v3590, %v3826
        %v3857 = vadd.f32 %v3591, %v3828
        %v3858 = vadd.f32 %v3592, %v3831
        %v3859 = vadd.f32 %v3593, %v3833
        %v3860 = vadd.f32 %v3594, %v3836
        %v3861 = vadd.f32 %v3595, %v3838
        %v3862 = vadd.f32 %v3596, %v3841
        %v3863 = vadd.f32 %v3597, %v3843
        %v3864 = vadd.f32 %v3598, %v3846
        %v3865 = vadd.f32 %v3599, %v3848
        %v3866 = vld [vmem:[%s343 + $0x10] sm:$0xe]
        %s3867 = scalar_lea.vmem [#allocation8], 1088
        %v3868 = vld [vmem:[%s3867] sm:$0xf]
        %v3869 = vld [vmem:[%s3867 + $0x4] sm:$0xf]
        %v3870 = vld [vmem:[%s3867 + $0x8] sm:$0xf]
        %v3871 = vld [vmem:[%s3867 + $0xc] sm:$0xf]
        %v3872 = vld [vmem:[%s3867 + $0x10] sm:$0xf]
        %v3873 = vld [vmem:[%s3867 + $0x14] sm:$0xf]
        %v3874 = vld [vmem:[%s3867 + $0x18] sm:$0xf]
        %v3875 = vld [vmem:[%s3867 + $0x1c] sm:$0xf]
        %v3876 = vld [vmem:[%s3867 + $0x20] sm:$0xf]
        %v3877 = vld [vmem:[%s3867 + $0x24] sm:$0xf]
        %v3878 = vld [vmem:[%s3867 + $0x28] sm:$0xf]
        %v3879 = vld [vmem:[%s3867 + $0x2c] sm:$0xf]
        %v3880 = vld [vmem:[%s3867 + $0x30] sm:$0xf]
        %v3881 = vld [vmem:[%s3867 + $0x34] sm:$0xf]
        %v3882 = vld [vmem:[%s3867 + $0x38] sm:$0xf]
        %v3883 = vld [vmem:[%s3867 + $0x3c] sm:$0xf]
        %v3885 = vunpack.c.l.b16 %v3866
        %v3886 = vpack.c.b16 %v3652, %v3885
        %v3887 = vrot.slane %v3886, 1
        %v3888 = vrot.slane %v3669, 1
        %v3889 = vsel %vm791, %v3887, %v3888
        %v3890 = vrot.slane %v3670, 1
        %v3891 = vsel %vm791, %v3888, %v3890
        %v3892 = vrot.slane %v3671, 1
        %v3893 = vsel %vm791, %v3890, %v3892
        %v3894 = vrot.slane %v3672, 1
        %v3895 = vsel %vm791, %v3892, %v3894
        %v3896 = vrot.slane %v3673, 1
        %v3897 = vsel %vm791, %v3894, %v3896
        %v3898 = vrot.slane %v3674, 1
        %v3899 = vsel %vm791, %v3896, %v3898
        %v3900 = vrot.slane %v3675, 1
        %v3901 = vsel %vm791, %v3898, %v3900
        %v3902 = vrot.slane %v3676, 1
        %v3903 = vsel %vm791, %v3900, %v3902
        %v3928 = vunpack.c.l.b16 %v3868
        %v3929 = vunpack.c.l.b16 %v3869
        %v3930 = vunpack.c.l.b16 %v3870
        %v3931 = vunpack.c.l.b16 %v3871
        %v3932 = vunpack.c.l.b16 %v3872
        %v3933 = vunpack.c.l.b16 %v3873
        %v3934 = vunpack.c.l.b16 %v3874
        %v3935 = vunpack.c.l.b16 %v3875
        %v3936 = vunpack.c.l.b16 %v3876
        %v3937 = vunpack.c.l.b16 %v3877
        %v3938 = vunpack.c.l.b16 %v3878
        %v3939 = vunpack.c.l.b16 %v3879
        %v3940 = vunpack.c.l.b16 %v3880
        %v3941 = vunpack.c.l.b16 %v3881
        %v3942 = vunpack.c.l.b16 %v3882
        %v3943 = vunpack.c.l.b16 %v3883
        %v3944 = vpack.c.b16 %v3929, %v3928
        %v3945 = vpack.c.b16 %v3931, %v3930
        %v3946 = vpack.c.b16 %v3933, %v3932
        %v3947 = vpack.c.b16 %v3935, %v3934
        %v3948 = vpack.c.b16 %v3937, %v3936
        %v3949 = vpack.c.b16 %v3939, %v3938
        %v3950 = vpack.c.b16 %v3941, %v3940
        %v3951 = vpack.c.b16 %v3943, %v3942
        %3960 = vmatpush.bf16.msra.mxu0 %v3951
        %3961 = vmatpush.bf16.msra.mxu0 %v3950
        %3962 = vmatpush.bf16.msra.mxu0 %v3949
        %3963 = vmatpush.bf16.msra.mxu0 %v3948
        %3964 = vmatpush.bf16.msra.mxu0 %v3947
        %3965 = vmatpush.bf16.msra.mxu0 %v3946
        %3966 = vmatpush.bf16.msra.mxu0 %v3945
        %3967 = vmatpush.bf16.msra.mxu0 %v3944
        %3968 = vmatmul.bf16.gmra.mxu0 %v3889
        %v3969 = vpop.f32.mrf.mxu0
        %v3970 = vadd.f32 0.0, %v3969
        %v3971 = vpop.f32.mrf.mxu0
        %v3972 = vadd.f32 0.0, %v3971
        %3973 = vmatmul.bf16.gmra.mxu0 %v3891
        %v3974 = vpop.f32.mrf.mxu0
        %v3975 = vadd.f32 0.0, %v3974
        %v3976 = vpop.f32.mrf.mxu0
        %v3977 = vadd.f32 0.0, %v3976
        %3978 = vmatmul.bf16.gmra.mxu0 %v3893
        %v3979 = vpop.f32.mrf.mxu0
        %v3980 = vadd.f32 0.0, %v3979
        %v3981 = vpop.f32.mrf.mxu0
        %v3982 = vadd.f32 0.0, %v3981
        %3983 = vmatmul.bf16.gmra.mxu0 %v3895
        %v3984 = vpop.f32.mrf.mxu0
        %v3985 = vadd.f32 0.0, %v3984
        %v3986 = vpop.f32.mrf.mxu0
        %v3987 = vadd.f32 0.0, %v3986
        %3988 = vmatmul.bf16.gmra.mxu0 %v3897
        %v3989 = vpop.f32.mrf.mxu0
        %v3990 = vadd.f32 0.0, %v3989
        %v3991 = vpop.f32.mrf.mxu0
        %v3992 = vadd.f32 0.0, %v3991
        %3993 = vmatmul.bf16.gmra.mxu0 %v3899
        %v3994 = vpop.f32.mrf.mxu0
        %v3995 = vadd.f32 0.0, %v3994
        %v3996 = vpop.f32.mrf.mxu0
        %v3997 = vadd.f32 0.0, %v3996
        %3998 = vmatmul.bf16.gmra.mxu0 %v3901
        %v3999 = vpop.f32.mrf.mxu0
        %v4000 = vadd.f32 0.0, %v3999
        %v4001 = vpop.f32.mrf.mxu0
        %v4002 = vadd.f32 0.0, %v4001
        %4003 = vmatmul.bf16.gmra.mxu0 %v3903
        %v4004 = vpop.f32.mrf.mxu0
        %v4005 = vadd.f32 0.0, %v4004
        %v4006 = vpop.f32.mrf.mxu0
        %v4007 = vadd.f32 0.0, %v4006
        %4008 = vdwg.mxu0
        %v4009 = vadd.f32 %v3850, %v3970
        %v4010 = vadd.f32 %v3851, %v3972
        %v4011 = vadd.f32 %v3852, %v3975
        %v4012 = vadd.f32 %v3853, %v3977
        %v4013 = vadd.f32 %v3854, %v3980
        %v4014 = vadd.f32 %v3855, %v3982
        %v4015 = vadd.f32 %v3856, %v3985
        %v4016 = vadd.f32 %v3857, %v3987
        %v4017 = vadd.f32 %v3858, %v3990
        %v4018 = vadd.f32 %v3859, %v3992
        %v4019 = vadd.f32 %v3860, %v3995
        %v4020 = vadd.f32 %v3861, %v3997
        %v4021 = vadd.f32 %v3862, %v4000
        %v4022 = vadd.f32 %v3863, %v4002
        %v4023 = vadd.f32 %v3864, %v4005
        %v4024 = vadd.f32 %v3865, %v4007
        %v4025 = vld [vmem:[%s353] sm:$0xf]
        %v4026 = vld [vmem:[%s353 + $0x4] sm:$0xf]
        %v4027 = vld [vmem:[%s353 + $0x8] sm:$0xf]
        %v4028 = vld [vmem:[%s353 + $0xc] sm:$0xf]
        %v4029 = vld [vmem:[%s353 + $0x10] sm:$0xf]
        %v4030 = vld [vmem:[%s353 + $0x14] sm:$0xf]
        %v4031 = vld [vmem:[%s353 + $0x18] sm:$0xf]
        %v4032 = vld [vmem:[%s353 + $0x1c] sm:$0xf]
        %v4033 = vld [vmem:[%s353 + $0x20] sm:$0xf]
        %v4034 = vld [vmem:[%s353 + $0x24] sm:$0xf]
        %v4035 = vld [vmem:[%s353 + $0x28] sm:$0xf]
        %v4036 = vld [vmem:[%s353 + $0x2c] sm:$0xf]
        %v4037 = vld [vmem:[%s353 + $0x30] sm:$0xf]
        %v4038 = vld [vmem:[%s353 + $0x34] sm:$0xf]
        %v4039 = vld [vmem:[%s353 + $0x38] sm:$0xf]
        %v4040 = vld [vmem:[%s353 + $0x3c] sm:$0xf]
        %s4041 = scalar_lea.vmem [#allocation8], 1152
        %v4042 = vld [vmem:[%s4041] sm:$0xf]
        %v4043 = vld [vmem:[%s4041 + $0x4] sm:$0xf]
        %v4044 = vld [vmem:[%s4041 + $0x8] sm:$0xf]
        %v4045 = vld [vmem:[%s4041 + $0xc] sm:$0xf]
        %v4046 = vld [vmem:[%s4041 + $0x10] sm:$0xf]
        %v4047 = vld [vmem:[%s4041 + $0x14] sm:$0xf]
        %v4048 = vld [vmem:[%s4041 + $0x18] sm:$0xf]
        %v4049 = vld [vmem:[%s4041 + $0x1c] sm:$0xf]
        %v4050 = vld [vmem:[%s4041 + $0x20] sm:$0xf]
        %v4051 = vld [vmem:[%s4041 + $0x24] sm:$0xf]
        %v4052 = vld [vmem:[%s4041 + $0x28] sm:$0xf]
        %v4053 = vld [vmem:[%s4041 + $0x2c] sm:$0xf]
        %v4054 = vld [vmem:[%s4041 + $0x30] sm:$0xf]
        %v4055 = vld [vmem:[%s4041 + $0x34] sm:$0xf]
        %v4056 = vld [vmem:[%s4041 + $0x38] sm:$0xf]
        %v4057 = vld [vmem:[%s4041 + $0x3c] sm:$0xf]
        %v4074 = vunpack.c.l.b16 %v4025
        %v4075 = vunpack.c.l.b16 %v4026
        %v4076 = vunpack.c.l.b16 %v4027
        %v4077 = vunpack.c.l.b16 %v4028
        %v4078 = vunpack.c.l.b16 %v4029
        %v4079 = vunpack.c.l.b16 %v4030
        %v4080 = vunpack.c.l.b16 %v4031
        %v4081 = vunpack.c.l.b16 %v4032
        %v4082 = vunpack.c.l.b16 %v4033
        %v4083 = vunpack.c.l.b16 %v4034
        %v4084 = vunpack.c.l.b16 %v4035
        %v4085 = vunpack.c.l.b16 %v4036
        %v4086 = vunpack.c.l.b16 %v4037
        %v4087 = vunpack.c.l.b16 %v4038
        %v4088 = vunpack.c.l.b16 %v4039
        %v4089 = vunpack.c.l.b16 %v4040
        %v4090 = vpack.c.b16 %v4075, %v4074
        %v4091 = vpack.c.b16 %v4077, %v4076
        %v4092 = vpack.c.b16 %v4079, %v4078
        %v4093 = vpack.c.b16 %v4081, %v4080
        %v4094 = vpack.c.b16 %v4083, %v4082
        %v4095 = vpack.c.b16 %v4085, %v4084
        %v4096 = vpack.c.b16 %v4087, %v4086
        %v4097 = vpack.c.b16 %v4089, %v4088
        %v4122 = vunpack.c.l.b16 %v4042
        %v4123 = vunpack.c.l.b16 %v4043
        %v4124 = vunpack.c.l.b16 %v4044
        %v4125 = vunpack.c.l.b16 %v4045
        %v4126 = vunpack.c.l.b16 %v4046
        %v4127 = vunpack.c.l.b16 %v4047
        %v4128 = vunpack.c.l.b16 %v4048
        %v4129 = vunpack.c.l.b16 %v4049
        %v4130 = vunpack.c.l.b16 %v4050
        %v4131 = vunpack.c.l.b16 %v4051
        %v4132 = vunpack.c.l.b16 %v4052
        %v4133 = vunpack.c.l.b16 %v4053
        %v4134 = vunpack.c.l.b16 %v4054
        %v4135 = vunpack.c.l.b16 %v4055
        %v4136 = vunpack.c.l.b16 %v4056
        %v4137 = vunpack.c.l.b16 %v4057
        %v4138 = vpack.c.b16 %v4123, %v4122
        %v4139 = vpack.c.b16 %v4125, %v4124
        %v4140 = vpack.c.b16 %v4127, %v4126
        %v4141 = vpack.c.b16 %v4129, %v4128
        %v4142 = vpack.c.b16 %v4131, %v4130
        %v4143 = vpack.c.b16 %v4133, %v4132
        %v4144 = vpack.c.b16 %v4135, %v4134
        %v4145 = vpack.c.b16 %v4137, %v4136
        %4154 = vmatpush.bf16.msra.mxu0 %v4145
        %4155 = vmatpush.bf16.msra.mxu0 %v4144
        %4156 = vmatpush.bf16.msra.mxu0 %v4143
        %4157 = vmatpush.bf16.msra.mxu0 %v4142
        %4158 = vmatpush.bf16.msra.mxu0 %v4141
        %4159 = vmatpush.bf16.msra.mxu0 %v4140
        %4160 = vmatpush.bf16.msra.mxu0 %v4139
        %4161 = vmatpush.bf16.msra.mxu0 %v4138
        %4162 = vmatmul.bf16.gmra.mxu0 %v4090
        %v4163 = vpop.f32.mrf.mxu0
        %v4164 = vadd.f32 0.0, %v4163
        %v4165 = vpop.f32.mrf.mxu0
        %v4166 = vadd.f32 0.0, %v4165
        %4167 = vmatmul.bf16.gmra.mxu0 %v4091
        %v4168 = vpop.f32.mrf.mxu0
        %v4169 = vadd.f32 0.0, %v4168
        %v4170 = vpop.f32.mrf.mxu0
        %v4171 = vadd.f32 0.0, %v4170
        %4172 = vmatmul.bf16.gmra.mxu0 %v4092
        %v4173 = vpop.f32.mrf.mxu0
        %v4174 = vadd.f32 0.0, %v4173
        %v4175 = vpop.f32.mrf.mxu0
        %v4176 = vadd.f32 0.0, %v4175
        %4177 = vmatmul.bf16.gmra.mxu0 %v4093
        %v4178 = vpop.f32.mrf.mxu0
        %v4179 = vadd.f32 0.0, %v4178
        %v4180 = vpop.f32.mrf.mxu0
        %v4181 = vadd.f32 0.0, %v4180
        %4182 = vmatmul.bf16.gmra.mxu0 %v4094
        %v4183 = vpop.f32.mrf.mxu0
        %v4184 = vadd.f32 0.0, %v4183
        %v4185 = vpop.f32.mrf.mxu0
        %v4186 = vadd.f32 0.0, %v4185
        %4187 = vmatmul.bf16.gmra.mxu0 %v4095
        %v4188 = vpop.f32.mrf.mxu0
        %v4189 = vadd.f32 0.0, %v4188
        %v4190 = vpop.f32.mrf.mxu0
        %v4191 = vadd.f32 0.0, %v4190
        %4192 = vmatmul.bf16.gmra.mxu0 %v4096
        %v4193 = vpop.f32.mrf.mxu0
        %v4194 = vadd.f32 0.0, %v4193
        %v4195 = vpop.f32.mrf.mxu0
        %v4196 = vadd.f32 0.0, %v4195
        %4197 = vmatmul.bf16.gmra.mxu0 %v4097
        %v4198 = vpop.f32.mrf.mxu0
        %v4199 = vadd.f32 0.0, %v4198
        %v4200 = vpop.f32.mrf.mxu0
        %v4201 = vadd.f32 0.0, %v4200
        %4202 = vdwg.mxu0
        %v4203 = vadd.f32 %v4009, %v4164
        %v4204 = vadd.f32 %v4010, %v4166
        %v4205 = vadd.f32 %v4011, %v4169
        %v4206 = vadd.f32 %v4012, %v4171
        %v4207 = vadd.f32 %v4013, %v4174
        %v4208 = vadd.f32 %v4014, %v4176
        %v4209 = vadd.f32 %v4015, %v4179
        %v4210 = vadd.f32 %v4016, %v4181
        %v4211 = vadd.f32 %v4017, %v4184
        %v4212 = vadd.f32 %v4018, %v4186
        %v4213 = vadd.f32 %v4019, %v4189
        %v4214 = vadd.f32 %v4020, %v4191
        %v4215 = vadd.f32 %v4021, %v4194
        %v4216 = vadd.f32 %v4022, %v4196
        %v4217 = vadd.f32 %v4023, %v4199
        %v4218 = vadd.f32 %v4024, %v4201
        %v4219 = vld [vmem:[%s353] sm:$0xf]
        %v4220 = vld [vmem:[%s353 + $0x4] sm:$0xf]
        %v4221 = vld [vmem:[%s353 + $0x8] sm:$0xf]
        %v4222 = vld [vmem:[%s353 + $0xc] sm:$0xf]
        %v4223 = vld [vmem:[%s353 + $0x10] sm:$0xf]
        %v4224 = vld [vmem:[%s353 + $0x14] sm:$0xf]
        %v4225 = vld [vmem:[%s353 + $0x18] sm:$0xf]
        %v4226 = vld [vmem:[%s353 + $0x1c] sm:$0xf]
        %v4227 = vld [vmem:[%s353 + $0x20] sm:$0xf]
        %v4228 = vld [vmem:[%s353 + $0x24] sm:$0xf]
        %v4229 = vld [vmem:[%s353 + $0x28] sm:$0xf]
        %v4230 = vld [vmem:[%s353 + $0x2c] sm:$0xf]
        %v4231 = vld [vmem:[%s353 + $0x30] sm:$0xf]
        %v4232 = vld [vmem:[%s353 + $0x34] sm:$0xf]
        %v4233 = vld [vmem:[%s353 + $0x38] sm:$0xf]
        %v4234 = vld [vmem:[%s353 + $0x3c] sm:$0xf]
        %v4235 = vld [vmem:[%s353 + $0x40] sm:$0x1]
        %s4236 = scalar_lea.vmem [#allocation8], 1216
        %v4237 = vld [vmem:[%s4236] sm:$0xf]
        %v4238 = vld [vmem:[%s4236 + $0x4] sm:$0xf]
        %v4239 = vld [vmem:[%s4236 + $0x8] sm:$0xf]
        %v4240 = vld [vmem:[%s4236 + $0xc] sm:$0xf]
        %v4241 = vld [vmem:[%s4236 + $0x10] sm:$0xf]
        %v4242 = vld [vmem:[%s4236 + $0x14] sm:$0xf]
        %v4243 = vld [vmem:[%s4236 + $0x18] sm:$0xf]
        %v4244 = vld [vmem:[%s4236 + $0x1c] sm:$0xf]
        %v4245 = vld [vmem:[%s4236 + $0x20] sm:$0xf]
        %v4246 = vld [vmem:[%s4236 + $0x24] sm:$0xf]
        %v4247 = vld [vmem:[%s4236 + $0x28] sm:$0xf]
        %v4248 = vld [vmem:[%s4236 + $0x2c] sm:$0xf]
        %v4249 = vld [vmem:[%s4236 + $0x30] sm:$0xf]
        %v4250 = vld [vmem:[%s4236 + $0x34] sm:$0xf]
        %v4251 = vld [vmem:[%s4236 + $0x38] sm:$0xf]
        %v4252 = vld [vmem:[%s4236 + $0x3c] sm:$0xf]
        %v4270 = vunpack.c.l.b16 %v4219
        %v4271 = vunpack.c.l.b16 %v4220
        %v4272 = vunpack.c.l.b16 %v4221
        %v4273 = vunpack.c.l.b16 %v4222
        %v4274 = vunpack.c.l.b16 %v4223
        %v4275 = vunpack.c.l.b16 %v4224
        %v4276 = vunpack.c.l.b16 %v4225
        %v4277 = vunpack.c.l.b16 %v4226
        %v4278 = vunpack.c.l.b16 %v4227
        %v4279 = vunpack.c.l.b16 %v4228
        %v4280 = vunpack.c.l.b16 %v4229
        %v4281 = vunpack.c.l.b16 %v4230
        %v4282 = vunpack.c.l.b16 %v4231
        %v4283 = vunpack.c.l.b16 %v4232
        %v4284 = vunpack.c.l.b16 %v4233
        %v4285 = vunpack.c.l.b16 %v4234
        %v4286 = vunpack.c.l.b16 %v4235
        %v4287 = vpack.c.b16 %v4271, %v4270
        %v4288 = vpack.c.b16 %v4273, %v4272
        %v4289 = vpack.c.b16 %v4275, %v4274
        %v4290 = vpack.c.b16 %v4277, %v4276
        %v4291 = vpack.c.b16 %v4279, %v4278
        %v4292 = vpack.c.b16 %v4281, %v4280
        %v4293 = vpack.c.b16 %v4283, %v4282
        %v4294 = vpack.c.b16 %v4285, %v4284
        %v4295 = vpack.c.b16 %v4286, %v4286
        %v4297 = vshrl.u32 %v4287, 16
        %v4299 = vshll.u32 %v4287, 16
        %v4301 = vrot.slane %v4299, 1
        %v4302 = vor.u32 %v4297, %v4301
        %v4304 = vshll.u32 %v4288, 16
        %v4306 = vrot.slane %v4304, 1
        %v4307 = vsel %vm491, %v4302, %v4306
        %v4308 = vshrl.u32 %v4288, 16
        %v4310 = vor.u32 %v4308, %v4306
        %v4312 = vshll.u32 %v4289, 16
        %v4314 = vrot.slane %v4312, 1
        %v4315 = vsel %vm491, %v4310, %v4314
        %v4316 = vshrl.u32 %v4289, 16
        %v4318 = vor.u32 %v4316, %v4314
        %v4320 = vshll.u32 %v4290, 16
        %v4322 = vrot.slane %v4320, 1
        %v4323 = vsel %vm491, %v4318, %v4322
        %v4324 = vshrl.u32 %v4290, 16
        %v4326 = vor.u32 %v4324, %v4322
        %v4328 = vshll.u32 %v4291, 16
        %v4330 = vrot.slane %v4328, 1
        %v4331 = vsel %vm491, %v4326, %v4330
        %v4332 = vshrl.u32 %v4291, 16
        %v4334 = vor.u32 %v4332, %v4330
        %v4336 = vshll.u32 %v4292, 16
        %v4338 = vrot.slane %v4336, 1
        %v4339 = vsel %vm491, %v4334, %v4338
        %v4340 = vshrl.u32 %v4292, 16
        %v4342 = vor.u32 %v4340, %v4338
        %v4344 = vshll.u32 %v4293, 16
        %v4346 = vrot.slane %v4344, 1
        %v4347 = vsel %vm491, %v4342, %v4346
        %v4348 = vshrl.u32 %v4293, 16
        %v4350 = vor.u32 %v4348, %v4346
        %v4352 = vshll.u32 %v4294, 16
        %v4354 = vrot.slane %v4352, 1
        %v4355 = vsel %vm491, %v4350, %v4354
        %v4356 = vshrl.u32 %v4294, 16
        %v4358 = vor.u32 %v4356, %v4354
        %v4360 = vshll.u32 %v4295, 16
        %v4362 = vrot.slane %v4360, 1
        %v4363 = vsel %vm491, %v4358, %v4362
        %v4388 = vunpack.c.l.b16 %v4237
        %v4389 = vunpack.c.l.b16 %v4238
        %v4390 = vunpack.c.l.b16 %v4239
        %v4391 = vunpack.c.l.b16 %v4240
        %v4392 = vunpack.c.l.b16 %v4241
        %v4393 = vunpack.c.l.b16 %v4242
        %v4394 = vunpack.c.l.b16 %v4243
        %v4395 = vunpack.c.l.b16 %v4244
        %v4396 = vunpack.c.l.b16 %v4245
        %v4397 = vunpack.c.l.b16 %v4246
        %v4398 = vunpack.c.l.b16 %v4247
        %v4399 = vunpack.c.l.b16 %v4248
        %v4400 = vunpack.c.l.b16 %v4249
        %v4401 = vunpack.c.l.b16 %v4250
        %v4402 = vunpack.c.l.b16 %v4251
        %v4403 = vunpack.c.l.b16 %v4252
        %v4404 = vpack.c.b16 %v4389, %v4388
        %v4405 = vpack.c.b16 %v4391, %v4390
        %v4406 = vpack.c.b16 %v4393, %v4392
        %v4407 = vpack.c.b16 %v4395, %v4394
        %v4408 = vpack.c.b16 %v4397, %v4396
        %v4409 = vpack.c.b16 %v4399, %v4398
        %v4410 = vpack.c.b16 %v4401, %v4400
        %v4411 = vpack.c.b16 %v4403, %v4402
        %4420 = vmatpush.bf16.msra.mxu0 %v4411
        %4421 = vmatpush.bf16.msra.mxu0 %v4410
        %4422 = vmatpush.bf16.msra.mxu0 %v4409
        %4423 = vmatpush.bf16.msra.mxu0 %v4408
        %4424 = vmatpush.bf16.msra.mxu0 %v4407
        %4425 = vmatpush.bf16.msra.mxu0 %v4406
        %4426 = vmatpush.bf16.msra.mxu0 %v4405
        %4427 = vmatpush.bf16.msra.mxu0 %v4404
        %4428 = vmatmul.bf16.gmra.mxu0 %v4307
        %v4429 = vpop.f32.mrf.mxu0
        %v4430 = vadd.f32 0.0, %v4429
        %v4431 = vpop.f32.mrf.mxu0
        %v4432 = vadd.f32 0.0, %v4431
        %4433 = vmatmul.bf16.gmra.mxu0 %v4315
        %v4434 = vpop.f32.mrf.mxu0
        %v4435 = vadd.f32 0.0, %v4434
        %v4436 = vpop.f32.mrf.mxu0
        %v4437 = vadd.f32 0.0, %v4436
        %4438 = vmatmul.bf16.gmra.mxu0 %v4323
        %v4439 = vpop.f32.mrf.mxu0
        %v4440 = vadd.f32 0.0, %v4439
        %v4441 = vpop.f32.mrf.mxu0
        %v4442 = vadd.f32 0.0, %v4441
        %4443 = vmatmul.bf16.gmra.mxu0 %v4331
        %v4444 = vpop.f32.mrf.mxu0
        %v4445 = vadd.f32 0.0, %v4444
        %v4446 = vpop.f32.mrf.mxu0
        %v4447 = vadd.f32 0.0, %v4446
        %4448 = vmatmul.bf16.gmra.mxu0 %v4339
        %v4449 = vpop.f32.mrf.mxu0
        %v4450 = vadd.f32 0.0, %v4449
        %v4451 = vpop.f32.mrf.mxu0
        %v4452 = vadd.f32 0.0, %v4451
        %4453 = vmatmul.bf16.gmra.mxu0 %v4347
        %v4454 = vpop.f32.mrf.mxu0
        %v4455 = vadd.f32 0.0, %v4454
        %v4456 = vpop.f32.mrf.mxu0
        %v4457 = vadd.f32 0.0, %v4456
        %4458 = vmatmul.bf16.gmra.mxu0 %v4355
        %v4459 = vpop.f32.mrf.mxu0
        %v4460 = vadd.f32 0.0, %v4459
        %v4461 = vpop.f32.mrf.mxu0
        %v4462 = vadd.f32 0.0, %v4461
        %4463 = vmatmul.bf16.gmra.mxu0 %v4363
        %v4464 = vpop.f32.mrf.mxu0
        %v4465 = vadd.f32 0.0, %v4464
        %v4466 = vpop.f32.mrf.mxu0
        %v4467 = vadd.f32 0.0, %v4466
        %4468 = vdwg.mxu0
        %v4469 = vadd.f32 %v4203, %v4430
        %v4470 = vadd.f32 %v4204, %v4432
        %v4471 = vadd.f32 %v4205, %v4435
        %v4472 = vadd.f32 %v4206, %v4437
        %v4473 = vadd.f32 %v4207, %v4440
        %v4474 = vadd.f32 %v4208, %v4442
        %v4475 = vadd.f32 %v4209, %v4445
        %v4476 = vadd.f32 %v4210, %v4447
        %v4477 = vadd.f32 %v4211, %v4450
        %v4478 = vadd.f32 %v4212, %v4452
        %v4479 = vadd.f32 %v4213, %v4455
        %v4480 = vadd.f32 %v4214, %v4457
        %v4481 = vadd.f32 %v4215, %v4460
        %v4482 = vadd.f32 %v4216, %v4462
        %v4483 = vadd.f32 %v4217, %v4465
        %v4484 = vadd.f32 %v4218, %v4467
        %v4485 = vld [vmem:[%s353] sm:$0xe]
        %s4486 = scalar_lea.vmem [#allocation8], 1280
        %v4487 = vld [vmem:[%s4486] sm:$0xf]
        %v4488 = vld [vmem:[%s4486 + $0x4] sm:$0xf]
        %v4489 = vld [vmem:[%s4486 + $0x8] sm:$0xf]
        %v4490 = vld [vmem:[%s4486 + $0xc] sm:$0xf]
        %v4491 = vld [vmem:[%s4486 + $0x10] sm:$0xf]
        %v4492 = vld [vmem:[%s4486 + $0x14] sm:$0xf]
        %v4493 = vld [vmem:[%s4486 + $0x18] sm:$0xf]
        %v4494 = vld [vmem:[%s4486 + $0x1c] sm:$0xf]
        %v4495 = vld [vmem:[%s4486 + $0x20] sm:$0xf]
        %v4496 = vld [vmem:[%s4486 + $0x24] sm:$0xf]
        %v4497 = vld [vmem:[%s4486 + $0x28] sm:$0xf]
        %v4498 = vld [vmem:[%s4486 + $0x2c] sm:$0xf]
        %v4499 = vld [vmem:[%s4486 + $0x30] sm:$0xf]
        %v4500 = vld [vmem:[%s4486 + $0x34] sm:$0xf]
        %v4501 = vld [vmem:[%s4486 + $0x38] sm:$0xf]
        %v4502 = vld [vmem:[%s4486 + $0x3c] sm:$0xf]
        %v4504 = vunpack.c.l.b16 %v4485
        %v4505 = vpack.c.b16 %v4271, %v4504
        %v4506 = vrot.slane %v4505, 1
        %v4507 = vrot.slane %v4288, 1
        %v4508 = vsel %vm791, %v4506, %v4507
        %v4509 = vrot.slane %v4289, 1
        %v4510 = vsel %vm791, %v4507, %v4509
        %v4511 = vrot.slane %v4290, 1
        %v4512 = vsel %vm791, %v4509, %v4511
        %v4513 = vrot.slane %v4291, 1
        %v4514 = vsel %vm791, %v4511, %v4513
        %v4515 = vrot.slane %v4292, 1
        %v4516 = vsel %vm791, %v4513, %v4515
        %v4517 = vrot.slane %v4293, 1
        %v4518 = vsel %vm791, %v4515, %v4517
        %v4519 = vrot.slane %v4294, 1
        %v4520 = vsel %vm791, %v4517, %v4519
        %v4521 = vrot.slane %v4295, 1
        %v4522 = vsel %vm791, %v4519, %v4521
        %v4547 = vunpack.c.l.b16 %v4487
        %v4548 = vunpack.c.l.b16 %v4488
        %v4549 = vunpack.c.l.b16 %v4489
        %v4550 = vunpack.c.l.b16 %v4490
        %v4551 = vunpack.c.l.b16 %v4491
        %v4552 = vunpack.c.l.b16 %v4492
        %v4553 = vunpack.c.l.b16 %v4493
        %v4554 = vunpack.c.l.b16 %v4494
        %v4555 = vunpack.c.l.b16 %v4495
        %v4556 = vunpack.c.l.b16 %v4496
        %v4557 = vunpack.c.l.b16 %v4497
        %v4558 = vunpack.c.l.b16 %v4498
        %v4559 = vunpack.c.l.b16 %v4499
        %v4560 = vunpack.c.l.b16 %v4500
        %v4561 = vunpack.c.l.b16 %v4501
        %v4562 = vunpack.c.l.b16 %v4502
        %v4563 = vpack.c.b16 %v4548, %v4547
        %v4564 = vpack.c.b16 %v4550, %v4549
        %v4565 = vpack.c.b16 %v4552, %v4551
        %v4566 = vpack.c.b16 %v4554, %v4553
        %v4567 = vpack.c.b16 %v4556, %v4555
        %v4568 = vpack.c.b16 %v4558, %v4557
        %v4569 = vpack.c.b16 %v4560, %v4559
        %v4570 = vpack.c.b16 %v4562, %v4561
        %4579 = vmatpush.bf16.msra.mxu0 %v4570
        %4580 = vmatpush.bf16.msra.mxu0 %v4569
        %4581 = vmatpush.bf16.msra.mxu0 %v4568
        %4582 = vmatpush.bf16.msra.mxu0 %v4567
        %4583 = vmatpush.bf16.msra.mxu0 %v4566
        %4584 = vmatpush.bf16.msra.mxu0 %v4565
        %4585 = vmatpush.bf16.msra.mxu0 %v4564
        %4586 = vmatpush.bf16.msra.mxu0 %v4563
        %4587 = vmatmul.bf16.gmra.mxu0 %v4508
        %v4588 = vpop.f32.mrf.mxu0
        %v4589 = vadd.f32 0.0, %v4588
        %v4590 = vpop.f32.mrf.mxu0
        %v4591 = vadd.f32 0.0, %v4590
        %4592 = vmatmul.bf16.gmra.mxu0 %v4510
        %v4593 = vpop.f32.mrf.mxu0
        %v4594 = vadd.f32 0.0, %v4593
        %v4595 = vpop.f32.mrf.mxu0
        %v4596 = vadd.f32 0.0, %v4595
        %4597 = vmatmul.bf16.gmra.mxu0 %v4512
        %v4598 = vpop.f32.mrf.mxu0
        %v4599 = vadd.f32 0.0, %v4598
        %v4600 = vpop.f32.mrf.mxu0
        %v4601 = vadd.f32 0.0, %v4600
        %4602 = vmatmul.bf16.gmra.mxu0 %v4514
        %v4603 = vpop.f32.mrf.mxu0
        %v4604 = vadd.f32 0.0, %v4603
        %v4605 = vpop.f32.mrf.mxu0
        %v4606 = vadd.f32 0.0, %v4605
        %4607 = vmatmul.bf16.gmra.mxu0 %v4516
        %v4608 = vpop.f32.mrf.mxu0
        %v4609 = vadd.f32 0.0, %v4608
        %v4610 = vpop.f32.mrf.mxu0
        %v4611 = vadd.f32 0.0, %v4610
        %4612 = vmatmul.bf16.gmra.mxu0 %v4518
        %v4613 = vpop.f32.mrf.mxu0
        %v4614 = vadd.f32 0.0, %v4613
        %v4615 = vpop.f32.mrf.mxu0
        %v4616 = vadd.f32 0.0, %v4615
        %4617 = vmatmul.bf16.gmra.mxu0 %v4520
        %v4618 = vpop.f32.mrf.mxu0
        %v4619 = vadd.f32 0.0, %v4618
        %v4620 = vpop.f32.mrf.mxu0
        %v4621 = vadd.f32 0.0, %v4620
        %4622 = vmatmul.bf16.gmra.mxu0 %v4522
        %v4623 = vpop.f32.mrf.mxu0
        %v4624 = vadd.f32 0.0, %v4623
        %v4625 = vpop.f32.mrf.mxu0
        %v4626 = vadd.f32 0.0, %v4625
        %4627 = vdwg.mxu0
        %v4628 = vadd.f32 %v4469, %v4589
        %v4629 = vadd.f32 %v4470, %v4591
        %v4630 = vadd.f32 %v4471, %v4594
        %v4631 = vadd.f32 %v4472, %v4596
        %v4632 = vadd.f32 %v4473, %v4599
        %v4633 = vadd.f32 %v4474, %v4601
        %v4634 = vadd.f32 %v4475, %v4604
        %v4635 = vadd.f32 %v4476, %v4606
        %v4636 = vadd.f32 %v4477, %v4609
        %v4637 = vadd.f32 %v4478, %v4611
        %v4638 = vadd.f32 %v4479, %v4614
        %v4639 = vadd.f32 %v4480, %v4616
        %v4640 = vadd.f32 %v4481, %v4619
        %v4641 = vadd.f32 %v4482, %v4621
        %v4642 = vadd.f32 %v4483, %v4624
        %v4643 = vadd.f32 %v4484, %v4626
        %v4644 = vld [vmem:[%s353 + $0x8] sm:$0xf]
        %v4645 = vld [vmem:[%s353 + $0xc] sm:$0xf]
        %v4646 = vld [vmem:[%s353 + $0x10] sm:$0xf]
        %v4647 = vld [vmem:[%s353 + $0x14] sm:$0xf]
        %v4648 = vld [vmem:[%s353 + $0x18] sm:$0xf]
        %v4649 = vld [vmem:[%s353 + $0x1c] sm:$0xf]
        %v4650 = vld [vmem:[%s353 + $0x20] sm:$0xf]
        %v4651 = vld [vmem:[%s353 + $0x24] sm:$0xf]
        %v4652 = vld [vmem:[%s353 + $0x28] sm:$0xf]
        %v4653 = vld [vmem:[%s353 + $0x2c] sm:$0xf]
        %v4654 = vld [vmem:[%s353 + $0x30] sm:$0xf]
        %v4655 = vld [vmem:[%s353 + $0x34] sm:$0xf]
        %v4656 = vld [vmem:[%s353 + $0x38] sm:$0xf]
        %v4657 = vld [vmem:[%s353 + $0x3c] sm:$0xf]
        %v4658 = vld [vmem:[%s353 + $0x40] sm:$0xf]
        %v4659 = vld [vmem:[%s353 + $0x44] sm:$0xf]
        %s4660 = scalar_lea.vmem [#allocation8], 1344
        %v4661 = vld [vmem:[%s4660] sm:$0xf]
        %v4662 = vld [vmem:[%s4660 + $0x4] sm:$0xf]
        %v4663 = vld [vmem:[%s4660 + $0x8] sm:$0xf]
        %v4664 = vld [vmem:[%s4660 + $0xc] sm:$0xf]
        %v4665 = vld [vmem:[%s4660 + $0x10] sm:$0xf]
        %v4666 = vld [vmem:[%s4660 + $0x14] sm:$0xf]
        %v4667 = vld [vmem:[%s4660 + $0x18] sm:$0xf]
        %v4668 = vld [vmem:[%s4660 + $0x1c] sm:$0xf]
        %v4669 = vld [vmem:[%s4660 + $0x20] sm:$0xf]
        %v4670 = vld [vmem:[%s4660 + $0x24] sm:$0xf]
        %v4671 = vld [vmem:[%s4660 + $0x28] sm:$0xf]
        %v4672 = vld [vmem:[%s4660 + $0x2c] sm:$0xf]
        %v4673 = vld [vmem:[%s4660 + $0x30] sm:$0xf]
        %v4674 = vld [vmem:[%s4660 + $0x34] sm:$0xf]
        %v4675 = vld [vmem:[%s4660 + $0x38] sm:$0xf]
        %v4676 = vld [vmem:[%s4660 + $0x3c] sm:$0xf]
        %v4693 = vunpack.c.l.b16 %v4644
        %v4694 = vunpack.c.l.b16 %v4645
        %v4695 = vunpack.c.l.b16 %v4646
        %v4696 = vunpack.c.l.b16 %v4647
        %v4697 = vunpack.c.l.b16 %v4648
        %v4698 = vunpack.c.l.b16 %v4649
        %v4699 = vunpack.c.l.b16 %v4650
        %v4700 = vunpack.c.l.b16 %v4651
        %v4701 = vunpack.c.l.b16 %v4652
        %v4702 = vunpack.c.l.b16 %v4653
        %v4703 = vunpack.c.l.b16 %v4654
        %v4704 = vunpack.c.l.b16 %v4655
        %v4705 = vunpack.c.l.b16 %v4656
        %v4706 = vunpack.c.l.b16 %v4657
        %v4707 = vunpack.c.l.b16 %v4658
        %v4708 = vunpack.c.l.b16 %v4659
        %v4709 = vpack.c.b16 %v4694, %v4693
        %v4710 = vpack.c.b16 %v4696, %v4695
        %v4711 = vpack.c.b16 %v4698, %v4697
        %v4712 = vpack.c.b16 %v4700, %v4699
        %v4713 = vpack.c.b16 %v4702, %v4701
        %v4714 = vpack.c.b16 %v4704, %v4703
        %v4715 = vpack.c.b16 %v4706, %v4705
        %v4716 = vpack.c.b16 %v4708, %v4707
        %v4741 = vunpack.c.l.b16 %v4661
        %v4742 = vunpack.c.l.b16 %v4662
        %v4743 = vunpack.c.l.b16 %v4663
        %v4744 = vunpack.c.l.b16 %v4664
        %v4745 = vunpack.c.l.b16 %v4665
        %v4746 = vunpack.c.l.b16 %v4666
        %v4747 = vunpack.c.l.b16 %v4667
        %v4748 = vunpack.c.l.b16 %v4668
        %v4749 = vunpack.c.l.b16 %v4669
        %v4750 = vunpack.c.l.b16 %v4670
        %v4751 = vunpack.c.l.b16 %v4671
        %v4752 = vunpack.c.l.b16 %v4672
        %v4753 = vunpack.c.l.b16 %v4673
        %v4754 = vunpack.c.l.b16 %v4674
        %v4755 = vunpack.c.l.b16 %v4675
        %v4756 = vunpack.c.l.b16 %v4676
        %v4757 = vpack.c.b16 %v4742, %v4741
        %v4758 = vpack.c.b16 %v4744, %v4743
        %v4759 = vpack.c.b16 %v4746, %v4745
        %v4760 = vpack.c.b16 %v4748, %v4747
        %v4761 = vpack.c.b16 %v4750, %v4749
        %v4762 = vpack.c.b16 %v4752, %v4751
        %v4763 = vpack.c.b16 %v4754, %v4753
        %v4764 = vpack.c.b16 %v4756, %v4755
        %4773 = vmatpush.bf16.msra.mxu0 %v4764
        %4774 = vmatpush.bf16.msra.mxu0 %v4763
        %4775 = vmatpush.bf16.msra.mxu0 %v4762
        %4776 = vmatpush.bf16.msra.mxu0 %v4761
        %4777 = vmatpush.bf16.msra.mxu0 %v4760
        %4778 = vmatpush.bf16.msra.mxu0 %v4759
        %4779 = vmatpush.bf16.msra.mxu0 %v4758
        %4780 = vmatpush.bf16.msra.mxu0 %v4757
        %4781 = vmatmul.bf16.gmra.mxu0 %v4709
        %v4782 = vpop.f32.mrf.mxu0
        %v4783 = vadd.f32 0.0, %v4782
        %v4784 = vpop.f32.mrf.mxu0
        %v4785 = vadd.f32 0.0, %v4784
        %4786 = vmatmul.bf16.gmra.mxu0 %v4710
        %v4787 = vpop.f32.mrf.mxu0
        %v4788 = vadd.f32 0.0, %v4787
        %v4789 = vpop.f32.mrf.mxu0
        %v4790 = vadd.f32 0.0, %v4789
        %4791 = vmatmul.bf16.gmra.mxu0 %v4711
        %v4792 = vpop.f32.mrf.mxu0
        %v4793 = vadd.f32 0.0, %v4792
        %v4794 = vpop.f32.mrf.mxu0
        %v4795 = vadd.f32 0.0, %v4794
        %4796 = vmatmul.bf16.gmra.mxu0 %v4712
        %v4797 = vpop.f32.mrf.mxu0
        %v4798 = vadd.f32 0.0, %v4797
        %v4799 = vpop.f32.mrf.mxu0
        %v4800 = vadd.f32 0.0, %v4799
        %4801 = vmatmul.bf16.gmra.mxu0 %v4713
        %v4802 = vpop.f32.mrf.mxu0
        %v4803 = vadd.f32 0.0, %v4802
        %v4804 = vpop.f32.mrf.mxu0
        %v4805 = vadd.f32 0.0, %v4804
        %4806 = vmatmul.bf16.gmra.mxu0 %v4714
        %v4807 = vpop.f32.mrf.mxu0
        %v4808 = vadd.f32 0.0, %v4807
        %v4809 = vpop.f32.mrf.mxu0
        %v4810 = vadd.f32 0.0, %v4809
        %4811 = vmatmul.bf16.gmra.mxu0 %v4715
        %v4812 = vpop.f32.mrf.mxu0
        %v4813 = vadd.f32 0.0, %v4812
        %v4814 = vpop.f32.mrf.mxu0
        %v4815 = vadd.f32 0.0, %v4814
        %4816 = vmatmul.bf16.gmra.mxu0 %v4716
        %v4817 = vpop.f32.mrf.mxu0
        %v4818 = vadd.f32 0.0, %v4817
        %v4819 = vpop.f32.mrf.mxu0
        %v4820 = vadd.f32 0.0, %v4819
        %4821 = vdwg.mxu0
        %v4822 = vadd.f32 %v4628, %v4783
        %v4823 = vadd.f32 %v4629, %v4785
        %v4824 = vadd.f32 %v4630, %v4788
        %v4825 = vadd.f32 %v4631, %v4790
        %v4826 = vadd.f32 %v4632, %v4793
        %v4827 = vadd.f32 %v4633, %v4795
        %v4828 = vadd.f32 %v4634, %v4798
        %v4829 = vadd.f32 %v4635, %v4800
        %v4830 = vadd.f32 %v4636, %v4803
        %v4831 = vadd.f32 %v4637, %v4805
        %v4832 = vadd.f32 %v4638, %v4808
        %v4833 = vadd.f32 %v4639, %v4810
        %v4834 = vadd.f32 %v4640, %v4813
        %v4835 = vadd.f32 %v4641, %v4815
        %v4836 = vadd.f32 %v4642, %v4818
        %v4837 = vadd.f32 %v4643, %v4820
        %v4838 = vld [vmem:[%s353 + $0x8] sm:$0xf]
        %v4839 = vld [vmem:[%s353 + $0xc] sm:$0xf]
        %v4840 = vld [vmem:[%s353 + $0x10] sm:$0xf]
        %v4841 = vld [vmem:[%s353 + $0x14] sm:$0xf]
        %v4842 = vld [vmem:[%s353 + $0x18] sm:$0xf]
        %v4843 = vld [vmem:[%s353 + $0x1c] sm:$0xf]
        %v4844 = vld [vmem:[%s353 + $0x20] sm:$0xf]
        %v4845 = vld [vmem:[%s353 + $0x24] sm:$0xf]
        %v4846 = vld [vmem:[%s353 + $0x28] sm:$0xf]
        %v4847 = vld [vmem:[%s353 + $0x2c] sm:$0xf]
        %v4848 = vld [vmem:[%s353 + $0x30] sm:$0xf]
        %v4849 = vld [vmem:[%s353 + $0x34] sm:$0xf]
        %v4850 = vld [vmem:[%s353 + $0x38] sm:$0xf]
        %v4851 = vld [vmem:[%s353 + $0x3c] sm:$0xf]
        %v4852 = vld [vmem:[%s353 + $0x40] sm:$0xf]
        %v4853 = vld [vmem:[%s353 + $0x44] sm:$0xf]
        %v4854 = vld [vmem:[%s353 + $0x48] sm:$0x1]
        %s4855 = scalar_lea.vmem [#allocation8], 1408
        %v4856 = vld [vmem:[%s4855] sm:$0xf]
        %v4857 = vld [vmem:[%s4855 + $0x4] sm:$0xf]
        %v4858 = vld [vmem:[%s4855 + $0x8] sm:$0xf]
        %v4859 = vld [vmem:[%s4855 + $0xc] sm:$0xf]
        %v4860 = vld [vmem:[%s4855 + $0x10] sm:$0xf]
        %v4861 = vld [vmem:[%s4855 + $0x14] sm:$0xf]
        %v4862 = vld [vmem:[%s4855 + $0x18] sm:$0xf]
        %v4863 = vld [vmem:[%s4855 + $0x1c] sm:$0xf]
        %v4864 = vld [vmem:[%s4855 + $0x20] sm:$0xf]
        %v4865 = vld [vmem:[%s4855 + $0x24] sm:$0xf]
        %v4866 = vld [vmem:[%s4855 + $0x28] sm:$0xf]
        %v4867 = vld [vmem:[%s4855 + $0x2c] sm:$0xf]
        %v4868 = vld [vmem:[%s4855 + $0x30] sm:$0xf]
        %v4869 = vld [vmem:[%s4855 + $0x34] sm:$0xf]
        %v4870 = vld [vmem:[%s4855 + $0x38] sm:$0xf]
        %v4871 = vld [vmem:[%s4855 + $0x3c] sm:$0xf]
        %v4889 = vunpack.c.l.b16 %v4838
        %v4890 = vunpack.c.l.b16 %v4839
        %v4891 = vunpack.c.l.b16 %v4840
        %v4892 = vunpack.c.l.b16 %v4841
        %v4893 = vunpack.c.l.b16 %v4842
        %v4894 = vunpack.c.l.b16 %v4843
        %v4895 = vunpack.c.l.b16 %v4844
        %v4896 = vunpack.c.l.b16 %v4845
        %v4897 = vunpack.c.l.b16 %v4846
        %v4898 = vunpack.c.l.b16 %v4847
        %v4899 = vunpack.c.l.b16 %v4848
        %v4900 = vunpack.c.l.b16 %v4849
        %v4901 = vunpack.c.l.b16 %v4850
        %v4902 = vunpack.c.l.b16 %v4851
        %v4903 = vunpack.c.l.b16 %v4852
        %v4904 = vunpack.c.l.b16 %v4853
        %v4905 = vunpack.c.l.b16 %v4854
        %v4906 = vpack.c.b16 %v4890, %v4889
        %v4907 = vpack.c.b16 %v4892, %v4891
        %v4908 = vpack.c.b16 %v4894, %v4893
        %v4909 = vpack.c.b16 %v4896, %v4895
        %v4910 = vpack.c.b16 %v4898, %v4897
        %v4911 = vpack.c.b16 %v4900, %v4899
        %v4912 = vpack.c.b16 %v4902, %v4901
        %v4913 = vpack.c.b16 %v4904, %v4903
        %v4914 = vpack.c.b16 %v4905, %v4905
        %v4916 = vshrl.u32 %v4906, 16
        %v4918 = vshll.u32 %v4906, 16
        %v4920 = vrot.slane %v4918, 1
        %v4921 = vor.u32 %v4916, %v4920
        %v4923 = vshll.u32 %v4907, 16
        %v4925 = vrot.slane %v4923, 1
        %v4926 = vsel %vm491, %v4921, %v4925
        %v4927 = vshrl.u32 %v4907, 16
        %v4929 = vor.u32 %v4927, %v4925
        %v4931 = vshll.u32 %v4908, 16
        %v4933 = vrot.slane %v4931, 1
        %v4934 = vsel %vm491, %v4929, %v4933
        %v4935 = vshrl.u32 %v4908, 16
        %v4937 = vor.u32 %v4935, %v4933
        %v4939 = vshll.u32 %v4909, 16
        %v4941 = vrot.slane %v4939, 1
        %v4942 = vsel %vm491, %v4937, %v4941
        %v4943 = vshrl.u32 %v4909, 16
        %v4945 = vor.u32 %v4943, %v4941
        %v4947 = vshll.u32 %v4910, 16
        %v4949 = vrot.slane %v4947, 1
        %v4950 = vsel %vm491, %v4945, %v4949
        %v4951 = vshrl.u32 %v4910, 16
        %v4953 = vor.u32 %v4951, %v4949
        %v4955 = vshll.u32 %v4911, 16
        %v4957 = vrot.slane %v4955, 1
        %v4958 = vsel %vm491, %v4953, %v4957
        %v4959 = vshrl.u32 %v4911, 16
        %v4961 = vor.u32 %v4959, %v4957
        %v4963 = vshll.u32 %v4912, 16
        %v4965 = vrot.slane %v4963, 1
        %v4966 = vsel %vm491, %v4961, %v4965
        %v4967 = vshrl.u32 %v4912, 16
        %v4969 = vor.u32 %v4967, %v4965
        %v4971 = vshll.u32 %v4913, 16
        %v4973 = vrot.slane %v4971, 1
        %v4974 = vsel %vm491, %v4969, %v4973
        %v4975 = vshrl.u32 %v4913, 16
        %v4977 = vor.u32 %v4975, %v4973
        %v4979 = vshll.u32 %v4914, 16
        %v4981 = vrot.slane %v4979, 1
        %v4982 = vsel %vm491, %v4977, %v4981
        %v5007 = vunpack.c.l.b16 %v4856
        %v5008 = vunpack.c.l.b16 %v4857
        %v5009 = vunpack.c.l.b16 %v4858
        %v5010 = vunpack.c.l.b16 %v4859
        %v5011 = vunpack.c.l.b16 %v4860
        %v5012 = vunpack.c.l.b16 %v4861
        %v5013 = vunpack.c.l.b16 %v4862
        %v5014 = vunpack.c.l.b16 %v4863
        %v5015 = vunpack.c.l.b16 %v4864
        %v5016 = vunpack.c.l.b16 %v4865
        %v5017 = vunpack.c.l.b16 %v4866
        %v5018 = vunpack.c.l.b16 %v4867
        %v5019 = vunpack.c.l.b16 %v4868
        %v5020 = vunpack.c.l.b16 %v4869
        %v5021 = vunpack.c.l.b16 %v4870
        %v5022 = vunpack.c.l.b16 %v4871
        %v5023 = vpack.c.b16 %v5008, %v5007
        %v5024 = vpack.c.b16 %v5010, %v5009
        %v5025 = vpack.c.b16 %v5012, %v5011
        %v5026 = vpack.c.b16 %v5014, %v5013
        %v5027 = vpack.c.b16 %v5016, %v5015
        %v5028 = vpack.c.b16 %v5018, %v5017
        %v5029 = vpack.c.b16 %v5020, %v5019
        %v5030 = vpack.c.b16 %v5022, %v5021
        %5039 = vmatpush.bf16.msra.mxu0 %v5030
        %5040 = vmatpush.bf16.msra.mxu0 %v5029
        %5041 = vmatpush.bf16.msra.mxu0 %v5028
        %5042 = vmatpush.bf16.msra.mxu0 %v5027
        %5043 = vmatpush.bf16.msra.mxu0 %v5026
        %5044 = vmatpush.bf16.msra.mxu0 %v5025
        %5045 = vmatpush.bf16.msra.mxu0 %v5024
        %5046 = vmatpush.bf16.msra.mxu0 %v5023
        %5047 = vmatmul.bf16.gmra.mxu0 %v4926
        %v5048 = vpop.f32.mrf.mxu0
        %v5049 = vadd.f32 0.0, %v5048
        %v5050 = vpop.f32.mrf.mxu0
        %v5051 = vadd.f32 0.0, %v5050
        %5052 = vmatmul.bf16.gmra.mxu0 %v4934
        %v5053 = vpop.f32.mrf.mxu0
        %v5054 = vadd.f32 0.0, %v5053
        %v5055 = vpop.f32.mrf.mxu0
        %v5056 = vadd.f32 0.0, %v5055
        %5057 = vmatmul.bf16.gmra.mxu0 %v4942
        %v5058 = vpop.f32.mrf.mxu0
        %v5059 = vadd.f32 0.0, %v5058
        %v5060 = vpop.f32.mrf.mxu0
        %v5061 = vadd.f32 0.0, %v5060
        %5062 = vmatmul.bf16.gmra.mxu0 %v4950
        %v5063 = vpop.f32.mrf.mxu0
        %v5064 = vadd.f32 0.0, %v5063
        %v5065 = vpop.f32.mrf.mxu0
        %v5066 = vadd.f32 0.0, %v5065
        %5067 = vmatmul.bf16.gmra.mxu0 %v4958
        %v5068 = vpop.f32.mrf.mxu0
        %v5069 = vadd.f32 0.0, %v5068
        %v5070 = vpop.f32.mrf.mxu0
        %v5071 = vadd.f32 0.0, %v5070
        %5072 = vmatmul.bf16.gmra.mxu0 %v4966
        %v5073 = vpop.f32.mrf.mxu0
        %v5074 = vadd.f32 0.0, %v5073
        %v5075 = vpop.f32.mrf.mxu0
        %v5076 = vadd.f32 0.0, %v5075
        %5077 = vmatmul.bf16.gmra.mxu0 %v4974
        %v5078 = vpop.f32.mrf.mxu0
        %v5079 = vadd.f32 0.0, %v5078
        %v5080 = vpop.f32.mrf.mxu0
        %v5081 = vadd.f32 0.0, %v5080
        %5082 = vmatmul.bf16.gmra.mxu0 %v4982
        %v5083 = vpop.f32.mrf.mxu0
        %v5084 = vadd.f32 0.0, %v5083
        %v5085 = vpop.f32.mrf.mxu0
        %v5086 = vadd.f32 0.0, %v5085
        %5087 = vdwg.mxu0
        %v5088 = vadd.f32 %v4822, %v5049
        %v5089 = vadd.f32 %v4823, %v5051
        %v5090 = vadd.f32 %v4824, %v5054
        %v5091 = vadd.f32 %v4825, %v5056
        %v5092 = vadd.f32 %v4826, %v5059
        %v5093 = vadd.f32 %v4827, %v5061
        %v5094 = vadd.f32 %v4828, %v5064
        %v5095 = vadd.f32 %v4829, %v5066
        %v5096 = vadd.f32 %v4830, %v5069
        %v5097 = vadd.f32 %v4831, %v5071
        %v5098 = vadd.f32 %v4832, %v5074
        %v5099 = vadd.f32 %v4833, %v5076
        %v5100 = vadd.f32 %v4834, %v5079
        %v5101 = vadd.f32 %v4835, %v5081
        %v5102 = vadd.f32 %v4836, %v5084
        %v5103 = vadd.f32 %v4837, %v5086
        %v5104 = vld [vmem:[%s353 + $0x8] sm:$0xe]
        %s5105 = scalar_lea.vmem [#allocation8], 1472
        %v5106 = vld [vmem:[%s5105] sm:$0xf]
        %v5107 = vld [vmem:[%s5105 + $0x4] sm:$0xf]
        %v5108 = vld [vmem:[%s5105 + $0x8] sm:$0xf]
        %v5109 = vld [vmem:[%s5105 + $0xc] sm:$0xf]
        %v5110 = vld [vmem:[%s5105 + $0x10] sm:$0xf]
        %v5111 = vld [vmem:[%s5105 + $0x14] sm:$0xf]
        %v5112 = vld [vmem:[%s5105 + $0x18] sm:$0xf]
        %v5113 = vld [vmem:[%s5105 + $0x1c] sm:$0xf]
        %v5114 = vld [vmem:[%s5105 + $0x20] sm:$0xf]
        %v5115 = vld [vmem:[%s5105 + $0x24] sm:$0xf]
        %v5116 = vld [vmem:[%s5105 + $0x28] sm:$0xf]
        %v5117 = vld [vmem:[%s5105 + $0x2c] sm:$0xf]
        %v5118 = vld [vmem:[%s5105 + $0x30] sm:$0xf]
        %v5119 = vld [vmem:[%s5105 + $0x34] sm:$0xf]
        %v5120 = vld [vmem:[%s5105 + $0x38] sm:$0xf]
        %v5121 = vld [vmem:[%s5105 + $0x3c] sm:$0xf]
        %v5123 = vunpack.c.l.b16 %v5104
        %v5124 = vpack.c.b16 %v4890, %v5123
        %v5125 = vrot.slane %v5124, 1
        %v5126 = vrot.slane %v4907, 1
        %v5127 = vsel %vm791, %v5125, %v5126
        %v5128 = vrot.slane %v4908, 1
        %v5129 = vsel %vm791, %v5126, %v5128
        %v5130 = vrot.slane %v4909, 1
        %v5131 = vsel %vm791, %v5128, %v5130
        %v5132 = vrot.slane %v4910, 1
        %v5133 = vsel %vm791, %v5130, %v5132
        %v5134 = vrot.slane %v4911, 1
        %v5135 = vsel %vm791, %v5132, %v5134
        %v5136 = vrot.slane %v4912, 1
        %v5137 = vsel %vm791, %v5134, %v5136
        %v5138 = vrot.slane %v4913, 1
        %v5139 = vsel %vm791, %v5136, %v5138
        %v5140 = vrot.slane %v4914, 1
        %v5141 = vsel %vm791, %v5138, %v5140
        %v5166 = vunpack.c.l.b16 %v5106
        %v5167 = vunpack.c.l.b16 %v5107
        %v5168 = vunpack.c.l.b16 %v5108
        %v5169 = vunpack.c.l.b16 %v5109
        %v5170 = vunpack.c.l.b16 %v5110
        %v5171 = vunpack.c.l.b16 %v5111
        %v5172 = vunpack.c.l.b16 %v5112
        %v5173 = vunpack.c.l.b16 %v5113
        %v5174 = vunpack.c.l.b16 %v5114
        %v5175 = vunpack.c.l.b16 %v5115
        %v5176 = vunpack.c.l.b16 %v5116
        %v5177 = vunpack.c.l.b16 %v5117
        %v5178 = vunpack.c.l.b16 %v5118
        %v5179 = vunpack.c.l.b16 %v5119
        %v5180 = vunpack.c.l.b16 %v5120
        %v5181 = vunpack.c.l.b16 %v5121
        %v5182 = vpack.c.b16 %v5167, %v5166
        %v5183 = vpack.c.b16 %v5169, %v5168
        %v5184 = vpack.c.b16 %v5171, %v5170
        %v5185 = vpack.c.b16 %v5173, %v5172
        %v5186 = vpack.c.b16 %v5175, %v5174
        %v5187 = vpack.c.b16 %v5177, %v5176
        %v5188 = vpack.c.b16 %v5179, %v5178
        %v5189 = vpack.c.b16 %v5181, %v5180
        %5198 = vmatpush.bf16.msra.mxu0 %v5189
        %5199 = vmatpush.bf16.msra.mxu0 %v5188
        %5200 = vmatpush.bf16.msra.mxu0 %v5187
        %5201 = vmatpush.bf16.msra.mxu0 %v5186
        %5202 = vmatpush.bf16.msra.mxu0 %v5185
        %5203 = vmatpush.bf16.msra.mxu0 %v5184
        %5204 = vmatpush.bf16.msra.mxu0 %v5183
        %5205 = vmatpush.bf16.msra.mxu0 %v5182
        %5206 = vmatmul.bf16.gmra.mxu0 %v5127
        %v5207 = vpop.f32.mrf.mxu0
        %v5208 = vadd.f32 0.0, %v5207
        %v5209 = vpop.f32.mrf.mxu0
        %v5210 = vadd.f32 0.0, %v5209
        %5211 = vmatmul.bf16.gmra.mxu0 %v5129
        %v5212 = vpop.f32.mrf.mxu0
        %v5213 = vadd.f32 0.0, %v5212
        %v5214 = vpop.f32.mrf.mxu0
        %v5215 = vadd.f32 0.0, %v5214
        %5216 = vmatmul.bf16.gmra.mxu0 %v5131
        %v5217 = vpop.f32.mrf.mxu0
        %v5218 = vadd.f32 0.0, %v5217
        %v5219 = vpop.f32.mrf.mxu0
        %v5220 = vadd.f32 0.0, %v5219
        %5221 = vmatmul.bf16.gmra.mxu0 %v5133
        %v5222 = vpop.f32.mrf.mxu0
        %v5223 = vadd.f32 0.0, %v5222
        %v5224 = vpop.f32.mrf.mxu0
        %v5225 = vadd.f32 0.0, %v5224
        %5226 = vmatmul.bf16.gmra.mxu0 %v5135
        %v5227 = vpop.f32.mrf.mxu0
        %v5228 = vadd.f32 0.0, %v5227
        %v5229 = vpop.f32.mrf.mxu0
        %v5230 = vadd.f32 0.0, %v5229
        %5231 = vmatmul.bf16.gmra.mxu0 %v5137
        %v5232 = vpop.f32.mrf.mxu0
        %v5233 = vadd.f32 0.0, %v5232
        %v5234 = vpop.f32.mrf.mxu0
        %v5235 = vadd.f32 0.0, %v5234
        %5236 = vmatmul.bf16.gmra.mxu0 %v5139
        %v5237 = vpop.f32.mrf.mxu0
        %v5238 = vadd.f32 0.0, %v5237
        %v5239 = vpop.f32.mrf.mxu0
        %v5240 = vadd.f32 0.0, %v5239
        %5241 = vmatmul.bf16.gmra.mxu0 %v5141
        %v5242 = vpop.f32.mrf.mxu0
        %v5243 = vadd.f32 0.0, %v5242
        %v5244 = vpop.f32.mrf.mxu0
        %v5245 = vadd.f32 0.0, %v5244
        %5246 = vdwg.mxu0
        %v5247 = vadd.f32 %v5088, %v5208
        %v5248 = vadd.f32 %v5089, %v5210
        %v5249 = vadd.f32 %v5090, %v5213
        %v5250 = vadd.f32 %v5091, %v5215
        %v5251 = vadd.f32 %v5092, %v5218
        %v5252 = vadd.f32 %v5093, %v5220
        %v5253 = vadd.f32 %v5094, %v5223
        %v5254 = vadd.f32 %v5095, %v5225
        %v5255 = vadd.f32 %v5096, %v5228
        %v5256 = vadd.f32 %v5097, %v5230
        %v5257 = vadd.f32 %v5098, %v5233
        %v5258 = vadd.f32 %v5099, %v5235
        %v5259 = vadd.f32 %v5100, %v5238
        %v5260 = vadd.f32 %v5101, %v5240
        %v5261 = vadd.f32 %v5102, %v5243
        %v5262 = vadd.f32 %v5103, %v5245
        %v5263 = vld [vmem:[%s353 + $0x10] sm:$0xf]
        %v5264 = vld [vmem:[%s353 + $0x14] sm:$0xf]
        %v5265 = vld [vmem:[%s353 + $0x18] sm:$0xf]
        %v5266 = vld [vmem:[%s353 + $0x1c] sm:$0xf]
        %v5267 = vld [vmem:[%s353 + $0x20] sm:$0xf]
        %v5268 = vld [vmem:[%s353 + $0x24] sm:$0xf]
        %v5269 = vld [vmem:[%s353 + $0x28] sm:$0xf]
        %v5270 = vld [vmem:[%s353 + $0x2c] sm:$0xf]
        %v5271 = vld [vmem:[%s353 + $0x30] sm:$0xf]
        %v5272 = vld [vmem:[%s353 + $0x34] sm:$0xf]
        %v5273 = vld [vmem:[%s353 + $0x38] sm:$0xf]
        %v5274 = vld [vmem:[%s353 + $0x3c] sm:$0xf]
        %v5275 = vld [vmem:[%s353 + $0x40] sm:$0xf]
        %v5276 = vld [vmem:[%s353 + $0x44] sm:$0xf]
        %v5277 = vld [vmem:[%s353 + $0x48] sm:$0xf]
        %v5278 = vld [vmem:[%s353 + $0x4c] sm:$0xf]
        %s5279 = scalar_lea.vmem [#allocation8], 1536
        %v5280 = vld [vmem:[%s5279] sm:$0xf]
        %v5281 = vld [vmem:[%s5279 + $0x4] sm:$0xf]
        %v5282 = vld [vmem:[%s5279 + $0x8] sm:$0xf]
        %v5283 = vld [vmem:[%s5279 + $0xc] sm:$0xf]
        %v5284 = vld [vmem:[%s5279 + $0x10] sm:$0xf]
        %v5285 = vld [vmem:[%s5279 + $0x14] sm:$0xf]
        %v5286 = vld [vmem:[%s5279 + $0x18] sm:$0xf]
        %v5287 = vld [vmem:[%s5279 + $0x1c] sm:$0xf]
        %v5288 = vld [vmem:[%s5279 + $0x20] sm:$0xf]
        %v5289 = vld [vmem:[%s5279 + $0x24] sm:$0xf]
        %v5290 = vld [vmem:[%s5279 + $0x28] sm:$0xf]
        %v5291 = vld [vmem:[%s5279 + $0x2c] sm:$0xf]
        %v5292 = vld [vmem:[%s5279 + $0x30] sm:$0xf]
        %v5293 = vld [vmem:[%s5279 + $0x34] sm:$0xf]
        %v5294 = vld [vmem:[%s5279 + $0x38] sm:$0xf]
        %v5295 = vld [vmem:[%s5279 + $0x3c] sm:$0xf]
        %v5312 = vunpack.c.l.b16 %v5263
        %v5313 = vunpack.c.l.b16 %v5264
        %v5314 = vunpack.c.l.b16 %v5265
        %v5315 = vunpack.c.l.b16 %v5266
        %v5316 = vunpack.c.l.b16 %v5267
        %v5317 = vunpack.c.l.b16 %v5268
        %v5318 = vunpack.c.l.b16 %v5269
        %v5319 = vunpack.c.l.b16 %v5270
        %v5320 = vunpack.c.l.b16 %v5271
        %v5321 = vunpack.c.l.b16 %v5272
        %v5322 = vunpack.c.l.b16 %v5273
        %v5323 = vunpack.c.l.b16 %v5274
        %v5324 = vunpack.c.l.b16 %v5275
        %v5325 = vunpack.c.l.b16 %v5276
        %v5326 = vunpack.c.l.b16 %v5277
        %v5327 = vunpack.c.l.b16 %v5278
        %v5328 = vpack.c.b16 %v5313, %v5312
        %v5329 = vpack.c.b16 %v5315, %v5314
        %v5330 = vpack.c.b16 %v5317, %v5316
        %v5331 = vpack.c.b16 %v5319, %v5318
        %v5332 = vpack.c.b16 %v5321, %v5320
        %v5333 = vpack.c.b16 %v5323, %v5322
        %v5334 = vpack.c.b16 %v5325, %v5324
        %v5335 = vpack.c.b16 %v5327, %v5326
        %v5360 = vunpack.c.l.b16 %v5280
        %v5361 = vunpack.c.l.b16 %v5281
        %v5362 = vunpack.c.l.b16 %v5282
        %v5363 = vunpack.c.l.b16 %v5283
        %v5364 = vunpack.c.l.b16 %v5284
        %v5365 = vunpack.c.l.b16 %v5285
        %v5366 = vunpack.c.l.b16 %v5286
        %v5367 = vunpack.c.l.b16 %v5287
        %v5368 = vunpack.c.l.b16 %v5288
        %v5369 = vunpack.c.l.b16 %v5289
        %v5370 = vunpack.c.l.b16 %v5290
        %v5371 = vunpack.c.l.b16 %v5291
        %v5372 = vunpack.c.l.b16 %v5292
        %v5373 = vunpack.c.l.b16 %v5293
        %v5374 = vunpack.c.l.b16 %v5294
        %v5375 = vunpack.c.l.b16 %v5295
        %v5376 = vpack.c.b16 %v5361, %v5360
        %v5377 = vpack.c.b16 %v5363, %v5362
        %v5378 = vpack.c.b16 %v5365, %v5364
        %v5379 = vpack.c.b16 %v5367, %v5366
        %v5380 = vpack.c.b16 %v5369, %v5368
        %v5381 = vpack.c.b16 %v5371, %v5370
        %v5382 = vpack.c.b16 %v5373, %v5372
        %v5383 = vpack.c.b16 %v5375, %v5374
        %5392 = vmatpush.bf16.msra.mxu0 %v5383
        %5393 = vmatpush.bf16.msra.mxu0 %v5382
        %5394 = vmatpush.bf16.msra.mxu0 %v5381
        %5395 = vmatpush.bf16.msra.mxu0 %v5380
        %5396 = vmatpush.bf16.msra.mxu0 %v5379
        %5397 = vmatpush.bf16.msra.mxu0 %v5378
        %5398 = vmatpush.bf16.msra.mxu0 %v5377
        %5399 = vmatpush.bf16.msra.mxu0 %v5376
        %5400 = vmatmul.bf16.gmra.mxu0 %v5328
        %v5401 = vpop.f32.mrf.mxu0
        %v5402 = vadd.f32 0.0, %v5401
        %v5403 = vpop.f32.mrf.mxu0
        %v5404 = vadd.f32 0.0, %v5403
        %5405 = vmatmul.bf16.gmra.mxu0 %v5329
        %v5406 = vpop.f32.mrf.mxu0
        %v5407 = vadd.f32 0.0, %v5406
        %v5408 = vpop.f32.mrf.mxu0
        %v5409 = vadd.f32 0.0, %v5408
        %5410 = vmatmul.bf16.gmra.mxu0 %v5330
        %v5411 = vpop.f32.mrf.mxu0
        %v5412 = vadd.f32 0.0, %v5411
        %v5413 = vpop.f32.mrf.mxu0
        %v5414 = vadd.f32 0.0, %v5413
        %5415 = vmatmul.bf16.gmra.mxu0 %v5331
        %v5416 = vpop.f32.mrf.mxu0
        %v5417 = vadd.f32 0.0, %v5416
        %v5418 = vpop.f32.mrf.mxu0
        %v5419 = vadd.f32 0.0, %v5418
        %5420 = vmatmul.bf16.gmra.mxu0 %v5332
        %v5421 = vpop.f32.mrf.mxu0
        %v5422 = vadd.f32 0.0, %v5421
        %v5423 = vpop.f32.mrf.mxu0
        %v5424 = vadd.f32 0.0, %v5423
        %5425 = vmatmul.bf16.gmra.mxu0 %v5333
        %v5426 = vpop.f32.mrf.mxu0
        %v5427 = vadd.f32 0.0, %v5426
        %v5428 = vpop.f32.mrf.mxu0
        %v5429 = vadd.f32 0.0, %v5428
        %5430 = vmatmul.bf16.gmra.mxu0 %v5334
        %v5431 = vpop.f32.mrf.mxu0
        %v5432 = vadd.f32 0.0, %v5431
        %v5433 = vpop.f32.mrf.mxu0
        %v5434 = vadd.f32 0.0, %v5433
        %5435 = vmatmul.bf16.gmra.mxu0 %v5335
        %v5436 = vpop.f32.mrf.mxu0
        %v5437 = vadd.f32 0.0, %v5436
        %v5438 = vpop.f32.mrf.mxu0
        %v5439 = vadd.f32 0.0, %v5438
        %5440 = vdwg.mxu0
        %v5441 = vadd.f32 %v5247, %v5402
        %v5442 = vadd.f32 %v5248, %v5404
        %v5443 = vadd.f32 %v5249, %v5407
        %v5444 = vadd.f32 %v5250, %v5409
        %v5445 = vadd.f32 %v5251, %v5412
        %v5446 = vadd.f32 %v5252, %v5414
        %v5447 = vadd.f32 %v5253, %v5417
        %v5448 = vadd.f32 %v5254, %v5419
        %v5449 = vadd.f32 %v5255, %v5422
        %v5450 = vadd.f32 %v5256, %v5424
        %v5451 = vadd.f32 %v5257, %v5427
        %v5452 = vadd.f32 %v5258, %v5429
        %v5453 = vadd.f32 %v5259, %v5432
        %v5454 = vadd.f32 %v5260, %v5434
        %v5455 = vadd.f32 %v5261, %v5437
        %v5456 = vadd.f32 %v5262, %v5439
        %v5457 = vld [vmem:[%s353 + $0x10] sm:$0xf]
        %v5458 = vld [vmem:[%s353 + $0x14] sm:$0xf]
        %v5459 = vld [vmem:[%s353 + $0x18] sm:$0xf]
        %v5460 = vld [vmem:[%s353 + $0x1c] sm:$0xf]
        %v5461 = vld [vmem:[%s353 + $0x20] sm:$0xf]
        %v5462 = vld [vmem:[%s353 + $0x24] sm:$0xf]
        %v5463 = vld [vmem:[%s353 + $0x28] sm:$0xf]
        %v5464 = vld [vmem:[%s353 + $0x2c] sm:$0xf]
        %v5465 = vld [vmem:[%s353 + $0x30] sm:$0xf]
        %v5466 = vld [vmem:[%s353 + $0x34] sm:$0xf]
        %v5467 = vld [vmem:[%s353 + $0x38] sm:$0xf]
        %v5468 = vld [vmem:[%s353 + $0x3c] sm:$0xf]
        %v5469 = vld [vmem:[%s353 + $0x40] sm:$0xf]
        %v5470 = vld [vmem:[%s353 + $0x44] sm:$0xf]
        %v5471 = vld [vmem:[%s353 + $0x48] sm:$0xf]
        %v5472 = vld [vmem:[%s353 + $0x4c] sm:$0xf]
        %v5473 = vld [vmem:[%s353 + $0x50] sm:$0x1]
        %s5474 = scalar_lea.vmem [#allocation8], 1600
        %v5475 = vld [vmem:[%s5474] sm:$0xf]
        %v5476 = vld [vmem:[%s5474 + $0x4] sm:$0xf]
        %v5477 = vld [vmem:[%s5474 + $0x8] sm:$0xf]
        %v5478 = vld [vmem:[%s5474 + $0xc] sm:$0xf]
        %v5479 = vld [vmem:[%s5474 + $0x10] sm:$0xf]
        %v5480 = vld [vmem:[%s5474 + $0x14] sm:$0xf]
        %v5481 = vld [vmem:[%s5474 + $0x18] sm:$0xf]
        %v5482 = vld [vmem:[%s5474 + $0x1c] sm:$0xf]
        %v5483 = vld [vmem:[%s5474 + $0x20] sm:$0xf]
        %v5484 = vld [vmem:[%s5474 + $0x24] sm:$0xf]
        %v5485 = vld [vmem:[%s5474 + $0x28] sm:$0xf]
        %v5486 = vld [vmem:[%s5474 + $0x2c] sm:$0xf]
        %v5487 = vld [vmem:[%s5474 + $0x30] sm:$0xf]
        %v5488 = vld [vmem:[%s5474 + $0x34] sm:$0xf]
        %v5489 = vld [vmem:[%s5474 + $0x38] sm:$0xf]
        %v5490 = vld [vmem:[%s5474 + $0x3c] sm:$0xf]
        %v5508 = vunpack.c.l.b16 %v5457
        %v5509 = vunpack.c.l.b16 %v5458
        %v5510 = vunpack.c.l.b16 %v5459
        %v5511 = vunpack.c.l.b16 %v5460
        %v5512 = vunpack.c.l.b16 %v5461
        %v5513 = vunpack.c.l.b16 %v5462
        %v5514 = vunpack.c.l.b16 %v5463
        %v5515 = vunpack.c.l.b16 %v5464
        %v5516 = vunpack.c.l.b16 %v5465
        %v5517 = vunpack.c.l.b16 %v5466
        %v5518 = vunpack.c.l.b16 %v5467
        %v5519 = vunpack.c.l.b16 %v5468
        %v5520 = vunpack.c.l.b16 %v5469
        %v5521 = vunpack.c.l.b16 %v5470
        %v5522 = vunpack.c.l.b16 %v5471
        %v5523 = vunpack.c.l.b16 %v5472
        %v5524 = vunpack.c.l.b16 %v5473
        %v5525 = vpack.c.b16 %v5509, %v5508
        %v5526 = vpack.c.b16 %v5511, %v5510
        %v5527 = vpack.c.b16 %v5513, %v5512
        %v5528 = vpack.c.b16 %v5515, %v5514
        %v5529 = vpack.c.b16 %v5517, %v5516
        %v5530 = vpack.c.b16 %v5519, %v5518
        %v5531 = vpack.c.b16 %v5521, %v5520
        %v5532 = vpack.c.b16 %v5523, %v5522
        %v5533 = vpack.c.b16 %v5524, %v5524
        %v5535 = vshrl.u32 %v5525, 16
        %v5537 = vshll.u32 %v5525, 16
        %v5539 = vrot.slane %v5537, 1
        %v5540 = vor.u32 %v5535, %v5539
        %v5542 = vshll.u32 %v5526, 16
        %v5544 = vrot.slane %v5542, 1
        %v5545 = vsel %vm491, %v5540, %v5544
        %v5546 = vshrl.u32 %v5526, 16
        %v5548 = vor.u32 %v5546, %v5544
        %v5550 = vshll.u32 %v5527, 16
        %v5552 = vrot.slane %v5550, 1
        %v5553 = vsel %vm491, %v5548, %v5552
        %v5554 = vshrl.u32 %v5527, 16
        %v5556 = vor.u32 %v5554, %v5552
        %v5558 = vshll.u32 %v5528, 16
        %v5560 = vrot.slane %v5558, 1
        %v5561 = vsel %vm491, %v5556, %v5560
        %v5562 = vshrl.u32 %v5528, 16
        %v5564 = vor.u32 %v5562, %v5560
        %v5566 = vshll.u32 %v5529, 16
        %v5568 = vrot.slane %v5566, 1
        %v5569 = vsel %vm491, %v5564, %v5568
        %v5570 = vshrl.u32 %v5529, 16
        %v5572 = vor.u32 %v5570, %v5568
        %v5574 = vshll.u32 %v5530, 16
        %v5576 = vrot.slane %v5574, 1
        %v5577 = vsel %vm491, %v5572, %v5576
        %v5578 = vshrl.u32 %v5530, 16
        %v5580 = vor.u32 %v5578, %v5576
        %v5582 = vshll.u32 %v5531, 16
        %v5584 = vrot.slane %v5582, 1
        %v5585 = vsel %vm491, %v5580, %v5584
        %v5586 = vshrl.u32 %v5531, 16
        %v5588 = vor.u32 %v5586, %v5584
        %v5590 = vshll.u32 %v5532, 16
        %v5592 = vrot.slane %v5590, 1
        %v5593 = vsel %vm491, %v5588, %v5592
        %v5594 = vshrl.u32 %v5532, 16
        %v5596 = vor.u32 %v5594, %v5592
        %v5598 = vshll.u32 %v5533, 16
        %v5600 = vrot.slane %v5598, 1
        %v5601 = vsel %vm491, %v5596, %v5600
        %v5626 = vunpack.c.l.b16 %v5475
        %v5627 = vunpack.c.l.b16 %v5476
        %v5628 = vunpack.c.l.b16 %v5477
        %v5629 = vunpack.c.l.b16 %v5478
        %v5630 = vunpack.c.l.b16 %v5479
        %v5631 = vunpack.c.l.b16 %v5480
        %v5632 = vunpack.c.l.b16 %v5481
        %v5633 = vunpack.c.l.b16 %v5482
        %v5634 = vunpack.c.l.b16 %v5483
        %v5635 = vunpack.c.l.b16 %v5484
        %v5636 = vunpack.c.l.b16 %v5485
        %v5637 = vunpack.c.l.b16 %v5486
        %v5638 = vunpack.c.l.b16 %v5487
        %v5639 = vunpack.c.l.b16 %v5488
        %v5640 = vunpack.c.l.b16 %v5489
        %v5641 = vunpack.c.l.b16 %v5490
        %v5642 = vpack.c.b16 %v5627, %v5626
        %v5643 = vpack.c.b16 %v5629, %v5628
        %v5644 = vpack.c.b16 %v5631, %v5630
        %v5645 = vpack.c.b16 %v5633, %v5632
        %v5646 = vpack.c.b16 %v5635, %v5634
        %v5647 = vpack.c.b16 %v5637, %v5636
        %v5648 = vpack.c.b16 %v5639, %v5638
        %v5649 = vpack.c.b16 %v5641, %v5640
        %5658 = vmatpush.bf16.msra.mxu0 %v5649
        %5659 = vmatpush.bf16.msra.mxu0 %v5648
        %5660 = vmatpush.bf16.msra.mxu0 %v5647
        %5661 = vmatpush.bf16.msra.mxu0 %v5646
        %5662 = vmatpush.bf16.msra.mxu0 %v5645
        %5663 = vmatpush.bf16.msra.mxu0 %v5644
        %5664 = vmatpush.bf16.msra.mxu0 %v5643
        %5665 = vmatpush.bf16.msra.mxu0 %v5642
        %5666 = vmatmul.bf16.gmra.mxu0 %v5545
        %v5667 = vpop.f32.mrf.mxu0
        %v5668 = vadd.f32 0.0, %v5667
        %v5669 = vpop.f32.mrf.mxu0
        %v5670 = vadd.f32 0.0, %v5669
        %5671 = vmatmul.bf16.gmra.mxu0 %v5553
        %v5672 = vpop.f32.mrf.mxu0
        %v5673 = vadd.f32 0.0, %v5672
        %v5674 = vpop.f32.mrf.mxu0
        %v5675 = vadd.f32 0.0, %v5674
        %5676 = vmatmul.bf16.gmra.mxu0 %v5561
        %v5677 = vpop.f32.mrf.mxu0
        %v5678 = vadd.f32 0.0, %v5677
        %v5679 = vpop.f32.mrf.mxu0
        %v5680 = vadd.f32 0.0, %v5679
        %5681 = vmatmul.bf16.gmra.mxu0 %v5569
        %v5682 = vpop.f32.mrf.mxu0
        %v5683 = vadd.f32 0.0, %v5682
        %v5684 = vpop.f32.mrf.mxu0
        %v5685 = vadd.f32 0.0, %v5684
        %5686 = vmatmul.bf16.gmra.mxu0 %v5577
        %v5687 = vpop.f32.mrf.mxu0
        %v5688 = vadd.f32 0.0, %v5687
        %v5689 = vpop.f32.mrf.mxu0
        %v5690 = vadd.f32 0.0, %v5689
        %5691 = vmatmul.bf16.gmra.mxu0 %v5585
        %v5692 = vpop.f32.mrf.mxu0
        %v5693 = vadd.f32 0.0, %v5692
        %v5694 = vpop.f32.mrf.mxu0
        %v5695 = vadd.f32 0.0, %v5694
        %5696 = vmatmul.bf16.gmra.mxu0 %v5593
        %v5697 = vpop.f32.mrf.mxu0
        %v5698 = vadd.f32 0.0, %v5697
        %v5699 = vpop.f32.mrf.mxu0
        %v5700 = vadd.f32 0.0, %v5699
        %5701 = vmatmul.bf16.gmra.mxu0 %v5601
        %v5702 = vpop.f32.mrf.mxu0
        %v5703 = vadd.f32 0.0, %v5702
        %v5704 = vpop.f32.mrf.mxu0
        %v5705 = vadd.f32 0.0, %v5704
        %5706 = vdwg.mxu0
        %v5707 = vadd.f32 %v5441, %v5668
        %v5708 = vadd.f32 %v5442, %v5670
        %v5709 = vadd.f32 %v5443, %v5673
        %v5710 = vadd.f32 %v5444, %v5675
        %v5711 = vadd.f32 %v5445, %v5678
        %v5712 = vadd.f32 %v5446, %v5680
        %v5713 = vadd.f32 %v5447, %v5683
        %v5714 = vadd.f32 %v5448, %v5685
        %v5715 = vadd.f32 %v5449, %v5688
        %v5716 = vadd.f32 %v5450, %v5690
        %v5717 = vadd.f32 %v5451, %v5693
        %v5718 = vadd.f32 %v5452, %v5695
        %v5719 = vadd.f32 %v5453, %v5698
        %v5720 = vadd.f32 %v5454, %v5700
        %v5721 = vadd.f32 %v5455, %v5703
        %v5722 = vadd.f32 %v5456, %v5705
        %v5723 = vld [vmem:[%s353 + $0x10] sm:$0xe]
        %s5724 = scalar_lea.vmem [#allocation8], 1664
        %v5725 = vld [vmem:[%s5724] sm:$0xf]
        %v5726 = vld [vmem:[%s5724 + $0x4] sm:$0xf]
        %v5727 = vld [vmem:[%s5724 + $0x8] sm:$0xf]
        %v5728 = vld [vmem:[%s5724 + $0xc] sm:$0xf]
        %v5729 = vld [vmem:[%s5724 + $0x10] sm:$0xf]
        %v5730 = vld [vmem:[%s5724 + $0x14] sm:$0xf]
        %v5731 = vld [vmem:[%s5724 + $0x18] sm:$0xf]
        %v5732 = vld [vmem:[%s5724 + $0x1c] sm:$0xf]
        %v5733 = vld [vmem:[%s5724 + $0x20] sm:$0xf]
        %v5734 = vld [vmem:[%s5724 + $0x24] sm:$0xf]
        %v5735 = vld [vmem:[%s5724 + $0x28] sm:$0xf]
        %v5736 = vld [vmem:[%s5724 + $0x2c] sm:$0xf]
        %v5737 = vld [vmem:[%s5724 + $0x30] sm:$0xf]
        %v5738 = vld [vmem:[%s5724 + $0x34] sm:$0xf]
        %v5739 = vld [vmem:[%s5724 + $0x38] sm:$0xf]
        %v5740 = vld [vmem:[%s5724 + $0x3c] sm:$0xf]
        %v5742 = vunpack.c.l.b16 %v5723
        %v5743 = vpack.c.b16 %v5509, %v5742
        %v5744 = vrot.slane %v5743, 1
        %v5745 = vrot.slane %v5526, 1
        %v5746 = vsel %vm791, %v5744, %v5745
        %v5747 = vrot.slane %v5527, 1
        %v5748 = vsel %vm791, %v5745, %v5747
        %v5749 = vrot.slane %v5528, 1
        %v5750 = vsel %vm791, %v5747, %v5749
        %v5751 = vrot.slane %v5529, 1
        %v5752 = vsel %vm791, %v5749, %v5751
        %v5753 = vrot.slane %v5530, 1
        %v5754 = vsel %vm791, %v5751, %v5753
        %v5755 = vrot.slane %v5531, 1
        %v5756 = vsel %vm791, %v5753, %v5755
        %v5757 = vrot.slane %v5532, 1
        %v5758 = vsel %vm791, %v5755, %v5757
        %v5759 = vrot.slane %v5533, 1
        %v5760 = vsel %vm791, %v5757, %v5759
        %v5785 = vunpack.c.l.b16 %v5725
        %v5786 = vunpack.c.l.b16 %v5726
        %v5787 = vunpack.c.l.b16 %v5727
        %v5788 = vunpack.c.l.b16 %v5728
        %v5789 = vunpack.c.l.b16 %v5729
        %v5790 = vunpack.c.l.b16 %v5730
        %v5791 = vunpack.c.l.b16 %v5731
        %v5792 = vunpack.c.l.b16 %v5732
        %v5793 = vunpack.c.l.b16 %v5733
        %v5794 = vunpack.c.l.b16 %v5734
        %v5795 = vunpack.c.l.b16 %v5735
        %v5796 = vunpack.c.l.b16 %v5736
        %v5797 = vunpack.c.l.b16 %v5737
        %v5798 = vunpack.c.l.b16 %v5738
        %v5799 = vunpack.c.l.b16 %v5739
        %v5800 = vunpack.c.l.b16 %v5740
        %v5801 = vpack.c.b16 %v5786, %v5785
        %v5802 = vpack.c.b16 %v5788, %v5787
        %v5803 = vpack.c.b16 %v5790, %v5789
        %v5804 = vpack.c.b16 %v5792, %v5791
        %v5805 = vpack.c.b16 %v5794, %v5793
        %v5806 = vpack.c.b16 %v5796, %v5795
        %v5807 = vpack.c.b16 %v5798, %v5797
        %v5808 = vpack.c.b16 %v5800, %v5799
        %5817 = vmatpush.bf16.msra.mxu0 %v5808
        %5818 = vmatpush.bf16.msra.mxu0 %v5807
        %5819 = vmatpush.bf16.msra.mxu0 %v5806
        %5820 = vmatpush.bf16.msra.mxu0 %v5805
        %5821 = vmatpush.bf16.msra.mxu0 %v5804
        %5822 = vmatpush.bf16.msra.mxu0 %v5803
        %5823 = vmatpush.bf16.msra.mxu0 %v5802
        %5824 = vmatpush.bf16.msra.mxu0 %v5801
        %5825 = vmatmul.bf16.gmra.mxu0 %v5746
        %v5826 = vpop.f32.mrf.mxu0
        %v5827 = vadd.f32 0.0, %v5826
        %v5828 = vpop.f32.mrf.mxu0
        %v5829 = vadd.f32 0.0, %v5828
        %5830 = vmatmul.bf16.gmra.mxu0 %v5748
        %v5831 = vpop.f32.mrf.mxu0
        %v5832 = vadd.f32 0.0, %v5831
        %v5833 = vpop.f32.mrf.mxu0
        %v5834 = vadd.f32 0.0, %v5833
        %5835 = vmatmul.bf16.gmra.mxu0 %v5750
        %v5836 = vpop.f32.mrf.mxu0
        %v5837 = vadd.f32 0.0, %v5836
        %v5838 = vpop.f32.mrf.mxu0
        %v5839 = vadd.f32 0.0, %v5838
        %5840 = vmatmul.bf16.gmra.mxu0 %v5752
        %v5841 = vpop.f32.mrf.mxu0
        %v5842 = vadd.f32 0.0, %v5841
        %v5843 = vpop.f32.mrf.mxu0
        %v5844 = vadd.f32 0.0, %v5843
        %5845 = vmatmul.bf16.gmra.mxu0 %v5754
        %v5846 = vpop.f32.mrf.mxu0
        %v5847 = vadd.f32 0.0, %v5846
        %v5848 = vpop.f32.mrf.mxu0
        %v5849 = vadd.f32 0.0, %v5848
        %5850 = vmatmul.bf16.gmra.mxu0 %v5756
        %v5851 = vpop.f32.mrf.mxu0
        %v5852 = vadd.f32 0.0, %v5851
        %v5853 = vpop.f32.mrf.mxu0
        %v5854 = vadd.f32 0.0, %v5853
        %5855 = vmatmul.bf16.gmra.mxu0 %v5758
        %v5856 = vpop.f32.mrf.mxu0
        %v5857 = vadd.f32 0.0, %v5856
        %v5858 = vpop.f32.mrf.mxu0
        %v5859 = vadd.f32 0.0, %v5858
        %5860 = vmatmul.bf16.gmra.mxu0 %v5760
        %v5861 = vpop.f32.mrf.mxu0
        %v5862 = vadd.f32 0.0, %v5861
        %v5863 = vpop.f32.mrf.mxu0
        %v5864 = vadd.f32 0.0, %v5863
        %5865 = vdwg.mxu0
        %v5866 = vadd.f32 %v5707, %v5827
        %v5867 = vadd.f32 %v5708, %v5829
        %v5868 = vadd.f32 %v5709, %v5832
        %v5869 = vadd.f32 %v5710, %v5834
        %v5870 = vadd.f32 %v5711, %v5837
        %v5871 = vadd.f32 %v5712, %v5839
        %v5872 = vadd.f32 %v5713, %v5842
        %v5873 = vadd.f32 %v5714, %v5844
        %v5874 = vadd.f32 %v5715, %v5847
        %v5875 = vadd.f32 %v5716, %v5849
        %v5876 = vadd.f32 %v5717, %v5852
        %v5877 = vadd.f32 %v5718, %v5854
        %v5878 = vadd.f32 %v5719, %v5857
        %v5879 = vadd.f32 %v5720, %v5859
        %v5880 = vadd.f32 %v5721, %v5862
        %v5881 = vadd.f32 %v5722, %v5864
        %v5882 = vld [vmem:[%s4] sm:$0x1]
        %v5884 = vperm.slane %v5882, 0
        %v5886 = vadd.f32 %v5866, %v5884
        %v5887 = vadd.f32 %v5867, %v5884
        %v5888 = vadd.f32 %v5868, %v5884
        %v5889 = vadd.f32 %v5869, %v5884
        %v5890 = vadd.f32 %v5870, %v5884
        %v5891 = vadd.f32 %v5871, %v5884
        %v5892 = vadd.f32 %v5872, %v5884
        %v5893 = vadd.f32 %v5873, %v5884
        %v5894 = vadd.f32 %v5874, %v5884
        %v5895 = vadd.f32 %v5875, %v5884
        %v5896 = vadd.f32 %v5876, %v5884
        %v5897 = vadd.f32 %v5877, %v5884
        %v5898 = vadd.f32 %v5878, %v5884
        %v5899 = vadd.f32 %v5879, %v5884
        %v5900 = vadd.f32 %v5880, %v5884
        %v5901 = vadd.f32 %v5881, %v5884
        %v5902 = vmax.f32 %v5886, 0.0
        %v5903 = vmax.f32 %v5887, 0.0
        %v5904 = vmax.f32 %v5888, 0.0
        %v5905 = vmax.f32 %v5889, 0.0
        %v5906 = vmax.f32 %v5890, 0.0
        %v5907 = vmax.f32 %v5891, 0.0
        %v5908 = vmax.f32 %v5892, 0.0
        %v5909 = vmax.f32 %v5893, 0.0
        %v5910 = vmax.f32 %v5894, 0.0
        %v5911 = vmax.f32 %v5895, 0.0
        %v5912 = vmax.f32 %v5896, 0.0
        %v5913 = vmax.f32 %v5897, 0.0
        %v5914 = vmax.f32 %v5898, 0.0
        %v5915 = vmax.f32 %v5899, 0.0
        %v5916 = vmax.f32 %v5900, 0.0
        %v5917 = vmax.f32 %v5901, 0.0
        %v5918 = vpack.c.bf16 %v5902, %v5902
        %v5919 = vpack.c.bf16 %v5903, %v5903
        %v5920 = vpack.c.bf16 %v5904, %v5904
        %v5921 = vpack.c.bf16 %v5905, %v5905
        %v5922 = vpack.c.bf16 %v5906, %v5906
        %v5923 = vpack.c.bf16 %v5907, %v5907
        %v5924 = vpack.c.bf16 %v5908, %v5908
        %v5925 = vpack.c.bf16 %v5909, %v5909
        %v5926 = vpack.c.bf16 %v5910, %v5910
        %v5927 = vpack.c.bf16 %v5911, %v5911
        %v5928 = vpack.c.bf16 %v5912, %v5912
        %v5929 = vpack.c.bf16 %v5913, %v5913
        %v5930 = vpack.c.bf16 %v5914, %v5914
        %v5931 = vpack.c.bf16 %v5915, %v5915
        %v5932 = vpack.c.bf16 %v5916, %v5916
        %v5933 = vpack.c.bf16 %v5917, %v5917
        %5934 = vst [vmem:[%s395] sm:$0xf] %v5918
        %5935 = vst [vmem:[%s395 + $0x4] sm:$0xf] %v5919
        %5936 = vst [vmem:[%s395 + $0x8] sm:$0xf] %v5920
        %5937 = vst [vmem:[%s395 + $0xc] sm:$0xf] %v5921
        %5938 = vst [vmem:[%s395 + $0x10] sm:$0xf] %v5922
        %5939 = vst [vmem:[%s395 + $0x14] sm:$0xf] %v5923
        %5940 = vst [vmem:[%s395 + $0x18] sm:$0xf] %v5924
        %5941 = vst [vmem:[%s395 + $0x1c] sm:$0xf] %v5925
        %5942 = vst [vmem:[%s395 + $0x20] sm:$0xf] %v5926
        %5943 = vst [vmem:[%s395 + $0x24] sm:$0xf] %v5927
        %5944 = vst [vmem:[%s395 + $0x28] sm:$0xf] %v5928
        %5945 = vst [vmem:[%s395 + $0x2c] sm:$0xf] %v5929
        %5946 = vst [vmem:[%s395 + $0x30] sm:$0xf] %v5930
        %5947 = vst [vmem:[%s395 + $0x34] sm:$0xf] %v5931
        %5948 = vst [vmem:[%s395 + $0x38] sm:$0xf] %v5932
        %5949 = vst [vmem:[%s395 + $0x3c] sm:$0xf] %v5933
        %s5950 = sand.u32 %s193, 1
        %s5951 = scalar_lea.sflag [#allocation4], %s5950
        %s5952 = sand.u32 %s193, 1
        %s5953 = smul.addr %s5952, 64
        %s5954 = scalar_lea.vmem [#allocation10], %s5953
        // Predicated region
        $region57: #{tpu_custom_call.1} parent=39 // pred_check
          %p5955 = pneg %p203
        $region58: #{tpu_custom_call.1} parent=39 // pred_check_branch
          %5957 = sbr.rel (%p5955) target = $region60
        $region59: #{tpu_custom_call.1} parent=39 // pred_region
          %5959 = vsyncadd %s5951, 0
          %s5960 = smul.addr %s33, 16
          %s5961 = smul.addr %s32, 16
          %s5962 = sadd.s32 %s5960, %s5961
          %s5963 = smul.addr %s31, 128
          %s5964 = sadd.s32 %s5962, %s5963
          %s5965 = smul.addr %s5964, 4
          %s5966 = scalar_lea.hbm %s5, %s5965
          %s5967 = sshll.u32 %s5954, 4
          %s5968 = int_to_ptr.vmem [resolvable:$true] %s5967
          %s5969 = sshll.u32 %s5966, 4
          %s5970 = int_to_ptr.hbm [resolvable:$true] %s5969
          %5975 = dma.vmem_to_hbm [thread:$0]  %s5968, 1024, %s5970, %s5951, 64, 64, 4
        $region60: #{tpu_custom_call.1} parent=39 // pred_fallthru
          _
      $region40: #{tpu_custom_call.1} parent=5 // pred_fallthru
        _
      %p5976 = scmp.le.s32.totalorder 2, %s21
      // Predicated region
      $region61: #{tpu_custom_call.1} parent=5 // pred_check
        %p5977 = pneg %p5976
      $region62: #{tpu_custom_call.1} parent=5 // pred_check_branch
        %5979 = sbr.rel (%p5977) target = $region64
      $region63: #{tpu_custom_call.1} parent=5 // pred_region
        %s5980 = ssub.s32 %s21, 2
        // Predicated region
        $region65: #{tpu_custom_call.1} parent=63 // pred_check
          %p5981 = pneg %p209
        $region66: #{tpu_custom_call.1} parent=63 // pred_check_branch
          %5983 = sbr.rel (%p5981) target = $region68
        $region67: #{tpu_custom_call.1} parent=63 // pred_region
          %s5984 = sand.u32 %s194, 1
          %s5985 = scalar_lea.sflag [#allocation4], %s5984
          %s5986 = sand.u32 %s194, 1
          %s5987 = smul.addr %s5986, 64
          %s5988 = scalar_lea.vmem [#allocation10], %s5987
          %5990 = dma.done %s5985, 1024
        $region68: #{tpu_custom_call.1} parent=63 // pred_fallthru
          _
      $region64: #{tpu_custom_call.1} parent=5 // pred_fallthru
        _
    $region6: #{tpu_custom_call.1} parent=1 // loop_footer
      %s25 = sadd.s32 1, %s21
    $region7: #{tpu_custom_call.1} parent=1 // loop_footer_branch
      %20 = sbr.rel target = $region3
    $region8: #{tpu_custom_call.1} parent=1 // loop_exit
      _
    %5991 = vsyncpa [#allocation3], 1
    %s5992 = scalar_lea.sflag [#allocation3], 1
    %5993 = vsyncpa %s5992, 1
    %5994 = vsyncpa [#allocation6], 1
    %s5995 = scalar_lea.sflag [#allocation6], 1
    %5996 = vsyncpa %s5995, 1
    %5997 = vsyncpa [#allocation9], 1
    %5998 = vsyncpa [#allocation4], 1
    %s5999 = scalar_lea.sflag [#allocation4], 1
    %6000 = vsyncpa %s5999, 1

</llo_original>
